<compile_context>
chip_gen: v7x
topology: tpu7x:2x2x1
jax: 0.10.0
libtpu: 0.0.40
codegen_flags: <defaults>
</compile_context>

<pallas_src>
import functools

import jax
import jax.numpy as jnp
from jax.experimental import pallas as pl
from jax.experimental.pallas import tpu as pltpu


# ---------------------------------------------------------------------------
# helpers traced inside the kernel body
# ---------------------------------------------------------------------------

def _layer_norm(x, gamma, beta, eps=1e-5):
    mu = jnp.mean(x, axis=-1, keepdims=True)
    var = jnp.mean((x - mu) ** 2, axis=-1, keepdims=True)
    return (x - mu) * jax.lax.rsqrt(var + eps) * gamma + beta


def _mha(x_q, x_kv, mask_bias, wq, bq, wk, bk, wv, bv, wo, bo,
         n_heads, inv_scale):
    """Batched 'general' multi-head attention for one batch element.

    x_q: (Tq, H) f32, x_kv: (Tk, H) f32, mask_bias broadcastable to
    (n_heads, Tq, Tk).  Weight matrices are bf16 [in, out], biases f32 (1, out).
    Returns (out (Tq, H) f32, attn (n_heads, Tq, Tk) f32).
    """
    Tq, H = x_q.shape
    Tk = x_kv.shape[0]
    d = H // n_heads

    xq_b = x_q.astype(jnp.bfloat16)
    xkv_b = x_kv.astype(jnp.bfloat16)

    q = jnp.dot(xq_b, wq, preferred_element_type=jnp.float32) + bq
    k = jnp.dot(xkv_b, wk, preferred_element_type=jnp.float32) + bk
    v = jnp.dot(xkv_b, wv, preferred_element_type=jnp.float32) + bv

    # fold the 1/sqrt(d) scale into Q once (cheaper than scaling each energy)
    q = q * inv_scale

    # heads on the leading axis -> batched MXU matmuls, no lane-dim slicing
    qh = q.reshape(Tq, n_heads, d).transpose(1, 0, 2)   # (h, Tq, d)
    kh = k.reshape(Tk, n_heads, d).transpose(1, 0, 2)   # (h, Tk, d)
    vh = v.reshape(Tk, n_heads, d).transpose(1, 0, 2)   # (h, Tk, d)

    energy = jnp.einsum("hqd,hkd->hqk",
                        qh.astype(jnp.bfloat16), kh.astype(jnp.bfloat16),
                        preferred_element_type=jnp.float32)
    energy = energy + mask_bias                          # hoisted mask bias

    m = jnp.max(energy, axis=-1, keepdims=True)
    p = jnp.exp(energy - m)
    denom = jnp.sum(p, axis=-1, keepdims=True)
    attn = p * pl.reciprocal(denom, approx=True)         # EUP, not VALU divide

    ctx = jnp.einsum("hqk,hkd->hqd",
                     attn.astype(jnp.bfloat16), vh.astype(jnp.bfloat16),
                     preferred_element_type=jnp.float32)  # (h, Tq, d)
    ctx = ctx.transpose(1, 0, 2).reshape(Tq, H)
    out = jnp.dot(ctx.astype(jnp.bfloat16), wo,
                  preferred_element_type=jnp.float32) + bo
    return out, attn


# ---------------------------------------------------------------------------
# kernel
# ---------------------------------------------------------------------------

def decoder_layer_kernel(
        # activations / masks
        trg_ref, enc_ref, trg_mask_ref, src_mask_ref,
        # self-attention
        sa_wq_ref, sa_bq_ref, sa_wk_ref, sa_bk_ref,
        sa_wv_ref, sa_bv_ref, sa_wo_ref, sa_bo_ref,
        ln1_g_ref, ln1_b_ref,
        # encoder (cross) attention
        ca_wq_ref, ca_bq_ref, ca_wk_ref, ca_bk_ref,
        ca_wv_ref, ca_bv_ref, ca_wo_ref, ca_bo_ref,
        ln2_g_ref, ln2_b_ref,
        # positionwise feedforward
        w1_ref, b1_ref, w2_ref, b2_ref,
        ln3_g_ref, ln3_b_ref,
        # outputs
        out_ref, attn_ref,
        *, n_heads):
    x = trg_ref[...][0]                      # (T, H) f32
    e = enc_ref[...][0]                      # (S, H) f32
    T, H = x.shape
    d = H // n_heads
    inv_scale = jnp.float32(1.0) / jnp.sqrt(jnp.float32(d))

    # masks -> additive biases, computed once (hoisted out of all head work)
    neg = jnp.float32(-1e10)
    zero = jnp.float32(0.0)
    trg_mask = trg_mask_ref[...][0, 0]       # (T, T) int32
    src_mask = src_mask_ref[...][0, 0]       # (1, S) int32
    self_bias = jnp.where(trg_mask == 0, neg, zero)[None, :, :]    # (1, T, T)
    cross_bias = jnp.where(src_mask == 0, neg, zero)[None, :, :]   # (1, 1, S)

    # --- masked self-attention + residual + LayerNorm 1 ---
    sa, _ = _mha(x, x, self_bias,
                 sa_wq_ref[...], sa_bq_ref[...], sa_wk_ref[...], sa_bk_ref[...],
                 sa_wv_ref[...], sa_bv_ref[...], sa_wo_ref[...], sa_bo_ref[...],
                 n_heads, inv_scale)
    y = _layer_norm(x + sa, ln1_g_ref[...], ln1_b_ref[...])

    # --- encoder (cross) attention + residual + LayerNorm 2 ---
    ca, attn = _mha(y, e, cross_bias,
                    ca_wq_ref[...], ca_bq_ref[...], ca_wk_ref[...], ca_bk_ref[...],
                    ca_wv_ref[...], ca_bv_ref[...], ca_wo_ref[...], ca_bo_ref[...],
                    n_heads, inv_scale)
    z = _layer_norm(y + ca, ln2_g_ref[...], ln2_b_ref[...])

    # --- positionwise FFN + residual + LayerNorm 3 ---
    ff = jnp.dot(z.astype(jnp.bfloat16), w1_ref[...],
                 preferred_element_type=jnp.float32) + b1_ref[...]
    ff = jnp.maximum(ff, 0.0)
    ff = jnp.dot(ff.astype(jnp.bfloat16), w2_ref[...],
                 preferred_element_type=jnp.float32) + b2_ref[...]
    o = _layer_norm(z + ff, ln3_g_ref[...], ln3_b_ref[...])

    out_ref[0] = o
    attn_ref[0] = attn


# ---------------------------------------------------------------------------
# wrapper
# ---------------------------------------------------------------------------

def decoder_layer(trg, enc_src, trg_mask, src_mask, params, n_heads):
    B, T, H = trg.shape
    S = enc_src.shape[1]
    pf = params["w1"].shape[1]
    bf16 = jnp.bfloat16

    def rep(shape):
        nd = len(shape)
        return pl.BlockSpec(shape, lambda b, _nd=nd: (0,) * _nd)

    in_specs = [
        pl.BlockSpec((1, T, H), lambda b: (b, 0, 0)),        # trg
        pl.BlockSpec((1, S, H), lambda b: (b, 0, 0)),        # enc_src
        pl.BlockSpec((1, 1, T, T), lambda b: (b, 0, 0, 0)),  # trg_mask
        pl.BlockSpec((1, 1, 1, S), lambda b: (b, 0, 0, 0)),  # src_mask
    ]
    # self-attention: wq,bq,wk,bk,wv,bv,wo,bo
    in_specs += [rep((H, H)), rep((1, H))] * 4
    in_specs += [rep((1, H)), rep((1, H))]                   # ln1 gamma, beta
    # cross-attention: wq,bq,wk,bk,wv,bv,wo,bo
    in_specs += [rep((H, H)), rep((1, H))] * 4
    in_specs += [rep((1, H)), rep((1, H))]                   # ln2 gamma, beta
    # FFN
    in_specs += [rep((H, pf)), rep((1, pf)), rep((pf, H)), rep((1, H))]
    in_specs += [rep((1, H)), rep((1, H))]                   # ln3 gamma, beta

    out_specs = [
        pl.BlockSpec((1, T, H), lambda b: (b, 0, 0)),
        pl.BlockSpec((1, n_heads, T, S), lambda b: (b, 0, 0, 0)),
    ]
    out_shape = [
        jax.ShapeDtypeStruct((B, T, H), jnp.float32),
        jax.ShapeDtypeStruct((B, n_heads, T, S), jnp.float32),
    ]

    kernel = functools.partial(decoder_layer_kernel, n_heads=n_heads)
    return pl.pallas_call(
        kernel,
        out_shape=out_shape,
        grid=(B,),
        in_specs=in_specs,
        out_specs=out_specs,
        compiler_params=pltpu.CompilerParams(
            dimension_semantics=("parallel",),      # batches independent -> megacore
            vmem_limit_bytes=48 * 1024 * 1024,      # headroom under v7x's 64 MiB
        ),
    )(
        trg, enc_src, trg_mask, src_mask,
        # weight matrices stored/shipped as bf16 (halves DMA & VMEM), biases f32
        params["sa_wq"].astype(bf16), params["sa_bq"],
        params["sa_wk"].astype(bf16), params["sa_bk"],
        params["sa_wv"].astype(bf16), params["sa_bv"],
        params["sa_wo"].astype(bf16), params["sa_bo"],
        params["ln1_g"], params["ln1_b"],
        params["ca_wq"].astype(bf16), params["ca_bq"],
        params["ca_wk"].astype(bf16), params["ca_bk"],
        params["ca_wv"].astype(bf16), params["ca_bv"],
        params["ca_wo"].astype(bf16), params["ca_bo"],
        params["ln2_g"], params["ln2_b"],
        params["w1"].astype(bf16), params["b1"],
        params["w2"].astype(bf16), params["b2"],
        params["ln3_g"], params["ln3_b"],
    )


# ---------------------------------------------------------------------------
# pure-JAX (f32) reference for correctness checking
# ---------------------------------------------------------------------------

def decoder_layer_ref(trg, enc_src, trg_mask, src_mask, params, n_heads):
    def lin(x, w, b):
        return x @ w + b

    def ln(x, g, b, eps=1e-5):
        mu = x.mean(-1, keepdims=True)
        var = ((x - mu) ** 2).mean(-1, keepdims=True)
        return (x - mu) * jax.lax.rsqrt(var + eps) * g + b

    def mha(q_in, kv_in, mask, wq, bq, wk, bk, wv, bv, wo, bo):
        B, Tq, H = q_in.shape
        Tk = kv_in.shape[1]
        d = H // n_heads
        q = lin(q_in, wq, bq).reshape(B, Tq, n_heads, d).transpose(0, 2, 1, 3)
        k = lin(kv_in, wk, bk).reshape(B, Tk, n_heads, d).transpose(0, 2, 1, 3)
        v = lin(kv_in, wv, bv).reshape(B, Tk, n_heads, d).transpose(0, 2, 1, 3)
        energy = jnp.einsum("bhqd,bhkd->bhqk", q, k) / jnp.sqrt(jnp.float32(d))
        energy = jnp.where(mask == 0, -1e10, energy)
        attn = jax.nn.softmax(energy, axis=-1)
        x = jnp.einsum("bhqk,bhkd->bhqd", attn, v)
        x = x.transpose(0, 2, 1, 3).reshape(B, Tq, H)
        return lin(x, wo, bo), attn

    p = params
    sa, _ = mha(trg, trg, trg_mask,
                p["sa_wq"], p["sa_bq"], p["sa_wk"], p["sa_bk"],
                p["sa_wv"], p["sa_bv"], p["sa_wo"], p["sa_bo"])
    y = ln(trg + sa, p["ln1_g"], p["ln1_b"])
    ca, attn = mha(y, enc_src, src_mask,
                   p["ca_wq"], p["ca_bq"], p["ca_wk"], p["ca_bk"],
                   p["ca_wv"], p["ca_bv"], p["ca_wo"], p["ca_bo"])
    z = ln(y + ca, p["ln2_g"], p["ln2_b"])
    ff = jnp.maximum(lin(z, p["w1"], p["b1"]), 0.0)
    ff = lin(ff, p["w2"], p["b2"])
    return ln(z + ff, p["ln3_g"], p["ln3_b"]), attn


# ---------------------------------------------------------------------------
# parameter init (matches nn.Linear / nn.LayerNorm defaults)
# ---------------------------------------------------------------------------

def init_params(key, hid_dim, pf_dim):
    ks = jax.random.split(key, 20)

    def linear(kw, kb, fan_in, fan_out):
        bound = 1.0 / jnp.sqrt(jnp.float32(fan_in))
        w = jax.random.uniform(kw, (fan_in, fan_out), jnp.float32, -bound, bound)
        b = jax.random.uniform(kb, (1, fan_out), jnp.float32, -bound, bound)
        return w, b

    p = {}
    names = ["sa_wq", "sa_wk", "sa_wv", "sa_wo", "ca_wq", "ca_wk", "ca_wv", "ca_wo"]
    for i, n in enumerate(names):
        w, b = linear(ks[2 * i], ks[2 * i + 1], hid_dim, hid_dim)
        p[n] = w
        p[n.replace("w", "b")] = b
    p["w1"], p["b1"] = linear(ks[16], ks[17], hid_dim, pf_dim)
    p["w2"], p["b2"] = linear(ks[18], ks[19], pf_dim, hid_dim)
    for i in (1, 2, 3):
        p[f"ln{i}_g"] = jnp.ones((1, hid_dim), jnp.float32)
        p[f"ln{i}_b"] = jnp.zeros((1, hid_dim), jnp.float32)
    return p


if __name__ == "__main__":
    B, T, S, H, n_heads, pf_dim = 2, 8, 16, 32, 4, 64

    key = jax.random.PRNGKey(0)
    k_trg, k_enc, k_params = jax.random.split(key, 3)
    trg = jax.random.normal(k_trg, (B, T, H), jnp.float32)
    enc_src = jax.random.normal(k_enc, (B, S, H), jnp.float32)

    # causal target mask [B, 1, T, T]
    trg_mask = jnp.tril(jnp.ones((T, T), jnp.int32))[None, None].repeat(B, axis=0)
    # source key-padding mask [B, 1, 1, S]; last 3 positions of batch 1 padded
    src_mask = jnp.ones((B, 1, 1, S), jnp.int32)
    src_mask = src_mask.at[1, 0, 0, S - 3:].set(0)

    params = init_params(k_params, H, pf_dim)

    out, attn = decoder_layer(trg, enc_src, trg_mask, src_mask, params, n_heads)
    out = jax.block_until_ready(out)
    attn = jax.block_until_ready(attn)

    ref_out, ref_attn = decoder_layer_ref(trg, enc_src, trg_mask, src_mask,
                                          params, n_heads)
    assert out.shape == (B, T, H)
    assert attn.shape == (B, n_heads, T, S)
    # bf16 matmul operands (f32 accumulation) -> slightly looser tolerance
    assert jnp.allclose(out, ref_out, rtol=2e-2, atol=2e-2), "trg mismatch"
    assert jnp.allclose(attn, ref_attn, rtol=2e-2, atol=2e-2), "attention mismatch"

    print("KERNEL_OK")
</pallas_src>

<mosaic_0001>
module attributes {stable_mosaic.version = 11 : i64} {
  func.func @decoder_layer_kernel(%arg0: i32, %arg1: memref<1x8x32xf32, #tpu.memory_space<vmem>>, %arg2: memref<1x16x32xf32, #tpu.memory_space<vmem>>, %arg3: memref<1x1x8x8xi32, #tpu.memory_space<vmem>>, %arg4: memref<1x1x1x16xi32, #tpu.memory_space<vmem>>, %arg5: memref<32x32xbf16, #tpu.memory_space<vmem>>, %arg6: memref<1x32xf32, #tpu.memory_space<vmem>>, %arg7: memref<32x32xbf16, #tpu.memory_space<vmem>>, %arg8: memref<1x32xf32, #tpu.memory_space<vmem>>, %arg9: memref<32x32xbf16, #tpu.memory_space<vmem>>, %arg10: memref<1x32xf32, #tpu.memory_space<vmem>>, %arg11: memref<32x32xbf16, #tpu.memory_space<vmem>>, %arg12: memref<1x32xf32, #tpu.memory_space<vmem>>, %arg13: memref<1x32xf32, #tpu.memory_space<vmem>>, %arg14: memref<1x32xf32, #tpu.memory_space<vmem>>, %arg15: memref<32x32xbf16, #tpu.memory_space<vmem>>, %arg16: memref<1x32xf32, #tpu.memory_space<vmem>>, %arg17: memref<32x32xbf16, #tpu.memory_space<vmem>>, %arg18: memref<1x32xf32, #tpu.memory_space<vmem>>, %arg19: memref<32x32xbf16, #tpu.memory_space<vmem>>, %arg20: memref<1x32xf32, #tpu.memory_space<vmem>>, %arg21: memref<32x32xbf16, #tpu.memory_space<vmem>>, %arg22: memref<1x32xf32, #tpu.memory_space<vmem>>, %arg23: memref<1x32xf32, #tpu.memory_space<vmem>>, %arg24: memref<1x32xf32, #tpu.memory_space<vmem>>, %arg25: memref<32x64xbf16, #tpu.memory_space<vmem>>, %arg26: memref<1x64xf32, #tpu.memory_space<vmem>>, %arg27: memref<64x32xbf16, #tpu.memory_space<vmem>>, %arg28: memref<1x32xf32, #tpu.memory_space<vmem>>, %arg29: memref<1x32xf32, #tpu.memory_space<vmem>>, %arg30: memref<1x32xf32, #tpu.memory_space<vmem>>, %arg31: memref<1x8x32xf32, #tpu.memory_space<vmem>>, %arg32: memref<1x4x8x16xf32, #tpu.memory_space<vmem>>) attributes {dimension_semantics = [#tpu.dimension_semantics<parallel>], iteration_bounds = array<i64: 2>, scalar_prefetch = 0 : i64, scratch_operands = 0 : i64, tpu.core_type = #tpu.core_type<tc>, window_params = [{transform_indices = @transform_0, window_bounds = array<i64: 1, 8, 32>}, {transform_indices = @transform_1, window_bounds = array<i64: 1, 16, 32>}, {transform_indices = @transform_2, window_bounds = array<i64: 1, 1, 8, 8>}, {transform_indices = @transform_3, window_bounds = array<i64: 1, 1, 1, 16>}, {pipeline_mode = #tpu.pipeline_mode<synchronous>, transform_indices = @transform_4, window_bounds = array<i64: 32, 32>}, {pipeline_mode = #tpu.pipeline_mode<synchronous>, transform_indices = @transform_5, window_bounds = array<i64: 1, 32>}, {pipeline_mode = #tpu.pipeline_mode<synchronous>, transform_indices = @transform_6, window_bounds = array<i64: 32, 32>}, {pipeline_mode = #tpu.pipeline_mode<synchronous>, transform_indices = @transform_7, window_bounds = array<i64: 1, 32>}, {pipeline_mode = #tpu.pipeline_mode<synchronous>, transform_indices = @transform_8, window_bounds = array<i64: 32, 32>}, {pipeline_mode = #tpu.pipeline_mode<synchronous>, transform_indices = @transform_9, window_bounds = array<i64: 1, 32>}, {pipeline_mode = #tpu.pipeline_mode<synchronous>, transform_indices = @transform_10, window_bounds = array<i64: 32, 32>}, {pipeline_mode = #tpu.pipeline_mode<synchronous>, transform_indices = @transform_11, window_bounds = array<i64: 1, 32>}, {pipeline_mode = #tpu.pipeline_mode<synchronous>, transform_indices = @transform_12, window_bounds = array<i64: 1, 32>}, {pipeline_mode = #tpu.pipeline_mode<synchronous>, transform_indices = @transform_13, window_bounds = array<i64: 1, 32>}, {pipeline_mode = #tpu.pipeline_mode<synchronous>, transform_indices = @transform_14, window_bounds = array<i64: 32, 32>}, {pipeline_mode = #tpu.pipeline_mode<synchronous>, transform_indices = @transform_15, window_bounds = array<i64: 1, 32>}, {pipeline_mode = #tpu.pipeline_mode<synchronous>, transform_indices = @transform_16, window_bounds = array<i64: 32, 32>}, {pipeline_mode = #tpu.pipeline_mode<synchronous>, transform_indices = @transform_17, window_bounds = array<i64: 1, 32>}, {pipeline_mode = #tpu.pipeline_mode<synchronous>, transform_indices = @transform_18, window_bounds = array<i64: 32, 32>}, {pipeline_mode = #tpu.pipeline_mode<synchronous>, transform_indices = @transform_19, window_bounds = array<i64: 1, 32>}, {pipeline_mode = #tpu.pipeline_mode<synchronous>, transform_indices = @transform_20, window_bounds = array<i64: 32, 32>}, {pipeline_mode = #tpu.pipeline_mode<synchronous>, transform_indices = @transform_21, window_bounds = array<i64: 1, 32>}, {pipeline_mode = #tpu.pipeline_mode<synchronous>, transform_indices = @transform_22, window_bounds = array<i64: 1, 32>}, {pipeline_mode = #tpu.pipeline_mode<synchronous>, transform_indices = @transform_23, window_bounds = array<i64: 1, 32>}, {pipeline_mode = #tpu.pipeline_mode<synchronous>, transform_indices = @transform_24, window_bounds = array<i64: 32, 64>}, {pipeline_mode = #tpu.pipeline_mode<synchronous>, transform_indices = @transform_25, window_bounds = array<i64: 1, 64>}, {pipeline_mode = #tpu.pipeline_mode<synchronous>, transform_indices = @transform_26, window_bounds = array<i64: 64, 32>}, {pipeline_mode = #tpu.pipeline_mode<synchronous>, transform_indices = @transform_27, window_bounds = array<i64: 1, 32>}, {pipeline_mode = #tpu.pipeline_mode<synchronous>, transform_indices = @transform_28, window_bounds = array<i64: 1, 32>}, {pipeline_mode = #tpu.pipeline_mode<synchronous>, transform_indices = @transform_29, window_bounds = array<i64: 1, 32>}, {transform_indices = @transform_30, window_bounds = array<i64: 1, 8, 32>}, {transform_indices = @transform_31, window_bounds = array<i64: 1, 4, 8, 16>}]} {
    %c0 = arith.constant 0 : index
    %c0_0 = arith.constant 0 : index
    %c0_1 = arith.constant 0 : index
    %0 = vector.load %arg1[%c0, %c0_0, %c0_1] : memref<1x8x32xf32, #tpu.memory_space<vmem>>, vector<1x8x32xf32>
    %1 = vector.shape_cast %0 : vector<1x8x32xf32> to vector<8x32xf32>
    %c0_2 = arith.constant 0 : index
    %c0_3 = arith.constant 0 : index
    %c0_4 = arith.constant 0 : index
    %2 = vector.load %arg2[%c0_2, %c0_3, %c0_4] : memref<1x16x32xf32, #tpu.memory_space<vmem>>, vector<1x16x32xf32>
    %3 = vector.shape_cast %2 : vector<1x16x32xf32> to vector<16x32xf32>
    %cst = arith.constant 8.000000e+00 : f32
    %4 = math.sqrt %cst : f32
    %cst_5 = arith.constant 1.000000e+00 : f32
    %5 = arith.divf %cst_5, %4 : f32
    %c0_6 = arith.constant 0 : index
    %c0_7 = arith.constant 0 : index
    %c0_8 = arith.constant 0 : index
    %c0_9 = arith.constant 0 : index
    %6 = vector.load %arg3[%c0_6, %c0_7, %c0_8, %c0_9] : memref<1x1x8x8xi32, #tpu.memory_space<vmem>>, vector<1x1x8x8xi32>
    %7 = vector.shape_cast %6 : vector<1x1x8x8xi32> to vector<8x8xi32>
    %c0_10 = arith.constant 0 : index
    %c0_11 = arith.constant 0 : index
    %c0_12 = arith.constant 0 : index
    %c0_13 = arith.constant 0 : index
    %8 = vector.load %arg4[%c0_10, %c0_11, %c0_12, %c0_13] : memref<1x1x1x16xi32, #tpu.memory_space<vmem>>, vector<1x1x1x16xi32>
    %9 = vector.shape_cast %8 : vector<1x1x1x16xi32> to vector<1x16xi32>
    %c0_i32 = arith.constant 0 : i32
    %10 = vector.broadcast %c0_i32 : i32 to vector<8x8xi32>
    %11 = arith.cmpi eq, %7, %10 : vector<8x8xi32>
    %cst_14 = arith.constant -1.000000e+10 : f32
    %cst_15 = arith.constant 0.000000e+00 : f32
    %12 = vector.broadcast %cst_14 : f32 to vector<8x8xf32>
    %13 = vector.broadcast %cst_15 : f32 to vector<8x8xf32>
    %14 = arith.select %11, %12, %13 : vector<8x8xi1>, vector<8x8xf32>
    %15 = vector.shape_cast %14 : vector<8x8xf32> to vector<1x8x8xf32>
    %c0_i32_16 = arith.constant 0 : i32
    %16 = vector.broadcast %c0_i32_16 : i32 to vector<1x16xi32>
    %17 = arith.cmpi eq, %9, %16 : vector<1x16xi32>
    %cst_17 = arith.constant -1.000000e+10 : f32
    %cst_18 = arith.constant 0.000000e+00 : f32
    %18 = vector.broadcast %cst_17 : f32 to vector<1x16xf32>
    %19 = vector.broadcast %cst_18 : f32 to vector<1x16xf32>
    %20 = arith.select %17, %18, %19 : vector<1x16xi1>, vector<1x16xf32>
    %21 = vector.shape_cast %20 : vector<1x16xf32> to vector<1x1x16xf32>
    %c0_19 = arith.constant 0 : index
    %c0_20 = arith.constant 0 : index
    %22 = vector.load %arg5[%c0_19, %c0_20] : memref<32x32xbf16, #tpu.memory_space<vmem>>, vector<32x32xbf16>
    %c0_21 = arith.constant 0 : index
    %c0_22 = arith.constant 0 : index
    %23 = vector.load %arg6[%c0_21, %c0_22] : memref<1x32xf32, #tpu.memory_space<vmem>>, vector<1x32xf32>
    %c0_23 = arith.constant 0 : index
    %c0_24 = arith.constant 0 : index
    %24 = vector.load %arg7[%c0_23, %c0_24] : memref<32x32xbf16, #tpu.memory_space<vmem>>, vector<32x32xbf16>
    %c0_25 = arith.constant 0 : index
    %c0_26 = arith.constant 0 : index
    %25 = vector.load %arg8[%c0_25, %c0_26] : memref<1x32xf32, #tpu.memory_space<vmem>>, vector<1x32xf32>
    %c0_27 = arith.constant 0 : index
    %c0_28 = arith.constant 0 : index
    %26 = vector.load %arg9[%c0_27, %c0_28] : memref<32x32xbf16, #tpu.memory_space<vmem>>, vector<32x32xbf16>
    %c0_29 = arith.constant 0 : index
    %c0_30 = arith.constant 0 : index
    %27 = vector.load %arg10[%c0_29, %c0_30] : memref<1x32xf32, #tpu.memory_space<vmem>>, vector<1x32xf32>
    %c0_31 = arith.constant 0 : index
    %c0_32 = arith.constant 0 : index
    %28 = vector.load %arg11[%c0_31, %c0_32] : memref<32x32xbf16, #tpu.memory_space<vmem>>, vector<32x32xbf16>
    %c0_33 = arith.constant 0 : index
    %c0_34 = arith.constant 0 : index
    %29 = vector.load %arg12[%c0_33, %c0_34] : memref<1x32xf32, #tpu.memory_space<vmem>>, vector<1x32xf32>
    %30 = arith.truncf %1 : vector<8x32xf32> to vector<8x32xbf16>
    %31 = arith.truncf %1 : vector<8x32xf32> to vector<8x32xbf16>
    %cst_35 = arith.constant dense<0.000000e+00> : vector<8x32xf32>
    %32 = tpu.matmul %30, %22, %cst_35 {dimension_numbers = #tpu.dot_dimension_numbers<[1], [0], [0], [1], [0, 0, 1, 1], [], []>} : vector<8x32xbf16>, vector<32x32xbf16>, vector<8x32xf32> -> vector<8x32xf32>
    %33 = vector.broadcast %23 : vector<1x32xf32> to vector<8x32xf32>
    %34 = arith.addf %32, %33 : vector<8x32xf32>
    %cst_36 = arith.constant dense<0.000000e+00> : vector<8x32xf32>
    %35 = tpu.matmul %31, %24, %cst_36 {dimension_numbers = #tpu.dot_dimension_numbers<[1], [0], [0], [1], [0, 0, 1, 1], [], []>} : vector<8x32xbf16>, vector<32x32xbf16>, vector<8x32xf32> -> vector<8x32xf32>
    %36 = vector.broadcast %25 : vector<1x32xf32> to vector<8x32xf32>
    %37 = arith.addf %35, %36 : vector<8x32xf32>
    %cst_37 = arith.constant dense<0.000000e+00> : vector<8x32xf32>
    %38 = tpu.matmul %31, %26, %cst_37 {dimension_numbers = #tpu.dot_dimension_numbers<[1], [0], [0], [1], [0, 0, 1, 1], [], []>} : vector<8x32xbf16>, vector<32x32xbf16>, vector<8x32xf32> -> vector<8x32xf32>
    %39 = vector.broadcast %27 : vector<1x32xf32> to vector<8x32xf32>
    %40 = arith.addf %38, %39 : vector<8x32xf32>
    %41 = vector.broadcast %5 : f32 to vector<8x32xf32>
    %42 = arith.mulf %34, %41 : vector<8x32xf32>
    %43 = vector.shape_cast %42 : vector<8x32xf32> to vector<8x4x8xf32>
    %44 = tpu.transpose %43, [1, 0, 2] : vector<8x4x8xf32> -> vector<4x8x8xf32>
    %45 = vector.shape_cast %37 : vector<8x32xf32> to vector<8x4x8xf32>
    %46 = tpu.transpose %45, [1, 0, 2] : vector<8x4x8xf32> -> vector<4x8x8xf32>
    %47 = vector.shape_cast %40 : vector<8x32xf32> to vector<8x4x8xf32>
    %48 = tpu.transpose %47, [1, 0, 2] : vector<8x4x8xf32> -> vector<4x8x8xf32>
    %49 = arith.truncf %44 : vector<4x8x8xf32> to vector<4x8x8xbf16>
    %50 = arith.truncf %46 : vector<4x8x8xf32> to vector<4x8x8xbf16>
    "tpu.trace_start"() <{level = 10 : i32, message = "hqd,hkd->hqk"}> : () -> ()
    %cst_38 = arith.constant dense<0.000000e+00> : vector<4x8x8xf32>
    %51 = tpu.matmul %49, %50, %cst_38 {dimension_numbers = #tpu.dot_dimension_numbers<[2], [2], [1], [1], [0, 0, 0, 1, 1, 1], [0], [0]>} : vector<4x8x8xbf16>, vector<4x8x8xbf16>, vector<4x8x8xf32> -> vector<4x8x8xf32>
    "tpu.trace_stop"() : () -> ()
    %52 = vector.broadcast %15 : vector<1x8x8xf32> to vector<4x8x8xf32>
    %53 = arith.addf %51, %52 : vector<4x8x8xf32>
    %cst_39 = arith.constant dense<0xFF800000> : vector<4x8xf32>
    %54 = vector.multi_reduction <maximumf>, %53, %cst_39 [2] : vector<4x8x8xf32> to vector<4x8xf32>
    %55 = vector.shape_cast %54 : vector<4x8xf32> to vector<4x8x1xf32>
    %56 = vector.broadcast %55 : vector<4x8x1xf32> to vector<4x8x8xf32>
    %57 = arith.subf %53, %56 : vector<4x8x8xf32>
    %58 = math.exp %57 : vector<4x8x8xf32>
    %cst_40 = arith.constant dense<0.000000e+00> : vector<4x8xf32>
    %59 = vector.multi_reduction <add>, %58, %cst_40 [2] : vector<4x8x8xf32> to vector<4x8xf32>
    %60 = vector.shape_cast %59 : vector<4x8xf32> to vector<4x8x1xf32>
    %61 = tpu.reciprocal %60 {approx = true} : vector<4x8x1xf32> -> vector<4x8x1xf32>
    %62 = vector.broadcast %61 : vector<4x8x1xf32> to vector<4x8x8xf32>
    %63 = arith.mulf %58, %62 : vector<4x8x8xf32>
    %64 = arith.truncf %63 : vector<4x8x8xf32> to vector<4x8x8xbf16>
    %65 = arith.truncf %48 : vector<4x8x8xf32> to vector<4x8x8xbf16>
    "tpu.trace_start"() <{level = 10 : i32, message = "hqk,hkd->hqd"}> : () -> ()
    %cst_41 = arith.constant dense<0.000000e+00> : vector<4x8x8xf32>
    %66 = tpu.matmul %64, %65, %cst_41 {dimension_numbers = #tpu.dot_dimension_numbers<[2], [1], [1], [2], [0, 0, 0, 1, 1, 2], [0], [0]>} : vector<4x8x8xbf16>, vector<4x8x8xbf16>, vector<4x8x8xf32> -> vector<4x8x8xf32>
    "tpu.trace_stop"() : () -> ()
    %67 = tpu.transpose %66, [1, 0, 2] : vector<4x8x8xf32> -> vector<8x4x8xf32>
    %68 = vector.shape_cast %67 : vector<8x4x8xf32> to vector<8x32xf32>
    %69 = arith.truncf %68 : vector<8x32xf32> to vector<8x32xbf16>
    %cst_42 = arith.constant dense<0.000000e+00> : vector<8x32xf32>
    %70 = tpu.matmul %69, %28, %cst_42 {dimension_numbers = #tpu.dot_dimension_numbers<[1], [0], [0], [1], [0, 0, 1, 1], [], []>} : vector<8x32xbf16>, vector<32x32xbf16>, vector<8x32xf32> -> vector<8x32xf32>
    %71 = vector.broadcast %29 : vector<1x32xf32> to vector<8x32xf32>
    %72 = arith.addf %70, %71 : vector<8x32xf32>
    %73 = arith.addf %1, %72 : vector<8x32xf32>
    %c0_43 = arith.constant 0 : index
    %c0_44 = arith.constant 0 : index
    %74 = vector.load %arg13[%c0_43, %c0_44] : memref<1x32xf32, #tpu.memory_space<vmem>>, vector<1x32xf32>
    %c0_45 = arith.constant 0 : index
    %c0_46 = arith.constant 0 : index
    %75 = vector.load %arg14[%c0_45, %c0_46] : memref<1x32xf32, #tpu.memory_space<vmem>>, vector<1x32xf32>
    %cst_47 = arith.constant dense<0.000000e+00> : vector<8xf32>
    %76 = vector.multi_reduction <add>, %73, %cst_47 [1] : vector<8x32xf32> to vector<8xf32>
    %77 = vector.shape_cast %76 : vector<8xf32> to vector<8x1xf32>
    %cst_48 = arith.constant 3.200000e+01 : f32
    %78 = vector.broadcast %cst_48 : f32 to vector<8x1xf32>
    %79 = arith.divf %77, %78 : vector<8x1xf32>
    %80 = vector.broadcast %79 : vector<8x1xf32> to vector<8x32xf32>
    %81 = arith.subf %73, %80 : vector<8x32xf32>
    %82 = arith.mulf %81, %81 : vector<8x32xf32>
    %cst_49 = arith.constant dense<0.000000e+00> : vector<8xf32>
    %83 = vector.multi_reduction <add>, %82, %cst_49 [1] : vector<8x32xf32> to vector<8xf32>
    %84 = vector.shape_cast %83 : vector<8xf32> to vector<8x1xf32>
    %cst_50 = arith.constant 3.200000e+01 : f32
    %85 = vector.broadcast %cst_50 : f32 to vector<8x1xf32>
    %86 = arith.divf %84, %85 : vector<8x1xf32>
    %87 = vector.broadcast %79 : vector<8x1xf32> to vector<8x32xf32>
    %88 = arith.subf %73, %87 : vector<8x32xf32>
    %cst_51 = arith.constant 9.99999974E-6 : f32
    %89 = vector.broadcast %cst_51 : f32 to vector<8x1xf32>
    %90 = arith.addf %86, %89 : vector<8x1xf32>
    %91 = math.rsqrt %90 : vector<8x1xf32>
    %92 = vector.broadcast %91 : vector<8x1xf32> to vector<8x32xf32>
    %93 = arith.mulf %88, %92 : vector<8x32xf32>
    %94 = vector.broadcast %74 : vector<1x32xf32> to vector<8x32xf32>
    %95 = arith.mulf %93, %94 : vector<8x32xf32>
    %96 = vector.broadcast %75 : vector<1x32xf32> to vector<8x32xf32>
    %97 = arith.addf %95, %96 : vector<8x32xf32>
    %c0_52 = arith.constant 0 : index
    %c0_53 = arith.constant 0 : index
    %98 = vector.load %arg15[%c0_52, %c0_53] : memref<32x32xbf16, #tpu.memory_space<vmem>>, vector<32x32xbf16>
    %c0_54 = arith.constant 0 : index
    %c0_55 = arith.constant 0 : index
    %99 = vector.load %arg16[%c0_54, %c0_55] : memref<1x32xf32, #tpu.memory_space<vmem>>, vector<1x32xf32>
    %c0_56 = arith.constant 0 : index
    %c0_57 = arith.constant 0 : index
    %100 = vector.load %arg17[%c0_56, %c0_57] : memref<32x32xbf16, #tpu.memory_space<vmem>>, vector<32x32xbf16>
    %c0_58 = arith.constant 0 : index
    %c0_59 = arith.constant 0 : index
    %101 = vector.load %arg18[%c0_58, %c0_59] : memref<1x32xf32, #tpu.memory_space<vmem>>, vector<1x32xf32>
    %c0_60 = arith.constant 0 : index
    %c0_61 = arith.constant 0 : index
    %102 = vector.load %arg19[%c0_60, %c0_61] : memref<32x32xbf16, #tpu.memory_space<vmem>>, vector<32x32xbf16>
    %c0_62 = arith.constant 0 : index
    %c0_63 = arith.constant 0 : index
    %103 = vector.load %arg20[%c0_62, %c0_63] : memref<1x32xf32, #tpu.memory_space<vmem>>, vector<1x32xf32>
    %c0_64 = arith.constant 0 : index
    %c0_65 = arith.constant 0 : index
    %104 = vector.load %arg21[%c0_64, %c0_65] : memref<32x32xbf16, #tpu.memory_space<vmem>>, vector<32x32xbf16>
    %c0_66 = arith.constant 0 : index
    %c0_67 = arith.constant 0 : index
    %105 = vector.load %arg22[%c0_66, %c0_67] : memref<1x32xf32, #tpu.memory_space<vmem>>, vector<1x32xf32>
    %106 = arith.truncf %97 : vector<8x32xf32> to vector<8x32xbf16>
    %107 = arith.truncf %3 : vector<16x32xf32> to vector<16x32xbf16>
    %cst_68 = arith.constant dense<0.000000e+00> : vector<8x32xf32>
    %108 = tpu.matmul %106, %98, %cst_68 {dimension_numbers = #tpu.dot_dimension_numbers<[1], [0], [0], [1], [0, 0, 1, 1], [], []>} : vector<8x32xbf16>, vector<32x32xbf16>, vector<8x32xf32> -> vector<8x32xf32>
    %109 = vector.broadcast %99 : vector<1x32xf32> to vector<8x32xf32>
    %110 = arith.addf %108, %109 : vector<8x32xf32>
    %cst_69 = arith.constant dense<0.000000e+00> : vector<16x32xf32>
    %111 = tpu.matmul %107, %100, %cst_69 {dimension_numbers = #tpu.dot_dimension_numbers<[1], [0], [0], [1], [0, 0, 1, 1], [], []>} : vector<16x32xbf16>, vector<32x32xbf16>, vector<16x32xf32> -> vector<16x32xf32>
    %112 = vector.broadcast %101 : vector<1x32xf32> to vector<16x32xf32>
    %113 = arith.addf %111, %112 : vector<16x32xf32>
    %cst_70 = arith.constant dense<0.000000e+00> : vector<16x32xf32>
    %114 = tpu.matmul %107, %102, %cst_70 {dimension_numbers = #tpu.dot_dimension_numbers<[1], [0], [0], [1], [0, 0, 1, 1], [], []>} : vector<16x32xbf16>, vector<32x32xbf16>, vector<16x32xf32> -> vector<16x32xf32>
    %115 = vector.broadcast %103 : vector<1x32xf32> to vector<16x32xf32>
    %116 = arith.addf %114, %115 : vector<16x32xf32>
    %117 = vector.broadcast %5 : f32 to vector<8x32xf32>
    %118 = arith.mulf %110, %117 : vector<8x32xf32>
    %119 = vector.shape_cast %118 : vector<8x32xf32> to vector<8x4x8xf32>
    %120 = tpu.transpose %119, [1, 0, 2] : vector<8x4x8xf32> -> vector<4x8x8xf32>
    %121 = vector.shape_cast %113 : vector<16x32xf32> to vector<16x4x8xf32>
    %122 = tpu.transpose %121, [1, 0, 2] : vector<16x4x8xf32> -> vector<4x16x8xf32>
    %123 = vector.shape_cast %116 : vector<16x32xf32> to vector<16x4x8xf32>
    %124 = tpu.transpose %123, [1, 0, 2] : vector<16x4x8xf32> -> vector<4x16x8xf32>
    %125 = arith.truncf %120 : vector<4x8x8xf32> to vector<4x8x8xbf16>
    %126 = arith.truncf %122 : vector<4x16x8xf32> to vector<4x16x8xbf16>
    "tpu.trace_start"() <{level = 10 : i32, message = "hqd,hkd->hqk"}> : () -> ()
    %cst_71 = arith.constant dense<0.000000e+00> : vector<4x8x16xf32>
    %127 = tpu.matmul %125, %126, %cst_71 {dimension_numbers = #tpu.dot_dimension_numbers<[2], [2], [1], [1], [0, 0, 0, 1, 1, 1], [0], [0]>} : vector<4x8x8xbf16>, vector<4x16x8xbf16>, vector<4x8x16xf32> -> vector<4x8x16xf32>
    "tpu.trace_stop"() : () -> ()
    %128 = vector.broadcast %21 : vector<1x1x16xf32> to vector<4x8x16xf32>
    %129 = arith.addf %127, %128 : vector<4x8x16xf32>
    %cst_72 = arith.constant dense<0xFF800000> : vector<4x8xf32>
    %130 = vector.multi_reduction <maximumf>, %129, %cst_72 [2] : vector<4x8x16xf32> to vector<4x8xf32>
    %131 = vector.shape_cast %130 : vector<4x8xf32> to vector<4x8x1xf32>
    %132 = vector.broadcast %131 : vector<4x8x1xf32> to vector<4x8x16xf32>
    %133 = arith.subf %129, %132 : vector<4x8x16xf32>
    %134 = math.exp %133 : vector<4x8x16xf32>
    %cst_73 = arith.constant dense<0.000000e+00> : vector<4x8xf32>
    %135 = vector.multi_reduction <add>, %134, %cst_73 [2] : vector<4x8x16xf32> to vector<4x8xf32>
    %136 = vector.shape_cast %135 : vector<4x8xf32> to vector<4x8x1xf32>
    %137 = tpu.reciprocal %136 {approx = true} : vector<4x8x1xf32> -> vector<4x8x1xf32>
    %138 = vector.broadcast %137 : vector<4x8x1xf32> to vector<4x8x16xf32>
    %139 = arith.mulf %134, %138 : vector<4x8x16xf32>
    %140 = arith.truncf %139 : vector<4x8x16xf32> to vector<4x8x16xbf16>
    %141 = arith.truncf %124 : vector<4x16x8xf32> to vector<4x16x8xbf16>
    "tpu.trace_start"() <{level = 10 : i32, message = "hqk,hkd->hqd"}> : () -> ()
    %cst_74 = arith.constant dense<0.000000e+00> : vector<4x8x8xf32>
    %142 = tpu.matmul %140, %141, %cst_74 {dimension_numbers = #tpu.dot_dimension_numbers<[2], [1], [1], [2], [0, 0, 0, 1, 1, 2], [0], [0]>} : vector<4x8x16xbf16>, vector<4x16x8xbf16>, vector<4x8x8xf32> -> vector<4x8x8xf32>
    "tpu.trace_stop"() : () -> ()
    %143 = tpu.transpose %142, [1, 0, 2] : vector<4x8x8xf32> -> vector<8x4x8xf32>
    %144 = vector.shape_cast %143 : vector<8x4x8xf32> to vector<8x32xf32>
    %145 = arith.truncf %144 : vector<8x32xf32> to vector<8x32xbf16>
    %cst_75 = arith.constant dense<0.000000e+00> : vector<8x32xf32>
    %146 = tpu.matmul %145, %104, %cst_75 {dimension_numbers = #tpu.dot_dimension_numbers<[1], [0], [0], [1], [0, 0, 1, 1], [], []>} : vector<8x32xbf16>, vector<32x32xbf16>, vector<8x32xf32> -> vector<8x32xf32>
    %147 = vector.broadcast %105 : vector<1x32xf32> to vector<8x32xf32>
    %148 = arith.addf %146, %147 : vector<8x32xf32>
    %149 = arith.addf %97, %148 : vector<8x32xf32>
    %c0_76 = arith.constant 0 : index
    %c0_77 = arith.constant 0 : index
    %150 = vector.load %arg23[%c0_76, %c0_77] : memref<1x32xf32, #tpu.memory_space<vmem>>, vector<1x32xf32>
    %c0_78 = arith.constant 0 : index
    %c0_79 = arith.constant 0 : index
    %151 = vector.load %arg24[%c0_78, %c0_79] : memref<1x32xf32, #tpu.memory_space<vmem>>, vector<1x32xf32>
    %cst_80 = arith.constant dense<0.000000e+00> : vector<8xf32>
    %152 = vector.multi_reduction <add>, %149, %cst_80 [1] : vector<8x32xf32> to vector<8xf32>
    %153 = vector.shape_cast %152 : vector<8xf32> to vector<8x1xf32>
    %cst_81 = arith.constant 3.200000e+01 : f32
    %154 = vector.broadcast %cst_81 : f32 to vector<8x1xf32>
    %155 = arith.divf %153, %154 : vector<8x1xf32>
    %156 = vector.broadcast %155 : vector<8x1xf32> to vector<8x32xf32>
    %157 = arith.subf %149, %156 : vector<8x32xf32>
    %158 = arith.mulf %157, %157 : vector<8x32xf32>
    %cst_82 = arith.constant dense<0.000000e+00> : vector<8xf32>
    %159 = vector.multi_reduction <add>, %158, %cst_82 [1] : vector<8x32xf32> to vector<8xf32>
    %160 = vector.shape_cast %159 : vector<8xf32> to vector<8x1xf32>
    %cst_83 = arith.constant 3.200000e+01 : f32
    %161 = vector.broadcast %cst_83 : f32 to vector<8x1xf32>
    %162 = arith.divf %160, %161 : vector<8x1xf32>
    %163 = vector.broadcast %155 : vector<8x1xf32> to vector<8x32xf32>
    %164 = arith.subf %149, %163 : vector<8x32xf32>
    %cst_84 = arith.constant 9.99999974E-6 : f32
    %165 = vector.broadcast %cst_84 : f32 to vector<8x1xf32>
    %166 = arith.addf %162, %165 : vector<8x1xf32>
    %167 = math.rsqrt %166 : vector<8x1xf32>
    %168 = vector.broadcast %167 : vector<8x1xf32> to vector<8x32xf32>
    %169 = arith.mulf %164, %168 : vector<8x32xf32>
    %170 = vector.broadcast %150 : vector<1x32xf32> to vector<8x32xf32>
    %171 = arith.mulf %169, %170 : vector<8x32xf32>
    %172 = vector.broadcast %151 : vector<1x32xf32> to vector<8x32xf32>
    %173 = arith.addf %171, %172 : vector<8x32xf32>
    %174 = arith.truncf %173 : vector<8x32xf32> to vector<8x32xbf16>
    %c0_85 = arith.constant 0 : index
    %c0_86 = arith.constant 0 : index
    %175 = vector.load %arg25[%c0_85, %c0_86] : memref<32x64xbf16, #tpu.memory_space<vmem>>, vector<32x64xbf16>
    %cst_87 = arith.constant dense<0.000000e+00> : vector<8x64xf32>
    %176 = tpu.matmul %174, %175, %cst_87 {dimension_numbers = #tpu.dot_dimension_numbers<[1], [0], [0], [1], [0, 0, 1, 1], [], []>} : vector<8x32xbf16>, vector<32x64xbf16>, vector<8x64xf32> -> vector<8x64xf32>
    %c0_88 = arith.constant 0 : index
    %c0_89 = arith.constant 0 : index
    %177 = vector.load %arg26[%c0_88, %c0_89] : memref<1x64xf32, #tpu.memory_space<vmem>>, vector<1x64xf32>
    %178 = vector.broadcast %177 : vector<1x64xf32> to vector<8x64xf32>
    %179 = arith.addf %176, %178 : vector<8x64xf32>
    %cst_90 = arith.constant 0.000000e+00 : f32
    %180 = vector.broadcast %cst_90 : f32 to vector<8x64xf32>
    %181 = arith.maximumf %179, %180 : vector<8x64xf32>
    %182 = arith.truncf %181 : vector<8x64xf32> to vector<8x64xbf16>
    %c0_91 = arith.constant 0 : index
    %c0_92 = arith.constant 0 : index
    %183 = vector.load %arg27[%c0_91, %c0_92] : memref<64x32xbf16, #tpu.memory_space<vmem>>, vector<64x32xbf16>
    %cst_93 = arith.constant dense<0.000000e+00> : vector<8x32xf32>
    %184 = tpu.matmul %182, %183, %cst_93 {dimension_numbers = #tpu.dot_dimension_numbers<[1], [0], [0], [1], [0, 0, 1, 1], [], []>} : vector<8x64xbf16>, vector<64x32xbf16>, vector<8x32xf32> -> vector<8x32xf32>
    %c0_94 = arith.constant 0 : index
    %c0_95 = arith.constant 0 : index
    %185 = vector.load %arg28[%c0_94, %c0_95] : memref<1x32xf32, #tpu.memory_space<vmem>>, vector<1x32xf32>
    %186 = vector.broadcast %185 : vector<1x32xf32> to vector<8x32xf32>
    %187 = arith.addf %184, %186 : vector<8x32xf32>
    %188 = arith.addf %173, %187 : vector<8x32xf32>
    %c0_96 = arith.constant 0 : index
    %c0_97 = arith.constant 0 : index
    %189 = vector.load %arg29[%c0_96, %c0_97] : memref<1x32xf32, #tpu.memory_space<vmem>>, vector<1x32xf32>
    %c0_98 = arith.constant 0 : index
    %c0_99 = arith.constant 0 : index
    %190 = vector.load %arg30[%c0_98, %c0_99] : memref<1x32xf32, #tpu.memory_space<vmem>>, vector<1x32xf32>
    %cst_100 = arith.constant dense<0.000000e+00> : vector<8xf32>
    %191 = vector.multi_reduction <add>, %188, %cst_100 [1] : vector<8x32xf32> to vector<8xf32>
    %192 = vector.shape_cast %191 : vector<8xf32> to vector<8x1xf32>
    %cst_101 = arith.constant 3.200000e+01 : f32
    %193 = vector.broadcast %cst_101 : f32 to vector<8x1xf32>
    %194 = arith.divf %192, %193 : vector<8x1xf32>
    %195 = vector.broadcast %194 : vector<8x1xf32> to vector<8x32xf32>
    %196 = arith.subf %188, %195 : vector<8x32xf32>
    %197 = arith.mulf %196, %196 : vector<8x32xf32>
    %cst_102 = arith.constant dense<0.000000e+00> : vector<8xf32>
    %198 = vector.multi_reduction <add>, %197, %cst_102 [1] : vector<8x32xf32> to vector<8xf32>
    %199 = vector.shape_cast %198 : vector<8xf32> to vector<8x1xf32>
    %cst_103 = arith.constant 3.200000e+01 : f32
    %200 = vector.broadcast %cst_103 : f32 to vector<8x1xf32>
    %201 = arith.divf %199, %200 : vector<8x1xf32>
    %202 = vector.broadcast %194 : vector<8x1xf32> to vector<8x32xf32>
    %203 = arith.subf %188, %202 : vector<8x32xf32>
    %cst_104 = arith.constant 9.99999974E-6 : f32
    %204 = vector.broadcast %cst_104 : f32 to vector<8x1xf32>
    %205 = arith.addf %201, %204 : vector<8x1xf32>
    %206 = math.rsqrt %205 : vector<8x1xf32>
    %207 = vector.broadcast %206 : vector<8x1xf32> to vector<8x32xf32>
    %208 = arith.mulf %203, %207 : vector<8x32xf32>
    %209 = vector.broadcast %189 : vector<1x32xf32> to vector<8x32xf32>
    %210 = arith.mulf %208, %209 : vector<8x32xf32>
    %211 = vector.broadcast %190 : vector<1x32xf32> to vector<8x32xf32>
    %212 = arith.addf %210, %211 : vector<8x32xf32>
    %c0_105 = arith.constant 0 : index
    %c0_106 = arith.constant 0 : index
    %c0_107 = arith.constant 0 : index
    %213 = vector.load %arg31[%c0_105, %c0_106, %c0_107] : memref<1x8x32xf32, #tpu.memory_space<vmem>>, vector<1x8x32xf32>
    %214 = vector.shape_cast %213 : vector<1x8x32xf32> to vector<8x32xf32>
    %215 = vector.shape_cast %212 : vector<8x32xf32> to vector<1x8x32xf32>
    tpu.vector_store %arg31[%c0_105, %c0_106, %c0_107], %215 {strides = array<i32>} : memref<1x8x32xf32, #tpu.memory_space<vmem>>, vector<1x8x32xf32>,
    %c0_108 = arith.constant 0 : index
    %c0_109 = arith.constant 0 : index
    %c0_110 = arith.constant 0 : index
    %c0_111 = arith.constant 0 : index
    %216 = vector.load %arg32[%c0_108, %c0_109, %c0_110, %c0_111] : memref<1x4x8x16xf32, #tpu.memory_space<vmem>>, vector<1x4x8x16xf32>
    %217 = vector.shape_cast %216 : vector<1x4x8x16xf32> to vector<4x8x16xf32>
    %218 = vector.shape_cast %139 : vector<4x8x16xf32> to vector<1x4x8x16xf32>
    tpu.vector_store %arg32[%c0_108, %c0_109, %c0_110, %c0_111], %218 {strides = array<i32>} : memref<1x4x8x16xf32, #tpu.memory_space<vmem>>, vector<1x4x8x16xf32>,
    return
  }
  func.func @transform_0(%arg0: i32) -> (i32, i32, i32) {
    %c0_i32 = arith.constant 0 : i32
    %c0_i32_0 = arith.constant 0 : i32
    %c0_i32_1 = arith.constant 0 : i32
    return %arg0, %c0_i32, %c0_i32_0 : i32, i32, i32
  }
  func.func @transform_1(%arg0: i32) -> (i32, i32, i32) {
    %c0_i32 = arith.constant 0 : i32
    %c0_i32_0 = arith.constant 0 : i32
    %c0_i32_1 = arith.constant 0 : i32
    return %arg0, %c0_i32, %c0_i32_0 : i32, i32, i32
  }
  func.func @transform_2(%arg0: i32) -> (i32, i32, i32, i32) {
    %c0_i32 = arith.constant 0 : i32
    %c0_i32_0 = arith.constant 0 : i32
    %c0_i32_1 = arith.constant 0 : i32
    %c0_i32_2 = arith.constant 0 : i32
    return %arg0, %c0_i32, %c0_i32_0, %c0_i32_1 : i32, i32, i32, i32
  }
  func.func @transform_3(%arg0: i32) -> (i32, i32, i32, i32) {
    %c0_i32 = arith.constant 0 : i32
    %c0_i32_0 = arith.constant 0 : i32
    %c0_i32_1 = arith.constant 0 : i32
    %c0_i32_2 = arith.constant 0 : i32
    return %arg0, %c0_i32, %c0_i32_0, %c0_i32_1 : i32, i32, i32, i32
  }
  func.func @transform_4(%arg0: i32) -> (i32, i32) {
    %c0_i32 = arith.constant 0 : i32
    %c0_i32_0 = arith.constant 0 : i32
    %c0_i32_1 = arith.constant 0 : i32
    return %c0_i32, %c0_i32_0 : i32, i32
  }
  func.func @transform_5(%arg0: i32) -> (i32, i32) {
    %c0_i32 = arith.constant 0 : i32
    %c0_i32_0 = arith.constant 0 : i32
    %c0_i32_1 = arith.constant 0 : i32
    return %c0_i32, %c0_i32_0 : i32, i32
  }
  func.func @transform_6(%arg0: i32) -> (i32, i32) {
    %c0_i32 = arith.constant 0 : i32
    %c0_i32_0 = arith.constant 0 : i32
    %c0_i32_1 = arith.constant 0 : i32
    return %c0_i32, %c0_i32_0 : i32, i32
  }
  func.func @transform_7(%arg0: i32) -> (i32, i32) {
    %c0_i32 = arith.constant 0 : i32
    %c0_i32_0 = arith.constant 0 : i32
    %c0_i32_1 = arith.constant 0 : i32
    return %c0_i32, %c0_i32_0 : i32, i32
  }
  func.func @transform_8(%arg0: i32) -> (i32, i32) {
    %c0_i32 = arith.constant 0 : i32
    %c0_i32_0 = arith.constant 0 : i32
    %c0_i32_1 = arith.constant 0 : i32
    return %c0_i32, %c0_i32_0 : i32, i32
  }
  func.func @transform_9(%arg0: i32) -> (i32, i32) {
    %c0_i32 = arith.constant 0 : i32
    %c0_i32_0 = arith.constant 0 : i32
    %c0_i32_1 = arith.constant 0 : i32
    return %c0_i32, %c0_i32_0 : i32, i32
  }
  func.func @transform_10(%arg0: i32) -> (i32, i32) {
    %c0_i32 = arith.constant 0 : i32
    %c0_i32_0 = arith.constant 0 : i32
    %c0_i32_1 = arith.constant 0 : i32
    return %c0_i32, %c0_i32_0 : i32, i32
  }
  func.func @transform_11(%arg0: i32) -> (i32, i32) {
    %c0_i32 = arith.constant 0 : i32
    %c0_i32_0 = arith.constant 0 : i32
    %c0_i32_1 = arith.constant 0 : i32
    return %c0_i32, %c0_i32_0 : i32, i32
  }
  func.func @transform_12(%arg0: i32) -> (i32, i32) {
    %c0_i32 = arith.constant 0 : i32
    %c0_i32_0 = arith.constant 0 : i32
    %c0_i32_1 = arith.constant 0 : i32
    return %c0_i32, %c0_i32_0 : i32, i32
  }
  func.func @transform_13(%arg0: i32) -> (i32, i32) {
    %c0_i32 = arith.constant 0 : i32
    %c0_i32_0 = arith.constant 0 : i32
    %c0_i32_1 = arith.constant 0 : i32
    return %c0_i32, %c0_i32_0 : i32, i32
  }
  func.func @transform_14(%arg0: i32) -> (i32, i32) {
    %c0_i32 = arith.constant 0 : i32
    %c0_i32_0 = arith.constant 0 : i32
    %c0_i32_1 = arith.constant 0 : i32
    return %c0_i32, %c0_i32_0 : i32, i32
  }
  func.func @transform_15(%arg0: i32) -> (i32, i32) {
    %c0_i32 = arith.constant 0 : i32
    %c0_i32_0 = arith.constant 0 : i32
    %c0_i32_1 = arith.constant 0 : i32
    return %c0_i32, %c0_i32_0 : i32, i32
  }
  func.func @transform_16(%arg0: i32) -> (i32, i32) {
    %c0_i32 = arith.constant 0 : i32
    %c0_i32_0 = arith.constant 0 : i32
    %c0_i32_1 = arith.constant 0 : i32
    return %c0_i32, %c0_i32_0 : i32, i32
  }
  func.func @transform_17(%arg0: i32) -> (i32, i32) {
    %c0_i32 = arith.constant 0 : i32
    %c0_i32_0 = arith.constant 0 : i32
    %c0_i32_1 = arith.constant 0 : i32
    return %c0_i32, %c0_i32_0 : i32, i32
  }
  func.func @transform_18(%arg0: i32) -> (i32, i32) {
    %c0_i32 = arith.constant 0 : i32
    %c0_i32_0 = arith.constant 0 : i32
    %c0_i32_1 = arith.constant 0 : i32
    return %c0_i32, %c0_i32_0 : i32, i32
  }
  func.func @transform_19(%arg0: i32) -> (i32, i32) {
    %c0_i32 = arith.constant 0 : i32
    %c0_i32_0 = arith.constant 0 : i32
    %c0_i32_1 = arith.constant 0 : i32
    return %c0_i32, %c0_i32_0 : i32, i32
  }
  func.func @transform_20(%arg0: i32) -> (i32, i32) {
    %c0_i32 = arith.constant 0 : i32
    %c0_i32_0 = arith.constant 0 : i32
    %c0_i32_1 = arith.constant 0 : i32
    return %c0_i32, %c0_i32_0 : i32, i32
  }
  func.func @transform_21(%arg0: i32) -> (i32, i32) {
    %c0_i32 = arith.constant 0 : i32
    %c0_i32_0 = arith.constant 0 : i32
    %c0_i32_1 = arith.constant 0 : i32
    return %c0_i32, %c0_i32_0 : i32, i32
  }
  func.func @transform_22(%arg0: i32) -> (i32, i32) {
    %c0_i32 = arith.constant 0 : i32
    %c0_i32_0 = arith.constant 0 : i32
    %c0_i32_1 = arith.constant 0 : i32
    return %c0_i32, %c0_i32_0 : i32, i32
  }
  func.func @transform_23(%arg0: i32) -> (i32, i32) {
    %c0_i32 = arith.constant 0 : i32
    %c0_i32_0 = arith.constant 0 : i32
    %c0_i32_1 = arith.constant 0 : i32
    return %c0_i32, %c0_i32_0 : i32, i32
  }
  func.func @transform_24(%arg0: i32) -> (i32, i32) {
    %c0_i32 = arith.constant 0 : i32
    %c0_i32_0 = arith.constant 0 : i32
    %c0_i32_1 = arith.constant 0 : i32
    return %c0_i32, %c0_i32_0 : i32, i32
  }
  func.func @transform_25(%arg0: i32) -> (i32, i32) {
    %c0_i32 = arith.constant 0 : i32
    %c0_i32_0 = arith.constant 0 : i32
    %c0_i32_1 = arith.constant 0 : i32
    return %c0_i32, %c0_i32_0 : i32, i32
  }
  func.func @transform_26(%arg0: i32) -> (i32, i32) {
    %c0_i32 = arith.constant 0 : i32
    %c0_i32_0 = arith.constant 0 : i32
    %c0_i32_1 = arith.constant 0 : i32
    return %c0_i32, %c0_i32_0 : i32, i32
  }
  func.func @transform_27(%arg0: i32) -> (i32, i32) {
    %c0_i32 = arith.constant 0 : i32
    %c0_i32_0 = arith.constant 0 : i32
    %c0_i32_1 = arith.constant 0 : i32
    return %c0_i32, %c0_i32_0 : i32, i32
  }
  func.func @transform_28(%arg0: i32) -> (i32, i32) {
    %c0_i32 = arith.constant 0 : i32
    %c0_i32_0 = arith.constant 0 : i32
    %c0_i32_1 = arith.constant 0 : i32
    return %c0_i32, %c0_i32_0 : i32, i32
  }
  func.func @transform_29(%arg0: i32) -> (i32, i32) {
    %c0_i32 = arith.constant 0 : i32
    %c0_i32_0 = arith.constant 0 : i32
    %c0_i32_1 = arith.constant 0 : i32
    return %c0_i32, %c0_i32_0 : i32, i32
  }
  func.func @transform_30(%arg0: i32) -> (i32, i32, i32) {
    %c0_i32 = arith.constant 0 : i32
    %c0_i32_0 = arith.constant 0 : i32
    %c0_i32_1 = arith.constant 0 : i32
    return %arg0, %c0_i32, %c0_i32_0 : i32, i32, i32
  }
  func.func @transform_31(%arg0: i32) -> (i32, i32, i32, i32) {
    %c0_i32 = arith.constant 0 : i32
    %c0_i32_0 = arith.constant 0 : i32
    %c0_i32_1 = arith.constant 0 : i32
    %c0_i32_2 = arith.constant 0 : i32
    return %arg0, %c0_i32, %c0_i32_0, %c0_i32_1 : i32, i32, i32, i32
  }
}

</mosaic_0001>

<llo_original>
// kernel: tpu_custom_call.1
$region0: #{tpu_custom_call.1}
  #allocation0 [shape = 'u32[]', space=smem, size = 0x4, offset = 0x4, fixed_abs, tag = 'smem constant byte address 0x4 - core index']
  #allocation1 [shape = 'u32[144,128]{1,0:T(1,128)}', space=vmem, size = 0x12000, scoped, tag = 'internal scratch']
  %s0 = inlined_call_operand.smem [shape: u32[32], index: -1, kind: input, shape index: {}]
  %s1 = sld [smem:[%s0]]
  %s2 = scalar_lea.smem %s0, 1
  %s3 = sld [smem:[%s2]]
  %s4 = scalar_lea.smem %s0, 2
  %s5 = sld [smem:[%s4]]
  %s6 = scalar_lea.smem %s0, 3
  %s7 = sld [smem:[%s6]]
  %s8 = scalar_lea.smem %s0, 4
  %s9 = sld [smem:[%s8]]
  %s10 = scalar_lea.smem %s0, 5
  %s11 = sld [smem:[%s10]]
  %s12 = scalar_lea.smem %s0, 6
  %s13 = sld [smem:[%s12]]
  %s14 = scalar_lea.smem %s0, 7
  %s15 = sld [smem:[%s14]]
  %s16 = scalar_lea.smem %s0, 8
  %s17 = sld [smem:[%s16]]
  %s18 = scalar_lea.smem %s0, 9
  %s19 = sld [smem:[%s18]]
  %s20 = scalar_lea.smem %s0, 10
  %s21 = sld [smem:[%s20]]
  %s22 = scalar_lea.smem %s0, 11
  %s23 = sld [smem:[%s22]]
  %s24 = scalar_lea.smem %s0, 12
  %s25 = sld [smem:[%s24]]
  %s26 = scalar_lea.smem %s0, 13
  %s27 = sld [smem:[%s26]]
  %s28 = scalar_lea.smem %s0, 14
  %s29 = sld [smem:[%s28]]
  %s30 = scalar_lea.smem %s0, 15
  %s31 = sld [smem:[%s30]]
  %s32 = scalar_lea.smem %s0, 16
  %s33 = sld [smem:[%s32]]
  %s34 = scalar_lea.smem %s0, 17
  %s35 = sld [smem:[%s34]]
  %s36 = scalar_lea.smem %s0, 18
  %s37 = sld [smem:[%s36]]
  %s38 = scalar_lea.smem %s0, 19
  %s39 = sld [smem:[%s38]]
  %s40 = scalar_lea.smem %s0, 20
  %s41 = sld [smem:[%s40]]
  %s42 = scalar_lea.smem %s0, 21
  %s43 = sld [smem:[%s42]]
  %s44 = scalar_lea.smem %s0, 22
  %s45 = sld [smem:[%s44]]
  %s46 = scalar_lea.smem %s0, 23
  %s47 = sld [smem:[%s46]]
  %s48 = scalar_lea.smem %s0, 24
  %s49 = sld [smem:[%s48]]
  %s50 = scalar_lea.smem %s0, 25
  %s51 = sld [smem:[%s50]]
  %s52 = scalar_lea.smem %s0, 26
  %s53 = sld [smem:[%s52]]
  %s54 = scalar_lea.smem %s0, 27
  %s55 = sld [smem:[%s54]]
  %s56 = scalar_lea.smem %s0, 28
  %s57 = sld [smem:[%s56]]
  %s58 = scalar_lea.smem %s0, 29
  %s59 = sld [smem:[%s58]]
  %s60 = scalar_lea.smem %s0, 30
  %s61 = sld [smem:[%s60]]
  %s62 = scalar_lea.smem %s0, 31
  %s63 = sld [smem:[%s62]]
  %64 = xla_tuple %s61, %s63
  %s65 = sld [smem:[#allocation0]]
  $region221: #{tpu_custom_call.1} parent=0
    _
  %s67 = ssub.s32 1, %s65
  %s68 = scalar_select 0, %s67, %s65
  $region1: #{tpu_custom_call.1} parent=0
    #allocation2 [shape = 'u8[8192]{0}', space=vmem, size = 0x2000, scoped, tag = 'input window, operand 2']
    #allocation3 [shape = 's32[2]{0}', space=sflag, size = 0x8, scoped, tag = 'scoped memory for tpu_custom_call.1']
    #allocation4 [shape = 's32[2]{0}', space=sflag, size = 0x8, scoped, tag = 'scoped memory for tpu_custom_call.1']
    #allocation5 [shape = 'u8[1024]{0}', space=vmem, size = 0x400, scoped, tag = 'input window, operand 3']
    #allocation6 [shape = 's32[2]{0}', space=sflag, size = 0x8, scoped, tag = 'scoped memory for tpu_custom_call.1']
    #allocation7 [shape = 'u8[8192]{0}', space=vmem, size = 0x2000, scoped, tag = 'input window, operand 4, single buffered']
    #allocation8 [shape = 'u8[512]{0}', space=vmem, size = 0x400, scoped, tag = 'input window, operand 5, single buffered']
    #allocation9 [shape = 's32[1]{0}', space=sflag, size = 0x4, scoped, tag = 'scoped memory for tpu_custom_call.1']
    #allocation10 [shape = 'u8[8192]{0}', space=vmem, size = 0x2000, scoped, tag = 'input window, operand 6, single buffered']
    #allocation11 [shape = 'u8[512]{0}', space=vmem, size = 0x400, scoped, tag = 'input window, operand 7, single buffered']
    #allocation12 [shape = 's32[1]{0}', space=sflag, size = 0x4, scoped, tag = 'scoped memory for tpu_custom_call.1']
    #allocation13 [shape = 'u8[8192]{0}', space=vmem, size = 0x2000, scoped, tag = 'input window, operand 8, single buffered']
    #allocation14 [shape = 'u8[512]{0}', space=vmem, size = 0x400, scoped, tag = 'input window, operand 9, single buffered']
    #allocation15 [shape = 's32[1]{0}', space=sflag, size = 0x4, scoped, tag = 'scoped memory for tpu_custom_call.1']
    #allocation16 [shape = 'u8[512]{0}', space=vmem, size = 0x400, scoped, tag = 'input window, operand 11, single buffered']
    #allocation17 [shape = 'u8[512]{0}', space=vmem, size = 0x400, scoped, tag = 'input window, operand 12, single buffered']
    #allocation18 [shape = 's32[1]{0}', space=sflag, size = 0x4, scoped, tag = 'scoped memory for tpu_custom_call.1']
    #allocation19 [shape = 'u8[512]{0}', space=vmem, size = 0x400, scoped, tag = 'input window, operand 13, single buffered']
    #allocation20 [shape = 'u8[512]{0}', space=vmem, size = 0x400, scoped, tag = 'input window, operand 15, single buffered']
    #allocation21 [shape = 's32[1]{0}', space=sflag, size = 0x4, scoped, tag = 'scoped memory for tpu_custom_call.1']
    #allocation22 [shape = 'u8[8192]{0}', space=vmem, size = 0x2000, scoped, tag = 'input window, operand 16, single buffered']
    #allocation23 [shape = 'u8[512]{0}', space=vmem, size = 0x400, scoped, tag = 'input window, operand 17, single buffered']
    #allocation24 [shape = 's32[1]{0}', space=sflag, size = 0x4, scoped, tag = 'scoped memory for tpu_custom_call.1']
    #allocation25 [shape = 'u8[8192]{0}', space=vmem, size = 0x2000, scoped, tag = 'input window, operand 20, single buffered']
    #allocation26 [shape = 'u8[8192]{0}', space=vmem, size = 0x2000, scoped, tag = 'output window, operand 0']
    #allocation27 [shape = 'u8[32768]{0}', space=vmem, size = 0x8000, scoped, tag = 'output window, operand 1']
    #allocation28 [shape = 's32[2]{0}', space=sflag, size = 0x8, scoped, tag = 'scoped memory for tpu_custom_call.1']
    %69 = vsyncpa [#allocation3], 0
    %s70 = scalar_lea.sflag [#allocation3], 1
    %71 = vsyncpa %s70, 0
    %72 = vsyncpa [#allocation6], 0
    %s73 = scalar_lea.sflag [#allocation6], 1
    %74 = vsyncpa %s73, 0
    %75 = vsyncpa [#allocation9], 0
    %76 = vsyncpa [#allocation12], 0
    %77 = vsyncpa [#allocation15], 0
    %78 = vsyncpa [#allocation18], 0
    %79 = vsyncpa [#allocation21], 0
    %80 = vsyncpa [#allocation24], 0
    %81 = vsyncpa [#allocation4], 0
    %s82 = scalar_lea.sflag [#allocation4], 1
    %83 = vsyncpa %s82, 0
    %84 = vsyncpa [#allocation28], 0
    %s85 = scalar_lea.sflag [#allocation28], 1
    %86 = vsyncpa %s85, 0
    loop: start=0, step=1, limit=4
    $region2: #{tpu_custom_call.1} parent=1 // loop_pre_header
      _
    $region3: #{tpu_custom_call.1} parent=1 // loop_header
      %s88 = sphi 0, %s92
      %p89 = scmp.ge.s32.totalorder %s88, 4
      %s98 = sphi 0, %s100
      %s101 = sphi 0, %s98
      %s102 = sphi 0, %s101
      %s118 = sphi 0, %s102
      %s124 = sphi 0, %s126
      %s127 = sphi 0, %s124
      %s128 = sphi 0, %s127
      %s144 = sphi 0, %s128
      %s150 = sphi 0, %s152
      %s153 = sphi 0, %s150
      %s154 = sphi 0, %s153
      %s170 = sphi 0, %s154
      %s176 = sphi 0, %s178
      %s179 = sphi 0, %s176
      %s180 = sphi 0, %s179
      %s196 = sphi 0, %s180
      %s200 = sphi 0, %s200
      %s202 = sphi 0, %s200
      %s203 = sphi 0, %s202
      %s217 = sphi 0, %s203
      %s221 = sphi 0, %s221
      %s223 = sphi 0, %s221
      %s224 = sphi 0, %s223
      %s238 = sphi 0, %s224
      %s242 = sphi 0, %s242
      %s244 = sphi 0, %s242
      %s245 = sphi 0, %s244
      %s259 = sphi 0, %s245
      %s263 = sphi 0, %s263
      %s265 = sphi 0, %s263
      %s266 = sphi 0, %s265
      %s280 = sphi 0, %s266
      %s284 = sphi 0, %s284
      %s286 = sphi 0, %s284
      %s287 = sphi 0, %s286
      %s301 = sphi 0, %s287
      %s305 = sphi 0, %s305
      %s307 = sphi 0, %s305
      %s308 = sphi 0, %s307
      %s322 = sphi 0, %s308
      %s326 = sphi 0, %s326
      %s328 = sphi 0, %s326
      %s329 = sphi 0, %s328
      %s343 = sphi 0, %s329
      %s347 = sphi 0, %s347
      %s349 = sphi 0, %s347
      %s350 = sphi 0, %s349
      %s364 = sphi 0, %s350
      %s368 = sphi 0, %s368
      %s370 = sphi 0, %s368
      %s371 = sphi 0, %s370
      %s385 = sphi 0, %s371
      %s389 = sphi 0, %s389
      %s391 = sphi 0, %s389
      %s392 = sphi 0, %s391
      %s406 = sphi 0, %s392
      %s410 = sphi 0, %s410
      %s412 = sphi 0, %s410
      %s413 = sphi 0, %s412
      %s427 = sphi 0, %s413
      %s431 = sphi 0, %s431
      %s433 = sphi 0, %s431
      %s434 = sphi 0, %s433
      %s448 = sphi 0, %s434
      %s452 = sphi 0, %s452
      %s454 = sphi 0, %s452
      %s455 = sphi 0, %s454
      %s469 = sphi 0, %s455
      %s473 = sphi 0, %s473
      %s475 = sphi 0, %s473
      %s476 = sphi 0, %s475
      %s490 = sphi 0, %s476
      %s494 = sphi 0, %s494
      %s496 = sphi 0, %s494
      %s497 = sphi 0, %s496
      %s511 = sphi 0, %s497
      %s515 = sphi 0, %s515
      %s517 = sphi 0, %s515
      %s518 = sphi 0, %s517
      %s532 = sphi 0, %s518
      %s536 = sphi 0, %s536
      %s538 = sphi 0, %s536
      %s539 = sphi 0, %s538
      %s553 = sphi 0, %s539
      %s557 = sphi 0, %s557
      %s559 = sphi 0, %s557
      %s560 = sphi 0, %s559
      %s574 = sphi 0, %s560
      %s578 = sphi 0, %s578
      %s580 = sphi 0, %s578
      %s581 = sphi 0, %s580
      %s595 = sphi 0, %s581
      %s599 = sphi 0, %s599
      %s601 = sphi 0, %s599
      %s602 = sphi 0, %s601
      %s616 = sphi 0, %s602
      %s620 = sphi 0, %s620
      %s622 = sphi 0, %s620
      %s623 = sphi 0, %s622
      %s637 = sphi 0, %s623
      %s641 = sphi 0, %s641
      %s643 = sphi 0, %s641
      %s644 = sphi 0, %s643
      %s658 = sphi 0, %s644
      %s662 = sphi 0, %s662
      %s664 = sphi 0, %s662
      %s665 = sphi 0, %s664
      %s679 = sphi 0, %s665
      %s683 = sphi 0, %s683
      %s685 = sphi 0, %s683
      %s686 = sphi 0, %s685
      %s700 = sphi 0, %s686
      %s704 = sphi 0, %s704
      %s706 = sphi 0, %s704
      %s707 = sphi 0, %s706
      %s721 = sphi 0, %s707
      %s725 = sphi 0, %s725
      %s727 = sphi 0, %s725
      %s728 = sphi 0, %s727
      %s742 = sphi 0, %s728
      %s748 = sphi 0, %s750
      %s751 = sphi 0, %s748
      %s752 = sphi 0, %s751
      %s768 = sphi 0, %s752
      %s774 = sphi 0, %s776
      %s777 = sphi 0, %s774
      %s778 = sphi 0, %s777
      %s794 = sphi 0, %s778
    $region4: #{tpu_custom_call.1} parent=1 // loop_header_branch
      %91 = sbr.rel (%p89) target = $region8
    $region5: #{tpu_custom_call.1} parent=1 // loop_body
      %s93 = ssub.s32 %s88, 1
      %s94 = ssub.s32 %s88, 2
      %s95 = sadd.s32 %s88, 1
      %s96 = ssub.s32 %s88, %s95
      %p97 = scmp.eq.s32.totalorder %s96, 0
      %s99 = sadd.s32 %s98, 1
      %s100 = scalar_select %p97, %s98, %s99
      %p103 = pneg %p97
      %p104 = scmp.eq.s32.totalorder %s88, 1
      %p105 = por %p103, %p104
      %p106 = scmp.ne.s32.totalorder %s98, %s101
      %p107 = scmp.eq.s32.totalorder %s88, 0
      %p108 = por %p106, %p107
      %p109 = scmp.ne.s32.totalorder %s98, %s101
      %p110 = scmp.eq.s32.totalorder %s93, 1
      %p111 = por %p109, %p110
      %p112 = scmp.ne.s32.totalorder %s101, %s102
      %p113 = scmp.eq.s32.totalorder %s93, 0
      %p114 = por %p112, %p113
      %p115 = scmp.ne.s32.totalorder %s101, %s102
      %p116 = scmp.eq.s32.totalorder %s94, 1
      %p117 = por %p115, %p116
      %p119 = scmp.ne.s32.totalorder %s102, %s118
      %p120 = scmp.eq.s32.totalorder %s94, 0
      %p121 = por %p119, %p120
      %s122 = ssub.s32 %s88, %s95
      %p123 = scmp.eq.s32.totalorder %s122, 0
      %s125 = sadd.s32 %s124, 1
      %s126 = scalar_select %p123, %s124, %s125
      %p129 = pneg %p123
      %p130 = scmp.eq.s32.totalorder %s88, 1
      %p131 = por %p129, %p130
      %p132 = scmp.ne.s32.totalorder %s124, %s127
      %p133 = scmp.eq.s32.totalorder %s88, 0
      %p134 = por %p132, %p133
      %p135 = scmp.ne.s32.totalorder %s124, %s127
      %p136 = scmp.eq.s32.totalorder %s93, 1
      %p137 = por %p135, %p136
      %p138 = scmp.ne.s32.totalorder %s127, %s128
      %p139 = scmp.eq.s32.totalorder %s93, 0
      %p140 = por %p138, %p139
      %p141 = scmp.ne.s32.totalorder %s127, %s128
      %p142 = scmp.eq.s32.totalorder %s94, 1
      %p143 = por %p141, %p142
      %p145 = scmp.ne.s32.totalorder %s128, %s144
      %p146 = scmp.eq.s32.totalorder %s94, 0
      %p147 = por %p145, %p146
      %s148 = ssub.s32 %s88, %s95
      %p149 = scmp.eq.s32.totalorder %s148, 0
      %s151 = sadd.s32 %s150, 1
      %s152 = scalar_select %p149, %s150, %s151
      %p155 = pneg %p149
      %p156 = scmp.eq.s32.totalorder %s88, 1
      %p157 = por %p155, %p156
      %p158 = scmp.ne.s32.totalorder %s150, %s153
      %p159 = scmp.eq.s32.totalorder %s88, 0
      %p160 = por %p158, %p159
      %p161 = scmp.ne.s32.totalorder %s150, %s153
      %p162 = scmp.eq.s32.totalorder %s93, 1
      %p163 = por %p161, %p162
      %p164 = scmp.ne.s32.totalorder %s153, %s154
      %p165 = scmp.eq.s32.totalorder %s93, 0
      %p166 = por %p164, %p165
      %p167 = scmp.ne.s32.totalorder %s153, %s154
      %p168 = scmp.eq.s32.totalorder %s94, 1
      %p169 = por %p167, %p168
      %p171 = scmp.ne.s32.totalorder %s154, %s170
      %p172 = scmp.eq.s32.totalorder %s94, 0
      %p173 = por %p171, %p172
      %s174 = ssub.s32 %s88, %s95
      %p175 = scmp.eq.s32.totalorder %s174, 0
      %s177 = sadd.s32 %s176, 1
      %s178 = scalar_select %p175, %s176, %s177
      %p181 = pneg %p175
      %p182 = scmp.eq.s32.totalorder %s88, 1
      %p183 = por %p181, %p182
      %p184 = scmp.ne.s32.totalorder %s176, %s179
      %p185 = scmp.eq.s32.totalorder %s88, 0
      %p186 = por %p184, %p185
      %p187 = scmp.ne.s32.totalorder %s176, %s179
      %p188 = scmp.eq.s32.totalorder %s93, 1
      %p189 = por %p187, %p188
      %p190 = scmp.ne.s32.totalorder %s179, %s180
      %p191 = scmp.eq.s32.totalorder %s93, 0
      %p192 = por %p190, %p191
      %p193 = scmp.ne.s32.totalorder %s179, %s180
      %p194 = scmp.eq.s32.totalorder %s94, 1
      %p195 = por %p193, %p194
      %p197 = scmp.ne.s32.totalorder %s180, %s196
      %p198 = scmp.eq.s32.totalorder %s94, 0
      %p199 = por %p197, %p198
      %s201 = sadd.s32 %s200, 1
      %p204 = scmp.eq.s32.totalorder %s88, 1
      %p205 = scmp.ne.s32.totalorder %s200, %s202
      %p206 = scmp.eq.s32.totalorder %s88, 0
      %p207 = por %p205, %p206
      %p208 = scmp.ne.s32.totalorder %s200, %s202
      %p209 = scmp.eq.s32.totalorder %s93, 1
      %p210 = por %p208, %p209
      %p211 = scmp.ne.s32.totalorder %s202, %s203
      %p212 = scmp.eq.s32.totalorder %s93, 0
      %p213 = por %p211, %p212
      %p214 = scmp.ne.s32.totalorder %s202, %s203
      %p215 = scmp.eq.s32.totalorder %s94, 1
      %p216 = por %p214, %p215
      %p218 = scmp.ne.s32.totalorder %s203, %s217
      %p219 = scmp.eq.s32.totalorder %s94, 0
      %p220 = por %p218, %p219
      %s222 = sadd.s32 %s221, 1
      %p225 = scmp.eq.s32.totalorder %s88, 1
      %p226 = scmp.ne.s32.totalorder %s221, %s223
      %p227 = scmp.eq.s32.totalorder %s88, 0
      %p228 = por %p226, %p227
      %p229 = scmp.ne.s32.totalorder %s221, %s223
      %p230 = scmp.eq.s32.totalorder %s93, 1
      %p231 = por %p229, %p230
      %p232 = scmp.ne.s32.totalorder %s223, %s224
      %p233 = scmp.eq.s32.totalorder %s93, 0
      %p234 = por %p232, %p233
      %p235 = scmp.ne.s32.totalorder %s223, %s224
      %p236 = scmp.eq.s32.totalorder %s94, 1
      %p237 = por %p235, %p236
      %p239 = scmp.ne.s32.totalorder %s224, %s238
      %p240 = scmp.eq.s32.totalorder %s94, 0
      %p241 = por %p239, %p240
      %s243 = sadd.s32 %s242, 1
      %p246 = scmp.eq.s32.totalorder %s88, 1
      %p247 = scmp.ne.s32.totalorder %s242, %s244
      %p248 = scmp.eq.s32.totalorder %s88, 0
      %p249 = por %p247, %p248
      %p250 = scmp.ne.s32.totalorder %s242, %s244
      %p251 = scmp.eq.s32.totalorder %s93, 1
      %p252 = por %p250, %p251
      %p253 = scmp.ne.s32.totalorder %s244, %s245
      %p254 = scmp.eq.s32.totalorder %s93, 0
      %p255 = por %p253, %p254
      %p256 = scmp.ne.s32.totalorder %s244, %s245
      %p257 = scmp.eq.s32.totalorder %s94, 1
      %p258 = por %p256, %p257
      %p260 = scmp.ne.s32.totalorder %s245, %s259
      %p261 = scmp.eq.s32.totalorder %s94, 0
      %p262 = por %p260, %p261
      %s264 = sadd.s32 %s263, 1
      %p267 = scmp.eq.s32.totalorder %s88, 1
      %p268 = scmp.ne.s32.totalorder %s263, %s265
      %p269 = scmp.eq.s32.totalorder %s88, 0
      %p270 = por %p268, %p269
      %p271 = scmp.ne.s32.totalorder %s263, %s265
      %p272 = scmp.eq.s32.totalorder %s93, 1
      %p273 = por %p271, %p272
      %p274 = scmp.ne.s32.totalorder %s265, %s266
      %p275 = scmp.eq.s32.totalorder %s93, 0
      %p276 = por %p274, %p275
      %p277 = scmp.ne.s32.totalorder %s265, %s266
      %p278 = scmp.eq.s32.totalorder %s94, 1
      %p279 = por %p277, %p278
      %p281 = scmp.ne.s32.totalorder %s266, %s280
      %p282 = scmp.eq.s32.totalorder %s94, 0
      %p283 = por %p281, %p282
      %s285 = sadd.s32 %s284, 1
      %p288 = scmp.eq.s32.totalorder %s88, 1
      %p289 = scmp.ne.s32.totalorder %s284, %s286
      %p290 = scmp.eq.s32.totalorder %s88, 0
      %p291 = por %p289, %p290
      %p292 = scmp.ne.s32.totalorder %s284, %s286
      %p293 = scmp.eq.s32.totalorder %s93, 1
      %p294 = por %p292, %p293
      %p295 = scmp.ne.s32.totalorder %s286, %s287
      %p296 = scmp.eq.s32.totalorder %s93, 0
      %p297 = por %p295, %p296
      %p298 = scmp.ne.s32.totalorder %s286, %s287
      %p299 = scmp.eq.s32.totalorder %s94, 1
      %p300 = por %p298, %p299
      %p302 = scmp.ne.s32.totalorder %s287, %s301
      %p303 = scmp.eq.s32.totalorder %s94, 0
      %p304 = por %p302, %p303
      %s306 = sadd.s32 %s305, 1
      %p309 = scmp.eq.s32.totalorder %s88, 1
      %p310 = scmp.ne.s32.totalorder %s305, %s307
      %p311 = scmp.eq.s32.totalorder %s88, 0
      %p312 = por %p310, %p311
      %p313 = scmp.ne.s32.totalorder %s305, %s307
      %p314 = scmp.eq.s32.totalorder %s93, 1
      %p315 = por %p313, %p314
      %p316 = scmp.ne.s32.totalorder %s307, %s308
      %p317 = scmp.eq.s32.totalorder %s93, 0
      %p318 = por %p316, %p317
      %p319 = scmp.ne.s32.totalorder %s307, %s308
      %p320 = scmp.eq.s32.totalorder %s94, 1
      %p321 = por %p319, %p320
      %p323 = scmp.ne.s32.totalorder %s308, %s322
      %p324 = scmp.eq.s32.totalorder %s94, 0
      %p325 = por %p323, %p324
      %s327 = sadd.s32 %s326, 1
      %p330 = scmp.eq.s32.totalorder %s88, 1
      %p331 = scmp.ne.s32.totalorder %s326, %s328
      %p332 = scmp.eq.s32.totalorder %s88, 0
      %p333 = por %p331, %p332
      %p334 = scmp.ne.s32.totalorder %s326, %s328
      %p335 = scmp.eq.s32.totalorder %s93, 1
      %p336 = por %p334, %p335
      %p337 = scmp.ne.s32.totalorder %s328, %s329
      %p338 = scmp.eq.s32.totalorder %s93, 0
      %p339 = por %p337, %p338
      %p340 = scmp.ne.s32.totalorder %s328, %s329
      %p341 = scmp.eq.s32.totalorder %s94, 1
      %p342 = por %p340, %p341
      %p344 = scmp.ne.s32.totalorder %s329, %s343
      %p345 = scmp.eq.s32.totalorder %s94, 0
      %p346 = por %p344, %p345
      %s348 = sadd.s32 %s347, 1
      %p351 = scmp.eq.s32.totalorder %s88, 1
      %p352 = scmp.ne.s32.totalorder %s347, %s349
      %p353 = scmp.eq.s32.totalorder %s88, 0
      %p354 = por %p352, %p353
      %p355 = scmp.ne.s32.totalorder %s347, %s349
      %p356 = scmp.eq.s32.totalorder %s93, 1
      %p357 = por %p355, %p356
      %p358 = scmp.ne.s32.totalorder %s349, %s350
      %p359 = scmp.eq.s32.totalorder %s93, 0
      %p360 = por %p358, %p359
      %p361 = scmp.ne.s32.totalorder %s349, %s350
      %p362 = scmp.eq.s32.totalorder %s94, 1
      %p363 = por %p361, %p362
      %p365 = scmp.ne.s32.totalorder %s350, %s364
      %p366 = scmp.eq.s32.totalorder %s94, 0
      %p367 = por %p365, %p366
      %s369 = sadd.s32 %s368, 1
      %p372 = scmp.eq.s32.totalorder %s88, 1
      %p373 = scmp.ne.s32.totalorder %s368, %s370
      %p374 = scmp.eq.s32.totalorder %s88, 0
      %p375 = por %p373, %p374
      %p376 = scmp.ne.s32.totalorder %s368, %s370
      %p377 = scmp.eq.s32.totalorder %s93, 1
      %p378 = por %p376, %p377
      %p379 = scmp.ne.s32.totalorder %s370, %s371
      %p380 = scmp.eq.s32.totalorder %s93, 0
      %p381 = por %p379, %p380
      %p382 = scmp.ne.s32.totalorder %s370, %s371
      %p383 = scmp.eq.s32.totalorder %s94, 1
      %p384 = por %p382, %p383
      %p386 = scmp.ne.s32.totalorder %s371, %s385
      %p387 = scmp.eq.s32.totalorder %s94, 0
      %p388 = por %p386, %p387
      %s390 = sadd.s32 %s389, 1
      %p393 = scmp.eq.s32.totalorder %s88, 1
      %p394 = scmp.ne.s32.totalorder %s389, %s391
      %p395 = scmp.eq.s32.totalorder %s88, 0
      %p396 = por %p394, %p395
      %p397 = scmp.ne.s32.totalorder %s389, %s391
      %p398 = scmp.eq.s32.totalorder %s93, 1
      %p399 = por %p397, %p398
      %p400 = scmp.ne.s32.totalorder %s391, %s392
      %p401 = scmp.eq.s32.totalorder %s93, 0
      %p402 = por %p400, %p401
      %p403 = scmp.ne.s32.totalorder %s391, %s392
      %p404 = scmp.eq.s32.totalorder %s94, 1
      %p405 = por %p403, %p404
      %p407 = scmp.ne.s32.totalorder %s392, %s406
      %p408 = scmp.eq.s32.totalorder %s94, 0
      %p409 = por %p407, %p408
      %s411 = sadd.s32 %s410, 1
      %p414 = scmp.eq.s32.totalorder %s88, 1
      %p415 = scmp.ne.s32.totalorder %s410, %s412
      %p416 = scmp.eq.s32.totalorder %s88, 0
      %p417 = por %p415, %p416
      %p418 = scmp.ne.s32.totalorder %s410, %s412
      %p419 = scmp.eq.s32.totalorder %s93, 1
      %p420 = por %p418, %p419
      %p421 = scmp.ne.s32.totalorder %s412, %s413
      %p422 = scmp.eq.s32.totalorder %s93, 0
      %p423 = por %p421, %p422
      %p424 = scmp.ne.s32.totalorder %s412, %s413
      %p425 = scmp.eq.s32.totalorder %s94, 1
      %p426 = por %p424, %p425
      %p428 = scmp.ne.s32.totalorder %s413, %s427
      %p429 = scmp.eq.s32.totalorder %s94, 0
      %p430 = por %p428, %p429
      %s432 = sadd.s32 %s431, 1
      %p435 = scmp.eq.s32.totalorder %s88, 1
      %p436 = scmp.ne.s32.totalorder %s431, %s433
      %p437 = scmp.eq.s32.totalorder %s88, 0
      %p438 = por %p436, %p437
      %p439 = scmp.ne.s32.totalorder %s431, %s433
      %p440 = scmp.eq.s32.totalorder %s93, 1
      %p441 = por %p439, %p440
      %p442 = scmp.ne.s32.totalorder %s433, %s434
      %p443 = scmp.eq.s32.totalorder %s93, 0
      %p444 = por %p442, %p443
      %p445 = scmp.ne.s32.totalorder %s433, %s434
      %p446 = scmp.eq.s32.totalorder %s94, 1
      %p447 = por %p445, %p446
      %p449 = scmp.ne.s32.totalorder %s434, %s448
      %p450 = scmp.eq.s32.totalorder %s94, 0
      %p451 = por %p449, %p450
      %s453 = sadd.s32 %s452, 1
      %p456 = scmp.eq.s32.totalorder %s88, 1
      %p457 = scmp.ne.s32.totalorder %s452, %s454
      %p458 = scmp.eq.s32.totalorder %s88, 0
      %p459 = por %p457, %p458
      %p460 = scmp.ne.s32.totalorder %s452, %s454
      %p461 = scmp.eq.s32.totalorder %s93, 1
      %p462 = por %p460, %p461
      %p463 = scmp.ne.s32.totalorder %s454, %s455
      %p464 = scmp.eq.s32.totalorder %s93, 0
      %p465 = por %p463, %p464
      %p466 = scmp.ne.s32.totalorder %s454, %s455
      %p467 = scmp.eq.s32.totalorder %s94, 1
      %p468 = por %p466, %p467
      %p470 = scmp.ne.s32.totalorder %s455, %s469
      %p471 = scmp.eq.s32.totalorder %s94, 0
      %p472 = por %p470, %p471
      %s474 = sadd.s32 %s473, 1
      %p477 = scmp.eq.s32.totalorder %s88, 1
      %p478 = scmp.ne.s32.totalorder %s473, %s475
      %p479 = scmp.eq.s32.totalorder %s88, 0
      %p480 = por %p478, %p479
      %p481 = scmp.ne.s32.totalorder %s473, %s475
      %p482 = scmp.eq.s32.totalorder %s93, 1
      %p483 = por %p481, %p482
      %p484 = scmp.ne.s32.totalorder %s475, %s476
      %p485 = scmp.eq.s32.totalorder %s93, 0
      %p486 = por %p484, %p485
      %p487 = scmp.ne.s32.totalorder %s475, %s476
      %p488 = scmp.eq.s32.totalorder %s94, 1
      %p489 = por %p487, %p488
      %p491 = scmp.ne.s32.totalorder %s476, %s490
      %p492 = scmp.eq.s32.totalorder %s94, 0
      %p493 = por %p491, %p492
      %s495 = sadd.s32 %s494, 1
      %p498 = scmp.eq.s32.totalorder %s88, 1
      %p499 = scmp.ne.s32.totalorder %s494, %s496
      %p500 = scmp.eq.s32.totalorder %s88, 0
      %p501 = por %p499, %p500
      %p502 = scmp.ne.s32.totalorder %s494, %s496
      %p503 = scmp.eq.s32.totalorder %s93, 1
      %p504 = por %p502, %p503
      %p505 = scmp.ne.s32.totalorder %s496, %s497
      %p506 = scmp.eq.s32.totalorder %s93, 0
      %p507 = por %p505, %p506
      %p508 = scmp.ne.s32.totalorder %s496, %s497
      %p509 = scmp.eq.s32.totalorder %s94, 1
      %p510 = por %p508, %p509
      %p512 = scmp.ne.s32.totalorder %s497, %s511
      %p513 = scmp.eq.s32.totalorder %s94, 0
      %p514 = por %p512, %p513
      %s516 = sadd.s32 %s515, 1
      %p519 = scmp.eq.s32.totalorder %s88, 1
      %p520 = scmp.ne.s32.totalorder %s515, %s517
      %p521 = scmp.eq.s32.totalorder %s88, 0
      %p522 = por %p520, %p521
      %p523 = scmp.ne.s32.totalorder %s515, %s517
      %p524 = scmp.eq.s32.totalorder %s93, 1
      %p525 = por %p523, %p524
      %p526 = scmp.ne.s32.totalorder %s517, %s518
      %p527 = scmp.eq.s32.totalorder %s93, 0
      %p528 = por %p526, %p527
      %p529 = scmp.ne.s32.totalorder %s517, %s518
      %p530 = scmp.eq.s32.totalorder %s94, 1
      %p531 = por %p529, %p530
      %p533 = scmp.ne.s32.totalorder %s518, %s532
      %p534 = scmp.eq.s32.totalorder %s94, 0
      %p535 = por %p533, %p534
      %s537 = sadd.s32 %s536, 1
      %p540 = scmp.eq.s32.totalorder %s88, 1
      %p541 = scmp.ne.s32.totalorder %s536, %s538
      %p542 = scmp.eq.s32.totalorder %s88, 0
      %p543 = por %p541, %p542
      %p544 = scmp.ne.s32.totalorder %s536, %s538
      %p545 = scmp.eq.s32.totalorder %s93, 1
      %p546 = por %p544, %p545
      %p547 = scmp.ne.s32.totalorder %s538, %s539
      %p548 = scmp.eq.s32.totalorder %s93, 0
      %p549 = por %p547, %p548
      %p550 = scmp.ne.s32.totalorder %s538, %s539
      %p551 = scmp.eq.s32.totalorder %s94, 1
      %p552 = por %p550, %p551
      %p554 = scmp.ne.s32.totalorder %s539, %s553
      %p555 = scmp.eq.s32.totalorder %s94, 0
      %p556 = por %p554, %p555
      %s558 = sadd.s32 %s557, 1
      %p561 = scmp.eq.s32.totalorder %s88, 1
      %p562 = scmp.ne.s32.totalorder %s557, %s559
      %p563 = scmp.eq.s32.totalorder %s88, 0
      %p564 = por %p562, %p563
      %p565 = scmp.ne.s32.totalorder %s557, %s559
      %p566 = scmp.eq.s32.totalorder %s93, 1
      %p567 = por %p565, %p566
      %p568 = scmp.ne.s32.totalorder %s559, %s560
      %p569 = scmp.eq.s32.totalorder %s93, 0
      %p570 = por %p568, %p569
      %p571 = scmp.ne.s32.totalorder %s559, %s560
      %p572 = scmp.eq.s32.totalorder %s94, 1
      %p573 = por %p571, %p572
      %p575 = scmp.ne.s32.totalorder %s560, %s574
      %p576 = scmp.eq.s32.totalorder %s94, 0
      %p577 = por %p575, %p576
      %s579 = sadd.s32 %s578, 1
      %p582 = scmp.eq.s32.totalorder %s88, 1
      %p583 = scmp.ne.s32.totalorder %s578, %s580
      %p584 = scmp.eq.s32.totalorder %s88, 0
      %p585 = por %p583, %p584
      %p586 = scmp.ne.s32.totalorder %s578, %s580
      %p587 = scmp.eq.s32.totalorder %s93, 1
      %p588 = por %p586, %p587
      %p589 = scmp.ne.s32.totalorder %s580, %s581
      %p590 = scmp.eq.s32.totalorder %s93, 0
      %p591 = por %p589, %p590
      %p592 = scmp.ne.s32.totalorder %s580, %s581
      %p593 = scmp.eq.s32.totalorder %s94, 1
      %p594 = por %p592, %p593
      %p596 = scmp.ne.s32.totalorder %s581, %s595
      %p597 = scmp.eq.s32.totalorder %s94, 0
      %p598 = por %p596, %p597
      %s600 = sadd.s32 %s599, 1
      %p603 = scmp.eq.s32.totalorder %s88, 1
      %p604 = scmp.ne.s32.totalorder %s599, %s601
      %p605 = scmp.eq.s32.totalorder %s88, 0
      %p606 = por %p604, %p605
      %p607 = scmp.ne.s32.totalorder %s599, %s601
      %p608 = scmp.eq.s32.totalorder %s93, 1
      %p609 = por %p607, %p608
      %p610 = scmp.ne.s32.totalorder %s601, %s602
      %p611 = scmp.eq.s32.totalorder %s93, 0
      %p612 = por %p610, %p611
      %p613 = scmp.ne.s32.totalorder %s601, %s602
      %p614 = scmp.eq.s32.totalorder %s94, 1
      %p615 = por %p613, %p614
      %p617 = scmp.ne.s32.totalorder %s602, %s616
      %p618 = scmp.eq.s32.totalorder %s94, 0
      %p619 = por %p617, %p618
      %s621 = sadd.s32 %s620, 1
      %p624 = scmp.eq.s32.totalorder %s88, 1
      %p625 = scmp.ne.s32.totalorder %s620, %s622
      %p626 = scmp.eq.s32.totalorder %s88, 0
      %p627 = por %p625, %p626
      %p628 = scmp.ne.s32.totalorder %s620, %s622
      %p629 = scmp.eq.s32.totalorder %s93, 1
      %p630 = por %p628, %p629
      %p631 = scmp.ne.s32.totalorder %s622, %s623
      %p632 = scmp.eq.s32.totalorder %s93, 0
      %p633 = por %p631, %p632
      %p634 = scmp.ne.s32.totalorder %s622, %s623
      %p635 = scmp.eq.s32.totalorder %s94, 1
      %p636 = por %p634, %p635
      %p638 = scmp.ne.s32.totalorder %s623, %s637
      %p639 = scmp.eq.s32.totalorder %s94, 0
      %p640 = por %p638, %p639
      %s642 = sadd.s32 %s641, 1
      %p645 = scmp.eq.s32.totalorder %s88, 1
      %p646 = scmp.ne.s32.totalorder %s641, %s643
      %p647 = scmp.eq.s32.totalorder %s88, 0
      %p648 = por %p646, %p647
      %p649 = scmp.ne.s32.totalorder %s641, %s643
      %p650 = scmp.eq.s32.totalorder %s93, 1
      %p651 = por %p649, %p650
      %p652 = scmp.ne.s32.totalorder %s643, %s644
      %p653 = scmp.eq.s32.totalorder %s93, 0
      %p654 = por %p652, %p653
      %p655 = scmp.ne.s32.totalorder %s643, %s644
      %p656 = scmp.eq.s32.totalorder %s94, 1
      %p657 = por %p655, %p656
      %p659 = scmp.ne.s32.totalorder %s644, %s658
      %p660 = scmp.eq.s32.totalorder %s94, 0
      %p661 = por %p659, %p660
      %s663 = sadd.s32 %s662, 1
      %p666 = scmp.eq.s32.totalorder %s88, 1
      %p667 = scmp.ne.s32.totalorder %s662, %s664
      %p668 = scmp.eq.s32.totalorder %s88, 0
      %p669 = por %p667, %p668
      %p670 = scmp.ne.s32.totalorder %s662, %s664
      %p671 = scmp.eq.s32.totalorder %s93, 1
      %p672 = por %p670, %p671
      %p673 = scmp.ne.s32.totalorder %s664, %s665
      %p674 = scmp.eq.s32.totalorder %s93, 0
      %p675 = por %p673, %p674
      %p676 = scmp.ne.s32.totalorder %s664, %s665
      %p677 = scmp.eq.s32.totalorder %s94, 1
      %p678 = por %p676, %p677
      %p680 = scmp.ne.s32.totalorder %s665, %s679
      %p681 = scmp.eq.s32.totalorder %s94, 0
      %p682 = por %p680, %p681
      %s684 = sadd.s32 %s683, 1
      %p687 = scmp.eq.s32.totalorder %s88, 1
      %p688 = scmp.ne.s32.totalorder %s683, %s685
      %p689 = scmp.eq.s32.totalorder %s88, 0
      %p690 = por %p688, %p689
      %p691 = scmp.ne.s32.totalorder %s683, %s685
      %p692 = scmp.eq.s32.totalorder %s93, 1
      %p693 = por %p691, %p692
      %p694 = scmp.ne.s32.totalorder %s685, %s686
      %p695 = scmp.eq.s32.totalorder %s93, 0
      %p696 = por %p694, %p695
      %p697 = scmp.ne.s32.totalorder %s685, %s686
      %p698 = scmp.eq.s32.totalorder %s94, 1
      %p699 = por %p697, %p698
      %p701 = scmp.ne.s32.totalorder %s686, %s700
      %p702 = scmp.eq.s32.totalorder %s94, 0
      %p703 = por %p701, %p702
      %s705 = sadd.s32 %s704, 1
      %p708 = scmp.eq.s32.totalorder %s88, 1
      %p709 = scmp.ne.s32.totalorder %s704, %s706
      %p710 = scmp.eq.s32.totalorder %s88, 0
      %p711 = por %p709, %p710
      %p712 = scmp.ne.s32.totalorder %s704, %s706
      %p713 = scmp.eq.s32.totalorder %s93, 1
      %p714 = por %p712, %p713
      %p715 = scmp.ne.s32.totalorder %s706, %s707
      %p716 = scmp.eq.s32.totalorder %s93, 0
      %p717 = por %p715, %p716
      %p718 = scmp.ne.s32.totalorder %s706, %s707
      %p719 = scmp.eq.s32.totalorder %s94, 1
      %p720 = por %p718, %p719
      %p722 = scmp.ne.s32.totalorder %s707, %s721
      %p723 = scmp.eq.s32.totalorder %s94, 0
      %p724 = por %p722, %p723
      %s726 = sadd.s32 %s725, 1
      %p729 = scmp.eq.s32.totalorder %s88, 1
      %p730 = scmp.ne.s32.totalorder %s725, %s727
      %p731 = scmp.eq.s32.totalorder %s88, 0
      %p732 = por %p730, %p731
      %p733 = scmp.ne.s32.totalorder %s725, %s727
      %p734 = scmp.eq.s32.totalorder %s93, 1
      %p735 = por %p733, %p734
      %p736 = scmp.ne.s32.totalorder %s727, %s728
      %p737 = scmp.eq.s32.totalorder %s93, 0
      %p738 = por %p736, %p737
      %p739 = scmp.ne.s32.totalorder %s727, %s728
      %p740 = scmp.eq.s32.totalorder %s94, 1
      %p741 = por %p739, %p740
      %p743 = scmp.ne.s32.totalorder %s728, %s742
      %p744 = scmp.eq.s32.totalorder %s94, 0
      %p745 = por %p743, %p744
      %s746 = ssub.s32 %s88, %s95
      %p747 = scmp.eq.s32.totalorder %s746, 0
      %s749 = sadd.s32 %s748, 1
      %s750 = scalar_select %p747, %s748, %s749
      %p753 = pneg %p747
      %p754 = scmp.eq.s32.totalorder %s88, 1
      %p755 = por %p753, %p754
      %p756 = scmp.ne.s32.totalorder %s748, %s751
      %p757 = scmp.eq.s32.totalorder %s88, 0
      %p758 = por %p756, %p757
      %p759 = scmp.ne.s32.totalorder %s748, %s751
      %p760 = scmp.eq.s32.totalorder %s93, 1
      %p761 = por %p759, %p760
      %p762 = scmp.ne.s32.totalorder %s751, %s752
      %p763 = scmp.eq.s32.totalorder %s93, 0
      %p764 = por %p762, %p763
      %p765 = scmp.ne.s32.totalorder %s751, %s752
      %p766 = scmp.eq.s32.totalorder %s94, 1
      %p767 = por %p765, %p766
      %p769 = scmp.ne.s32.totalorder %s752, %s768
      %p770 = scmp.eq.s32.totalorder %s94, 0
      %p771 = por %p769, %p770
      %s772 = ssub.s32 %s88, %s95
      %p773 = scmp.eq.s32.totalorder %s772, 0
      %s775 = sadd.s32 %s774, 1
      %s776 = scalar_select %p773, %s774, %s775
      %p779 = pneg %p773
      %p780 = scmp.eq.s32.totalorder %s88, 1
      %p781 = por %p779, %p780
      %p782 = scmp.ne.s32.totalorder %s774, %s777
      %p783 = scmp.eq.s32.totalorder %s88, 0
      %p784 = por %p782, %p783
      %p785 = scmp.ne.s32.totalorder %s774, %s777
      %p786 = scmp.eq.s32.totalorder %s93, 1
      %p787 = por %p785, %p786
      %p788 = scmp.ne.s32.totalorder %s777, %s778
      %p789 = scmp.eq.s32.totalorder %s93, 0
      %p790 = por %p788, %p789
      %p791 = scmp.ne.s32.totalorder %s777, %s778
      %p792 = scmp.eq.s32.totalorder %s94, 1
      %p793 = por %p791, %p792
      %p795 = scmp.ne.s32.totalorder %s778, %s794
      %p796 = scmp.eq.s32.totalorder %s94, 0
      %p797 = por %p795, %p796
      %p798 = scmp.le.s32.totalorder 1, %s88
      %p799 = scmp.lt.s32.totalorder %s88, 3
      %p800 = pnand %p798, %p799
      %p801 = pneg %p800
      // Predicated region
      $region9: #{tpu_custom_call.1} parent=5 // pred_check
        _
      $region10: #{tpu_custom_call.1} parent=5 // pred_check_branch
        %803 = sbr.rel (%p800) target = $region12
      $region11: #{tpu_custom_call.1} parent=5 // pred_region
        %s804 = ssub.s32 %s88, 1
        // Predicated region
        $region13: #{tpu_custom_call.1} parent=11 // pred_check
          %p805 = pneg %p213
        $region14: #{tpu_custom_call.1} parent=11 // pred_check_branch
          %807 = sbr.rel (%p805) target = $region16
        $region15: #{tpu_custom_call.1} parent=11 // pred_region
          %s809 = ssub.s32 256, 256
          %810 = vsyncadd [#allocation6], %s809
          %s811 = sshll.u32 [#allocation7], 4
          %s812 = int_to_ptr.vmem [resolvable:$true] %s811
          %817 = dma.hbm_to_vmem [thread:$0]  %s9, 256, %s812, [#allocation6], 64, 64, 4
        $region16: #{tpu_custom_call.1} parent=11 // pred_fallthru
          _
        // Predicated region
        $region17: #{tpu_custom_call.1} parent=11 // pred_check
          %p818 = pneg %p234
        $region18: #{tpu_custom_call.1} parent=11 // pred_check_branch
          %820 = sbr.rel (%p818) target = $region20
        $region19: #{tpu_custom_call.1} parent=11 // pred_region
          %s822 = ssub.s32 16, 16
          %823 = vsyncadd [#allocation9], %s822
          %s825 = sshll.u32 [#allocation8], 4
          %s826 = int_to_ptr.vmem [resolvable:$true] %s825
          %828 = dma.hbm_to_vmem [thread:$0]  %s11, 16, %s826, [#allocation9]
        $region20: #{tpu_custom_call.1} parent=11 // pred_fallthru
          _
        // Predicated region
        $region21: #{tpu_custom_call.1} parent=11 // pred_check
          %p829 = pneg %p255
        $region22: #{tpu_custom_call.1} parent=11 // pred_check_branch
          %831 = sbr.rel (%p829) target = $region24
        $region23: #{tpu_custom_call.1} parent=11 // pred_region
          %s833 = ssub.s32 256, 256
          %834 = vsyncadd [#allocation9], %s833
          %s835 = sshll.u32 [#allocation10], 4
          %s836 = int_to_ptr.vmem [resolvable:$true] %s835
          %841 = dma.hbm_to_vmem [thread:$0]  %s13, 256, %s836, [#allocation9], 64, 64, 4
        $region24: #{tpu_custom_call.1} parent=11 // pred_fallthru
          _
        // Predicated region
        $region25: #{tpu_custom_call.1} parent=11 // pred_check
          %p842 = pneg %p276
        $region26: #{tpu_custom_call.1} parent=11 // pred_check_branch
          %844 = sbr.rel (%p842) target = $region28
        $region27: #{tpu_custom_call.1} parent=11 // pred_region
          %s846 = ssub.s32 16, 16
          %847 = vsyncadd [#allocation12], %s846
          %s849 = sshll.u32 [#allocation11], 4
          %s850 = int_to_ptr.vmem [resolvable:$true] %s849
          %852 = dma.hbm_to_vmem [thread:$0]  %s15, 16, %s850, [#allocation12]
        $region28: #{tpu_custom_call.1} parent=11 // pred_fallthru
          _
        // Predicated region
        $region29: #{tpu_custom_call.1} parent=11 // pred_check
          %p853 = pneg %p297
        $region30: #{tpu_custom_call.1} parent=11 // pred_check_branch
          %855 = sbr.rel (%p853) target = $region32
        $region31: #{tpu_custom_call.1} parent=11 // pred_region
          %s857 = ssub.s32 256, 256
          %858 = vsyncadd [#allocation12], %s857
          %s859 = sshll.u32 [#allocation13], 4
          %s860 = int_to_ptr.vmem [resolvable:$true] %s859
          %865 = dma.hbm_to_vmem [thread:$0]  %s17, 256, %s860, [#allocation12], 64, 64, 4
        $region32: #{tpu_custom_call.1} parent=11 // pred_fallthru
          _
        // Predicated region
        $region33: #{tpu_custom_call.1} parent=11 // pred_check
          %p866 = pneg %p318
        $region34: #{tpu_custom_call.1} parent=11 // pred_check_branch
          %868 = sbr.rel (%p866) target = $region36
        $region35: #{tpu_custom_call.1} parent=11 // pred_region
          %s870 = ssub.s32 16, 16
          %871 = vsyncadd [#allocation15], %s870
          %s873 = sshll.u32 [#allocation14], 4
          %s874 = int_to_ptr.vmem [resolvable:$true] %s873
          %876 = dma.hbm_to_vmem [thread:$0]  %s19, 16, %s874, [#allocation15]
        $region36: #{tpu_custom_call.1} parent=11 // pred_fallthru
          _
        // Predicated region
        $region37: #{tpu_custom_call.1} parent=11 // pred_check
          %p877 = pneg %p339
        $region38: #{tpu_custom_call.1} parent=11 // pred_check_branch
          %879 = sbr.rel (%p877) target = $region40
        $region39: #{tpu_custom_call.1} parent=11 // pred_region
          _
        $region40: #{tpu_custom_call.1} parent=11 // pred_fallthru
          _
        // Predicated region
        $region41: #{tpu_custom_call.1} parent=11 // pred_check
          %p880 = pneg %p360
        $region42: #{tpu_custom_call.1} parent=11 // pred_check_branch
          %882 = sbr.rel (%p880) target = $region44
        $region43: #{tpu_custom_call.1} parent=11 // pred_region
          %s884 = ssub.s32 16, 16
          %885 = vsyncadd [#allocation15], %s884
          %s887 = sshll.u32 [#allocation16], 4
          %s888 = int_to_ptr.vmem [resolvable:$true] %s887
          %890 = dma.hbm_to_vmem [thread:$0]  %s23, 16, %s888, [#allocation15]
        $region44: #{tpu_custom_call.1} parent=11 // pred_fallthru
          _
        // Predicated region
        $region45: #{tpu_custom_call.1} parent=11 // pred_check
          %p891 = pneg %p381
        $region46: #{tpu_custom_call.1} parent=11 // pred_check_branch
          %893 = sbr.rel (%p891) target = $region48
        $region47: #{tpu_custom_call.1} parent=11 // pred_region
          %s895 = ssub.s32 16, 16
          %896 = vsyncadd [#allocation18], %s895
          %s898 = sshll.u32 [#allocation17], 4
          %s899 = int_to_ptr.vmem [resolvable:$true] %s898
          %901 = dma.hbm_to_vmem [thread:$0]  %s25, 16, %s899, [#allocation18]
        $region48: #{tpu_custom_call.1} parent=11 // pred_fallthru
          _
        // Predicated region
        $region49: #{tpu_custom_call.1} parent=11 // pred_check
          %p902 = pneg %p402
        $region50: #{tpu_custom_call.1} parent=11 // pred_check_branch
          %904 = sbr.rel (%p902) target = $region52
        $region51: #{tpu_custom_call.1} parent=11 // pred_region
          %s906 = ssub.s32 16, 16
          %907 = vsyncadd [#allocation18], %s906
          %s909 = sshll.u32 [#allocation19], 4
          %s910 = int_to_ptr.vmem [resolvable:$true] %s909
          %912 = dma.hbm_to_vmem [thread:$0]  %s27, 16, %s910, [#allocation18]
        $region52: #{tpu_custom_call.1} parent=11 // pred_fallthru
          _
        // Predicated region
        $region53: #{tpu_custom_call.1} parent=11 // pred_check
          %p913 = pneg %p423
        $region54: #{tpu_custom_call.1} parent=11 // pred_check_branch
          %915 = sbr.rel (%p913) target = $region56
        $region55: #{tpu_custom_call.1} parent=11 // pred_region
          _
        $region56: #{tpu_custom_call.1} parent=11 // pred_fallthru
          _
        // Predicated region
        $region57: #{tpu_custom_call.1} parent=11 // pred_check
          %p916 = pneg %p444
        $region58: #{tpu_custom_call.1} parent=11 // pred_check_branch
          %918 = sbr.rel (%p916) target = $region60
        $region59: #{tpu_custom_call.1} parent=11 // pred_region
          %s920 = ssub.s32 16, 16
          %921 = vsyncadd [#allocation21], %s920
          %s923 = sshll.u32 [#allocation20], 4
          %s924 = int_to_ptr.vmem [resolvable:$true] %s923
          %926 = dma.hbm_to_vmem [thread:$0]  %s31, 16, %s924, [#allocation21]
        $region60: #{tpu_custom_call.1} parent=11 // pred_fallthru
          _
        // Predicated region
        $region61: #{tpu_custom_call.1} parent=11 // pred_check
          %p927 = pneg %p465
        $region62: #{tpu_custom_call.1} parent=11 // pred_check_branch
          %929 = sbr.rel (%p927) target = $region64
        $region63: #{tpu_custom_call.1} parent=11 // pred_region
          %s931 = ssub.s32 256, 256
          %932 = vsyncadd [#allocation21], %s931
          %s933 = sshll.u32 [#allocation22], 4
          %s934 = int_to_ptr.vmem [resolvable:$true] %s933
          %939 = dma.hbm_to_vmem [thread:$0]  %s33, 256, %s934, [#allocation21], 64, 64, 4
        $region64: #{tpu_custom_call.1} parent=11 // pred_fallthru
          _
        // Predicated region
        $region65: #{tpu_custom_call.1} parent=11 // pred_check
          %p940 = pneg %p486
        $region66: #{tpu_custom_call.1} parent=11 // pred_check_branch
          %942 = sbr.rel (%p940) target = $region68
        $region67: #{tpu_custom_call.1} parent=11 // pred_region
          %s944 = ssub.s32 16, 16
          %945 = vsyncadd [#allocation24], %s944
          %s947 = sshll.u32 [#allocation23], 4
          %s948 = int_to_ptr.vmem [resolvable:$true] %s947
          %950 = dma.hbm_to_vmem [thread:$0]  %s35, 16, %s948, [#allocation24]
        $region68: #{tpu_custom_call.1} parent=11 // pred_fallthru
          _
        // Predicated region
        $region69: #{tpu_custom_call.1} parent=11 // pred_check
          %p951 = pneg %p507
        $region70: #{tpu_custom_call.1} parent=11 // pred_check_branch
          %953 = sbr.rel (%p951) target = $region72
        $region71: #{tpu_custom_call.1} parent=11 // pred_region
          _
        $region72: #{tpu_custom_call.1} parent=11 // pred_fallthru
          _
        // Predicated region
        $region73: #{tpu_custom_call.1} parent=11 // pred_check
          %p954 = pneg %p528
        $region74: #{tpu_custom_call.1} parent=11 // pred_check_branch
          %956 = sbr.rel (%p954) target = $region76
        $region75: #{tpu_custom_call.1} parent=11 // pred_region
          _
        $region76: #{tpu_custom_call.1} parent=11 // pred_fallthru
          _
        // Predicated region
        $region77: #{tpu_custom_call.1} parent=11 // pred_check
          %p957 = pneg %p549
        $region78: #{tpu_custom_call.1} parent=11 // pred_check_branch
          %959 = sbr.rel (%p957) target = $region80
        $region79: #{tpu_custom_call.1} parent=11 // pred_region
          %s961 = ssub.s32 256, 256
          %962 = vsyncadd [#allocation24], %s961
          %s963 = sshll.u32 [#allocation25], 4
          %s964 = int_to_ptr.vmem [resolvable:$true] %s963
          %969 = dma.hbm_to_vmem [thread:$0]  %s41, 256, %s964, [#allocation24], 64, 64, 4
        $region80: #{tpu_custom_call.1} parent=11 // pred_fallthru
          _
        // Predicated region
        $region81: #{tpu_custom_call.1} parent=11 // pred_check
          %p970 = pneg %p570
        $region82: #{tpu_custom_call.1} parent=11 // pred_check_branch
          %972 = sbr.rel (%p970) target = $region84
        $region83: #{tpu_custom_call.1} parent=11 // pred_region
          _
        $region84: #{tpu_custom_call.1} parent=11 // pred_fallthru
          _
        // Predicated region
        $region85: #{tpu_custom_call.1} parent=11 // pred_check
          %p973 = pneg %p591
        $region86: #{tpu_custom_call.1} parent=11 // pred_check_branch
          %975 = sbr.rel (%p973) target = $region88
        $region87: #{tpu_custom_call.1} parent=11 // pred_region
          _
        $region88: #{tpu_custom_call.1} parent=11 // pred_fallthru
          _
        // Predicated region
        $region89: #{tpu_custom_call.1} parent=11 // pred_check
          %p976 = pneg %p612
        $region90: #{tpu_custom_call.1} parent=11 // pred_check_branch
          %978 = sbr.rel (%p976) target = $region92
        $region91: #{tpu_custom_call.1} parent=11 // pred_region
          _
        $region92: #{tpu_custom_call.1} parent=11 // pred_fallthru
          _
        // Predicated region
        $region93: #{tpu_custom_call.1} parent=11 // pred_check
          %p979 = pneg %p633
        $region94: #{tpu_custom_call.1} parent=11 // pred_check_branch
          %981 = sbr.rel (%p979) target = $region96
        $region95: #{tpu_custom_call.1} parent=11 // pred_region
          _
        $region96: #{tpu_custom_call.1} parent=11 // pred_fallthru
          _
        // Predicated region
        $region97: #{tpu_custom_call.1} parent=11 // pred_check
          %p982 = pneg %p654
        $region98: #{tpu_custom_call.1} parent=11 // pred_check_branch
          %984 = sbr.rel (%p982) target = $region100
        $region99: #{tpu_custom_call.1} parent=11 // pred_region
          _
        $region100: #{tpu_custom_call.1} parent=11 // pred_fallthru
          _
        // Predicated region
        $region101: #{tpu_custom_call.1} parent=11 // pred_check
          %p985 = pneg %p675
        $region102: #{tpu_custom_call.1} parent=11 // pred_check_branch
          %987 = sbr.rel (%p985) target = $region104
        $region103: #{tpu_custom_call.1} parent=11 // pred_region
          _
        $region104: #{tpu_custom_call.1} parent=11 // pred_fallthru
          _
        // Predicated region
        $region105: #{tpu_custom_call.1} parent=11 // pred_check
          %p988 = pneg %p696
        $region106: #{tpu_custom_call.1} parent=11 // pred_check_branch
          %990 = sbr.rel (%p988) target = $region108
        $region107: #{tpu_custom_call.1} parent=11 // pred_region
          _
        $region108: #{tpu_custom_call.1} parent=11 // pred_fallthru
          _
        // Predicated region
        $region109: #{tpu_custom_call.1} parent=11 // pred_check
          %p991 = pneg %p717
        $region110: #{tpu_custom_call.1} parent=11 // pred_check_branch
          %993 = sbr.rel (%p991) target = $region112
        $region111: #{tpu_custom_call.1} parent=11 // pred_region
          _
        $region112: #{tpu_custom_call.1} parent=11 // pred_fallthru
          _
        // Predicated region
        $region113: #{tpu_custom_call.1} parent=11 // pred_check
          %p994 = pneg %p738
        $region114: #{tpu_custom_call.1} parent=11 // pred_check_branch
          %996 = sbr.rel (%p994) target = $region116
        $region115: #{tpu_custom_call.1} parent=11 // pred_region
          _
        $region116: #{tpu_custom_call.1} parent=11 // pred_fallthru
          _
      $region12: #{tpu_custom_call.1} parent=5 // pred_fallthru
        _
      %p997 = scmp.lt.s32.totalorder %s88, 2
      // Predicated region
      $region117: #{tpu_custom_call.1} parent=5 // pred_check
        %p998 = pneg %p997
      $region118: #{tpu_custom_call.1} parent=5 // pred_check_branch
        %1000 = sbr.rel (%p998) target = $region120
      $region119: #{tpu_custom_call.1} parent=5 // pred_region
        // Predicated region
        $region121: #{tpu_custom_call.1} parent=119 // pred_check
          %p1001 = pneg %p108
        $region122: #{tpu_custom_call.1} parent=119 // pred_check_branch
          %1003 = sbr.rel (%p1001) target = $region124
        $region123: #{tpu_custom_call.1} parent=119 // pred_region
          %p1004 = scmp.lt.s32.totalorder %s88, 1
          %s1005 = scalar_select %p1004, %s88, 1
          %s1006 = smul.addr %s1005, 8
          %s1007 = scalar_lea.vmem %s1, %s1006
        $region124: #{tpu_custom_call.1} parent=119 // pred_fallthru
          _
        // Predicated region
        $region125: #{tpu_custom_call.1} parent=119 // pred_check
          %p1008 = pneg %p134
        $region126: #{tpu_custom_call.1} parent=119 // pred_check_branch
          %1010 = sbr.rel (%p1008) target = $region128
        $region127: #{tpu_custom_call.1} parent=119 // pred_region
          %p1011 = scmp.lt.s32.totalorder %s88, 1
          %s1012 = scalar_select %p1011, %s88, 1
          %s1013 = smul.addr %s1012, 2
          %s1014 = smul.addr %s1013, 8
          %s1015 = scalar_lea.vmem %s3, %s1014
        $region128: #{tpu_custom_call.1} parent=119 // pred_fallthru
          _
        // Predicated region
        $region129: #{tpu_custom_call.1} parent=119 // pred_check
          %p1016 = pneg %p160
        $region130: #{tpu_custom_call.1} parent=119 // pred_check_branch
          %1018 = sbr.rel (%p1016) target = $region132
        $region131: #{tpu_custom_call.1} parent=119 // pred_region
          %s1019 = sand.u32 %s150, 1
          %s1020 = scalar_lea.sflag [#allocation3], %s1019
          %s1021 = sand.u32 %s150, 1
          %s1022 = smul.addr %s1021, 8
          %s1023 = scalar_lea.vmem [#allocation2], %s1022
          %s1025 = ssub.s32 128, 128
          %1026 = vsyncadd %s1020, %s1025
          %s1027 = smul.addr %s88, 128
          %s1028 = scalar_lea.hbm %s5, %s1027
          %s1030 = sshll.u32 %s1023, 4
          %s1031 = int_to_ptr.vmem [resolvable:$true] %s1030
          %1033 = dma.hbm_to_vmem [thread:$0]  %s1028, 128, %s1031, %s1020
        $region132: #{tpu_custom_call.1} parent=119 // pred_fallthru
          _
        // Predicated region
        $region133: #{tpu_custom_call.1} parent=119 // pred_check
          %p1034 = pneg %p186
        $region134: #{tpu_custom_call.1} parent=119 // pred_check_branch
          %1036 = sbr.rel (%p1034) target = $region136
        $region135: #{tpu_custom_call.1} parent=119 // pred_region
          %s1037 = sand.u32 %s88, 1
          %s1038 = scalar_lea.sflag [#allocation6], %s1037
          %s1039 = sand.u32 %s176, 1
          %s1040 = scalar_lea.vmem [#allocation5], %s1039
          %s1042 = ssub.s32 16, 16
          %1043 = vsyncadd %s1038, %s1042
          %s1044 = smul.addr %s88, 16
          %s1045 = scalar_lea.hbm %s7, %s1044
          %s1047 = sshll.u32 %s1040, 4
          %s1048 = int_to_ptr.vmem [resolvable:$true] %s1047
          %1050 = dma.hbm_to_vmem [thread:$0]  %s1045, 16, %s1048, %s1038
        $region136: #{tpu_custom_call.1} parent=119 // pred_fallthru
          _
      $region120: #{tpu_custom_call.1} parent=5 // pred_fallthru
        _
      %p1051 = scmp.le.s32.totalorder 1, %s88
      %p1052 = scmp.lt.s32.totalorder %s88, 3
      %p1053 = pnand %p1051, %p1052
      %p1054 = pneg %p1053
      // Predicated region
      $region137: #{tpu_custom_call.1} parent=5 // pred_check
        _
      $region138: #{tpu_custom_call.1} parent=5 // pred_check_branch
        %1056 = sbr.rel (%p1053) target = $region140
      $region139: #{tpu_custom_call.1} parent=5 // pred_region
        %s1057 = ssub.s32 %s88, 1
        %s1058 = sand.u32 %s153, 1
        %s1059 = scalar_lea.sflag [#allocation3], %s1058
        %s1060 = sand.u32 %s153, 1
        %s1061 = smul.addr %s1060, 8
        %s1062 = scalar_lea.vmem [#allocation2], %s1061
        // Predicated region
        $region141: #{tpu_custom_call.1} parent=139 // pred_check
          %p1063 = pneg %p166
        $region142: #{tpu_custom_call.1} parent=139 // pred_check_branch
          %1065 = sbr.rel (%p1063) target = $region144
        $region143: #{tpu_custom_call.1} parent=139 // pred_region
          %1066 = dma.done %s1059, 128
        $region144: #{tpu_custom_call.1} parent=139 // pred_fallthru
          _
        %s1067 = sand.u32 %s93, 1
        %s1068 = scalar_lea.sflag [#allocation6], %s1067
        %s1069 = sand.u32 %s179, 1
        %s1070 = scalar_lea.vmem [#allocation5], %s1069
        // Predicated region
        $region145: #{tpu_custom_call.1} parent=139 // pred_check
          %p1071 = pneg %p192
        $region146: #{tpu_custom_call.1} parent=139 // pred_check_branch
          %1073 = sbr.rel (%p1071) target = $region148
        $region147: #{tpu_custom_call.1} parent=139 // pred_region
          %1074 = dma.done %s1068, 16
        $region148: #{tpu_custom_call.1} parent=139 // pred_fallthru
          _
        // Predicated region
        $region149: #{tpu_custom_call.1} parent=139 // pred_check
          %p1075 = pneg %p213
        $region150: #{tpu_custom_call.1} parent=139 // pred_check_branch
          %1077 = sbr.rel (%p1075) target = $region152
        $region151: #{tpu_custom_call.1} parent=139 // pred_region
          %1078 = dma.done [#allocation6], 256
        $region152: #{tpu_custom_call.1} parent=139 // pred_fallthru
          _
        // Predicated region
        $region153: #{tpu_custom_call.1} parent=139 // pred_check
          %p1079 = pneg %p234
        $region154: #{tpu_custom_call.1} parent=139 // pred_check_branch
          %1081 = sbr.rel (%p1079) target = $region156
        $region155: #{tpu_custom_call.1} parent=139 // pred_region
          %1082 = dma.done [#allocation9], 16
        $region156: #{tpu_custom_call.1} parent=139 // pred_fallthru
          _
        // Predicated region
        $region157: #{tpu_custom_call.1} parent=139 // pred_check
          %p1083 = pneg %p255
        $region158: #{tpu_custom_call.1} parent=139 // pred_check_branch
          %1085 = sbr.rel (%p1083) target = $region160
        $region159: #{tpu_custom_call.1} parent=139 // pred_region
          %1086 = dma.done [#allocation9], 256
        $region160: #{tpu_custom_call.1} parent=139 // pred_fallthru
          _
        // Predicated region
        $region161: #{tpu_custom_call.1} parent=139 // pred_check
          %p1087 = pneg %p276
        $region162: #{tpu_custom_call.1} parent=139 // pred_check_branch
          %1089 = sbr.rel (%p1087) target = $region164
        $region163: #{tpu_custom_call.1} parent=139 // pred_region
          %1090 = dma.done [#allocation12], 16
        $region164: #{tpu_custom_call.1} parent=139 // pred_fallthru
          _
        // Predicated region
        $region165: #{tpu_custom_call.1} parent=139 // pred_check
          %p1091 = pneg %p297
        $region166: #{tpu_custom_call.1} parent=139 // pred_check_branch
          %1093 = sbr.rel (%p1091) target = $region168
        $region167: #{tpu_custom_call.1} parent=139 // pred_region
          %1094 = dma.done [#allocation12], 256
        $region168: #{tpu_custom_call.1} parent=139 // pred_fallthru
          _
        // Predicated region
        $region169: #{tpu_custom_call.1} parent=139 // pred_check
          %p1095 = pneg %p318
        $region170: #{tpu_custom_call.1} parent=139 // pred_check_branch
          %1097 = sbr.rel (%p1095) target = $region172
        $region171: #{tpu_custom_call.1} parent=139 // pred_region
          %1098 = dma.done [#allocation15], 16
        $region172: #{tpu_custom_call.1} parent=139 // pred_fallthru
          _
        // Predicated region
        $region173: #{tpu_custom_call.1} parent=139 // pred_check
          %p1099 = pneg %p360
        $region174: #{tpu_custom_call.1} parent=139 // pred_check_branch
          %1101 = sbr.rel (%p1099) target = $region176
        $region175: #{tpu_custom_call.1} parent=139 // pred_region
          %1102 = dma.done [#allocation15], 16
        $region176: #{tpu_custom_call.1} parent=139 // pred_fallthru
          _
        // Predicated region
        $region177: #{tpu_custom_call.1} parent=139 // pred_check
          %p1103 = pneg %p381
        $region178: #{tpu_custom_call.1} parent=139 // pred_check_branch
          %1105 = sbr.rel (%p1103) target = $region180
        $region179: #{tpu_custom_call.1} parent=139 // pred_region
          %1106 = dma.done [#allocation18], 16
        $region180: #{tpu_custom_call.1} parent=139 // pred_fallthru
          _
        // Predicated region
        $region181: #{tpu_custom_call.1} parent=139 // pred_check
          %p1107 = pneg %p402
        $region182: #{tpu_custom_call.1} parent=139 // pred_check_branch
          %1109 = sbr.rel (%p1107) target = $region184
        $region183: #{tpu_custom_call.1} parent=139 // pred_region
          %1110 = dma.done [#allocation18], 16
        $region184: #{tpu_custom_call.1} parent=139 // pred_fallthru
          _
        // Predicated region
        $region185: #{tpu_custom_call.1} parent=139 // pred_check
          %p1111 = pneg %p444
        $region186: #{tpu_custom_call.1} parent=139 // pred_check_branch
          %1113 = sbr.rel (%p1111) target = $region188
        $region187: #{tpu_custom_call.1} parent=139 // pred_region
          %1114 = dma.done [#allocation21], 16
        $region188: #{tpu_custom_call.1} parent=139 // pred_fallthru
          _
        // Predicated region
        $region189: #{tpu_custom_call.1} parent=139 // pred_check
          %p1115 = pneg %p465
        $region190: #{tpu_custom_call.1} parent=139 // pred_check_branch
          %1117 = sbr.rel (%p1115) target = $region192
        $region191: #{tpu_custom_call.1} parent=139 // pred_region
          %1118 = dma.done [#allocation21], 256
        $region192: #{tpu_custom_call.1} parent=139 // pred_fallthru
          _
        // Predicated region
        $region193: #{tpu_custom_call.1} parent=139 // pred_check
          %p1119 = pneg %p486
        $region194: #{tpu_custom_call.1} parent=139 // pred_check_branch
          %1121 = sbr.rel (%p1119) target = $region196
        $region195: #{tpu_custom_call.1} parent=139 // pred_region
          %1122 = dma.done [#allocation24], 16
        $region196: #{tpu_custom_call.1} parent=139 // pred_fallthru
          _
        // Predicated region
        $region197: #{tpu_custom_call.1} parent=139 // pred_check
          %p1123 = pneg %p549
        $region198: #{tpu_custom_call.1} parent=139 // pred_check_branch
          %1125 = sbr.rel (%p1123) target = $region200
        $region199: #{tpu_custom_call.1} parent=139 // pred_region
          %1126 = dma.done [#allocation24], 256
        $region200: #{tpu_custom_call.1} parent=139 // pred_fallthru
          _
        %p1127 = scmp.lt.s32.totalorder %s93, 1
        %s1128 = scalar_select %p1127, %s93, 1
        %s1129 = smul.addr %s1128, 8
        %s1130 = scalar_lea.vmem %s1, %s1129
        %p1131 = pneg %p114
        %p1132 = pneg %p111
        %p1133 = scmp.lt.s32.totalorder %s93, 1
        %s1134 = scalar_select %p1133, %s93, 1
        %s1135 = smul.addr %s1134, 2
        %s1136 = smul.addr %s1135, 8
        %s1137 = scalar_lea.vmem %s3, %s1136
        %p1138 = pneg %p140
        %p1139 = pneg %p137
        %s1140 = sand.u32 %s153, 1
        %s1141 = scalar_lea.sflag [#allocation3], %s1140
        %s1142 = sand.u32 %s153, 1
        %s1143 = smul.addr %s1142, 8
        %s1144 = scalar_lea.vmem [#allocation2], %s1143
        %p1145 = pneg %p166
        %p1146 = pneg %p163
        %s1147 = sand.u32 %s93, 1
        %s1148 = scalar_lea.sflag [#allocation6], %s1147
        %s1149 = sand.u32 %s179, 1
        %s1150 = scalar_lea.vmem [#allocation5], %s1149
        %p1151 = pneg %p192
        %p1152 = pneg %p189
        %p1153 = pneg %p213
        %p1154 = pneg %p210
        %p1155 = pneg %p234
        %p1156 = pneg %p231
        %p1157 = pneg %p255
        %p1158 = pneg %p252
        %p1159 = pneg %p276
        %p1160 = pneg %p273
        %p1161 = pneg %p297
        %p1162 = pneg %p294
        %p1163 = pneg %p318
        %p1164 = pneg %p315
        %p1165 = pneg %p339
        %p1166 = pneg %p336
        %p1167 = pneg %p360
        %p1168 = pneg %p357
        %p1169 = pneg %p381
        %p1170 = pneg %p378
        %p1171 = pneg %p402
        %p1172 = pneg %p399
        %p1173 = pneg %p423
        %p1174 = pneg %p420
        %p1175 = pneg %p444
        %p1176 = pneg %p441
        %p1177 = pneg %p465
        %p1178 = pneg %p462
        %p1179 = pneg %p486
        %p1180 = pneg %p483
        %p1181 = pneg %p507
        %p1182 = pneg %p504
        %p1183 = pneg %p528
        %p1184 = pneg %p525
        %p1185 = pneg %p549
        %p1186 = pneg %p546
        %p1187 = pneg %p570
        %p1188 = pneg %p567
        %p1189 = pneg %p591
        %p1190 = pneg %p588
        %p1191 = pneg %p612
        %p1192 = pneg %p609
        %p1193 = pneg %p633
        %p1194 = pneg %p630
        %p1195 = pneg %p654
        %p1196 = pneg %p651
        %p1197 = pneg %p675
        %p1198 = pneg %p672
        %p1199 = pneg %p696
        %p1200 = pneg %p693
        %p1201 = pneg %p717
        %p1202 = pneg %p714
        %p1203 = pneg %p738
        %p1204 = pneg %p735
        %p1205 = pneg %p764
        %p1206 = pneg %p761
        %s1207 = sand.u32 %s751, 1
        %s1208 = scalar_lea.sflag [#allocation4], %s1207
        %s1209 = sand.u32 %s751, 1
        %s1210 = smul.addr %s1209, 8
        %s1211 = scalar_lea.vmem [#allocation26], %s1210
        %p1212 = pneg %p790
        %p1213 = pneg %p787
        %s1214 = sand.u32 %s777, 1
        %s1215 = scalar_lea.sflag [#allocation28], %s1214
        %s1216 = sand.u32 %s777, 1
        %s1217 = smul.addr %s1216, 32
        %s1218 = scalar_lea.vmem [#allocation27], %s1217
        %p1219 = scmp.lt.s32.totalorder %s93, 1
        %s1220 = scalar_select %p1219, %s93, 1
        %s1221 = smul.addr %s1220, 8
        %s1222 = scalar_lea.vmem %s1, %s1221
        %p1223 = scmp.lt.s32.totalorder %s93, 1
        %s1224 = scalar_select %p1223, %s93, 1
        %s1225 = smul.addr %s1224, 2
        %s1226 = smul.addr %s1225, 8
        %s1227 = scalar_lea.vmem %s3, %s1226
        %v1229 = vld [vmem:[%s1222] sm:$0xff]
        %v1230 = vld [vmem:[%s1227] sm:$0xff]
        %v1231 = vld [vmem:[%s1227 + $0x8] sm:$0xff]
        %v1232 = vld [vmem:[%s1062] sm:$0xff]
        %v1233 = vld [vmem:[%s1070] sm:$0x1]
        %vm1234 = vcmp.eq.s32.totalorder %v1232, 0
        %v1235 = vsel %vm1234, -1e+10, 0.0
        %vm1236 = vcmp.eq.s32.totalorder %v1233, 0
        %v1237 = vsel %vm1236, -1e+10, 0.0
        %v1238 = vld [vmem:[#allocation7] sm:$0xf]
        %v1239 = vld [vmem:[#allocation7 + $0x4] sm:$0xf]
        %v1240 = vld [vmem:[#allocation7 + $0x8] sm:$0xf]
        %v1241 = vld [vmem:[#allocation7 + $0xc] sm:$0xf]
        %v1242 = vld [vmem:[#allocation8] sm:$0x1]
        %v1243 = vld [vmem:[#allocation10] sm:$0xf]
        %v1244 = vld [vmem:[#allocation10 + $0x4] sm:$0xf]
        %v1245 = vld [vmem:[#allocation10 + $0x8] sm:$0xf]
        %v1246 = vld [vmem:[#allocation10 + $0xc] sm:$0xf]
        %v1247 = vld [vmem:[#allocation11] sm:$0x1]
        %v1248 = vld [vmem:[#allocation13] sm:$0xf]
        %v1249 = vld [vmem:[#allocation13 + $0x4] sm:$0xf]
        %v1250 = vld [vmem:[#allocation13 + $0x8] sm:$0xf]
        %v1251 = vld [vmem:[#allocation13 + $0xc] sm:$0xf]
        %v1252 = vld [vmem:[#allocation14] sm:$0x1]
        %v1253 = vld [vmem:[%s21] sm:$0xf]
        %v1254 = vld [vmem:[%s21 + $0x4] sm:$0xf]
        %v1255 = vld [vmem:[%s21 + $0x8] sm:$0xf]
        %v1256 = vld [vmem:[%s21 + $0xc] sm:$0xf]
        %v1257 = vld [vmem:[#allocation16] sm:$0x1]
        %v1258 = vpack.c.bf16 %v1229, %v1229
        %v1260 = vlaneseq
        %v1261 = vshrl.u32 %v1260, 7
        %v1262 = vsub.s32 0, %v1261
        %v1263 = vrot.slane %v1242, %v1262
        %v1269 = vunpack.c.l.b16 %v1238
        %v1270 = vunpack.c.l.b16 %v1239
        %v1271 = vunpack.c.l.b16 %v1240
        %v1272 = vunpack.c.l.b16 %v1241
        %v1273 = vpack.c.b16 %v1270, %v1269
        %v1274 = vpack.c.b16 %v1272, %v1271
        %vm1277 = vcmask 261120
        %v1279 = vsel %vm1277, %v1258, 0
        %1281 = vmatprep.subr.bf16.mxu0 0
        %1282 = vmatpush1.bf16.msra.mxu0 %v1273
        %1283 = vmatprep.subr.bf16.mxu0 0
        %1284 = vmatpush1.bf16.msra.mxu0 %v1274
        %1285 = vmatprep.subr.bf16.mxu0 0
        %1286 = vmatpush1.bf16.msra.mxu0 0
        %1287 = vmatprep.subr.bf16.mxu0 0
        %1288 = vmatpush1.bf16.msra.mxu0 0
        %1289 = vmatprep.subr.bf16.mxu0 0
        %1290 = vmatpush1.bf16.msra.mxu0 0
        %1291 = vmatprep.subr.bf16.mxu0 0
        %1292 = vmatpush1.bf16.msra.mxu0 0
        %1293 = vmatprep.subr.bf16.mxu0 0
        %1294 = vmatpush1.bf16.msra.mxu0 0
        %1295 = vmatprep.subr.bf16.mxu0 0
        %1296 = vmatpush1.bf16.msra.mxu0 0
        %1297 = vmatprep.subr.bf16.mxu0 0
        %1298 = vmatpush1.bf16.msra.mxu0 0
        %1299 = vmatprep.subr.bf16.mxu0 0
        %1300 = vmatpush1.bf16.msra.mxu0 0
        %1301 = vmatprep.subr.bf16.mxu0 0
        %1302 = vmatpush1.bf16.msra.mxu0 0
        %1303 = vmatprep.subr.bf16.mxu0 0
        %1304 = vmatpush1.bf16.msra.mxu0 0
        %1305 = vmatprep.subr.bf16.mxu0 0
        %1306 = vmatpush1.bf16.msra.mxu0 0
        %1307 = vmatprep.subr.bf16.mxu0 0
        %1308 = vmatpush1.bf16.msra.mxu0 0
        %1309 = vmatprep.subr.bf16.mxu0 0
        %1310 = vmatpush1.bf16.msra.mxu0 0
        %1311 = vmatprep.subr.bf16.mxu0 0
        %1312 = vmatpush1.bf16.msra.mxu0 0
        %1313 = vmatprep.mubr.bf16.mxu0 0
        %1314 = vmatmul.mubr.bf16.gmra.mrb[0].mxu0 %v1279
        %v1315 = vpop.f32.mrb[0].mxu0
        %v1316 = vadd.f32 %v1263, %v1315
        %v1317 = vpop.f32.mrb[0].mxu0
        %v1318 = vpop.f32.mrb[0].mxu0
        %v1319 = vpop.f32.mrb[0].mxu0
        %1320 = vdwg.mxu0
        %v1322 = vlaneseq
        %v1323 = vshrl.u32 %v1322, 7
        %v1324 = vsub.s32 0, %v1323
        %v1325 = vrot.slane %v1247, %v1324
        %v1331 = vunpack.c.l.b16 %v1243
        %v1332 = vunpack.c.l.b16 %v1244
        %v1333 = vunpack.c.l.b16 %v1245
        %v1334 = vunpack.c.l.b16 %v1246
        %v1335 = vpack.c.b16 %v1332, %v1331
        %v1336 = vpack.c.b16 %v1334, %v1333
        %1339 = vmatprep.subr.bf16.mxu0 0
        %1340 = vmatpush1.bf16.msra.mxu0 %v1335
        %1341 = vmatprep.subr.bf16.mxu0 0
        %1342 = vmatpush1.bf16.msra.mxu0 %v1336
        %1343 = vmatprep.subr.bf16.mxu0 0
        %1344 = vmatpush1.bf16.msra.mxu0 0
        %1345 = vmatprep.subr.bf16.mxu0 0
        %1346 = vmatpush1.bf16.msra.mxu0 0
        %1347 = vmatprep.subr.bf16.mxu0 0
        %1348 = vmatpush1.bf16.msra.mxu0 0
        %1349 = vmatprep.subr.bf16.mxu0 0
        %1350 = vmatpush1.bf16.msra.mxu0 0
        %1351 = vmatprep.subr.bf16.mxu0 0
        %1352 = vmatpush1.bf16.msra.mxu0 0
        %1353 = vmatprep.subr.bf16.mxu0 0
        %1354 = vmatpush1.bf16.msra.mxu0 0
        %1355 = vmatprep.subr.bf16.mxu0 0
        %1356 = vmatpush1.bf16.msra.mxu0 0
        %1357 = vmatprep.subr.bf16.mxu0 0
        %1358 = vmatpush1.bf16.msra.mxu0 0
        %1359 = vmatprep.subr.bf16.mxu0 0
        %1360 = vmatpush1.bf16.msra.mxu0 0
        %1361 = vmatprep.subr.bf16.mxu0 0
        %1362 = vmatpush1.bf16.msra.mxu0 0
        %1363 = vmatprep.subr.bf16.mxu0 0
        %1364 = vmatpush1.bf16.msra.mxu0 0
        %1365 = vmatprep.subr.bf16.mxu0 0
        %1366 = vmatpush1.bf16.msra.mxu0 0
        %1367 = vmatprep.subr.bf16.mxu0 0
        %1368 = vmatpush1.bf16.msra.mxu0 0
        %1369 = vmatprep.subr.bf16.mxu0 0
        %1370 = vmatpush1.bf16.msra.mxu0 0
        %1371 = vmatprep.mubr.bf16.mxu0 0
        %1372 = vmatmul.mubr.bf16.gmra.mrb[0].mxu0 %v1279
        %v1373 = vpop.f32.mrb[0].mxu0
        %v1374 = vadd.f32 %v1325, %v1373
        %v1375 = vpop.f32.mrb[0].mxu0
        %v1376 = vpop.f32.mrb[0].mxu0
        %v1377 = vpop.f32.mrb[0].mxu0
        %1378 = vdwg.mxu0
        %v1380 = vlaneseq
        %v1381 = vshrl.u32 %v1380, 7
        %v1382 = vsub.s32 0, %v1381
        %v1383 = vrot.slane %v1252, %v1382
        %v1389 = vunpack.c.l.b16 %v1248
        %v1390 = vunpack.c.l.b16 %v1249
        %v1391 = vunpack.c.l.b16 %v1250
        %v1392 = vunpack.c.l.b16 %v1251
        %v1393 = vpack.c.b16 %v1390, %v1389
        %v1394 = vpack.c.b16 %v1392, %v1391
        %1397 = vmatprep.subr.bf16.mxu0 0
        %1398 = vmatpush1.bf16.msra.mxu0 %v1393
        %1399 = vmatprep.subr.bf16.mxu0 0
        %1400 = vmatpush1.bf16.msra.mxu0 %v1394
        %1401 = vmatprep.subr.bf16.mxu0 0
        %1402 = vmatpush1.bf16.msra.mxu0 0
        %1403 = vmatprep.subr.bf16.mxu0 0
        %1404 = vmatpush1.bf16.msra.mxu0 0
        %1405 = vmatprep.subr.bf16.mxu0 0
        %1406 = vmatpush1.bf16.msra.mxu0 0
        %1407 = vmatprep.subr.bf16.mxu0 0
        %1408 = vmatpush1.bf16.msra.mxu0 0
        %1409 = vmatprep.subr.bf16.mxu0 0
        %1410 = vmatpush1.bf16.msra.mxu0 0
        %1411 = vmatprep.subr.bf16.mxu0 0
        %1412 = vmatpush1.bf16.msra.mxu0 0
        %1413 = vmatprep.subr.bf16.mxu0 0
        %1414 = vmatpush1.bf16.msra.mxu0 0
        %1415 = vmatprep.subr.bf16.mxu0 0
        %1416 = vmatpush1.bf16.msra.mxu0 0
        %1417 = vmatprep.subr.bf16.mxu0 0
        %1418 = vmatpush1.bf16.msra.mxu0 0
        %1419 = vmatprep.subr.bf16.mxu0 0
        %1420 = vmatpush1.bf16.msra.mxu0 0
        %1421 = vmatprep.subr.bf16.mxu0 0
        %1422 = vmatpush1.bf16.msra.mxu0 0
        %1423 = vmatprep.subr.bf16.mxu0 0
        %1424 = vmatpush1.bf16.msra.mxu0 0
        %1425 = vmatprep.subr.bf16.mxu0 0
        %1426 = vmatpush1.bf16.msra.mxu0 0
        %1427 = vmatprep.subr.bf16.mxu0 0
        %1428 = vmatpush1.bf16.msra.mxu0 0
        %1429 = vmatprep.mubr.bf16.mxu0 0
        %1430 = vmatmul.mubr.bf16.gmra.mrb[0].mxu0 %v1279
        %v1431 = vpop.f32.mrb[0].mxu0
        %v1432 = vadd.f32 %v1383, %v1431
        %v1433 = vpop.f32.mrb[0].mxu0
        %v1434 = vpop.f32.mrb[0].mxu0
        %v1435 = vpop.f32.mrb[0].mxu0
        %1436 = vdwg.mxu0
        %v1437 = vmul.f32 %v1316, 0.35355338
        %1439 = vrot.lane.b32.xlu0 %v1437, 120
        %v1440 = vpop.permute.xlu0 %1439
        %1442 = vrot.lane.b32.xlu0 %v1437, 112
        %v1443 = vpop.permute.xlu0 %1442
        %1445 = vrot.lane.b32.xlu0 %v1437, 104
        %v1446 = vpop.permute.xlu0 %1445
        %v1448 = vcombine.low %v1437, %v1443
        %v1449 = vcombine.high %v1437, %v1443
        %v1451 = vunpack.c.l.s4 1983009808
        %v1452 = vunpack.c.0.s8 %v1451
        %v1453 = vlaneseq
        %v1454 = vshrl.u32 %v1453, 7
        %v1455 = vsub.s32 %v1452, %v1454
        %v1456 = vrot.slane %v1448, %v1455
        %v1458 = vunpack.c.l.s4 1983009808
        %v1459 = vunpack.c.0.s8 %v1458
        %v1460 = vlaneseq
        %v1461 = vshrl.u32 %v1460, 7
        %v1462 = vsub.s32 %v1459, %v1461
        %v1463 = vrot.slane %v1449, %v1462
        %v1464 = vcombine.low %v1440, %v1446
        %v1465 = vcombine.high %v1440, %v1446
        %v1467 = vunpack.c.l.s4 1983009808
        %v1468 = vunpack.c.0.s8 %v1467
        %v1469 = vlaneseq
        %v1470 = vshrl.u32 %v1469, 7
        %v1471 = vsub.s32 %v1468, %v1470
        %v1472 = vrot.slane %v1464, %v1471
        %v1474 = vunpack.c.l.s4 1983009808
        %v1475 = vunpack.c.0.s8 %v1474
        %v1476 = vlaneseq
        %v1477 = vshrl.u32 %v1476, 7
        %v1478 = vsub.s32 %v1475, %v1477
        %v1479 = vrot.slane %v1465, %v1478
        %v1480 = vcombine.low %v1456, %v1472
        %v1481 = vcombine.high %v1456, %v1472
        %v1483 = vunpack.c.l.s4 1934713408
        %v1484 = vunpack.c.0.s8 %v1483
        %v1485 = vlaneseq
        %v1486 = vshrl.u32 %v1485, 7
        %v1487 = vsub.s32 %v1484, %v1486
        %v1488 = vrot.slane %v1480, %v1487
        %v1490 = vunpack.c.l.s4 1934713408
        %v1491 = vunpack.c.0.s8 %v1490
        %v1492 = vlaneseq
        %v1493 = vshrl.u32 %v1492, 7
        %v1494 = vsub.s32 %v1491, %v1493
        %v1495 = vrot.slane %v1481, %v1494
        %v1496 = vcombine.low %v1463, %v1479
        %v1497 = vcombine.high %v1463, %v1479
        %v1499 = vunpack.c.l.s4 1934713408
        %v1500 = vunpack.c.0.s8 %v1499
        %v1501 = vlaneseq
        %v1502 = vshrl.u32 %v1501, 7
        %v1503 = vsub.s32 %v1500, %v1502
        %v1504 = vrot.slane %v1496, %v1503
        %v1506 = vunpack.c.l.s4 1934713408
        %v1507 = vunpack.c.0.s8 %v1506
        %v1508 = vlaneseq
        %v1509 = vshrl.u32 %v1508, 7
        %v1510 = vsub.s32 %v1507, %v1509
        %v1511 = vrot.slane %v1497, %v1510
        %v1512 = vcombine.high %v1488, 0.0
        %v1513 = vcombine.high %v1495, 0.0
        %v1514 = vcombine.high %v1504, 0.0
        %v1515 = vcombine.high %v1511, 0.0
        %v1516 = vcombine.low %v1488, %v1495
        %v1518 = vunpack.c.l.s4 1983009808
        %v1519 = vunpack.c.0.s8 %v1518
        %v1520 = vlaneseq
        %v1521 = vshrl.u32 %v1520, 7
        %v1522 = vsub.s32 %v1519, %v1521
        %v1523 = vrot.slane %v1516, %v1522
        %v1524 = vcombine.low %v1512, %v1513
        %v1526 = vunpack.c.l.s4 1983009808
        %v1527 = vunpack.c.0.s8 %v1526
        %v1528 = vlaneseq
        %v1529 = vshrl.u32 %v1528, 7
        %v1530 = vsub.s32 %v1527, %v1529
        %v1531 = vrot.slane %v1524, %v1530
        %v1532 = vcombine.low %v1504, %v1511
        %v1534 = vunpack.c.l.s4 1983009808
        %v1535 = vunpack.c.0.s8 %v1534
        %v1536 = vlaneseq
        %v1537 = vshrl.u32 %v1536, 7
        %v1538 = vsub.s32 %v1535, %v1537
        %v1539 = vrot.slane %v1532, %v1538
        %v1540 = vcombine.low %v1514, %v1515
        %v1542 = vunpack.c.l.s4 1983009808
        %v1543 = vunpack.c.0.s8 %v1542
        %v1544 = vlaneseq
        %v1545 = vshrl.u32 %v1544, 7
        %v1546 = vsub.s32 %v1543, %v1545
        %v1547 = vrot.slane %v1540, %v1546
        %v1548 = vcombine.low %v1523, %v1531
        %v1549 = vcombine.high %v1523, %v1531
        %v1551 = vunpack.c.l.s4 1934713408
        %v1552 = vunpack.c.0.s8 %v1551
        %v1553 = vlaneseq
        %v1554 = vshrl.u32 %v1553, 7
        %v1555 = vsub.s32 %v1552, %v1554
        %v1556 = vrot.slane %v1548, %v1555
        %v1558 = vunpack.c.l.s4 1934713408
        %v1559 = vunpack.c.0.s8 %v1558
        %v1560 = vlaneseq
        %v1561 = vshrl.u32 %v1560, 7
        %v1562 = vsub.s32 %v1559, %v1561
        %v1563 = vrot.slane %v1549, %v1562
        %v1564 = vcombine.low %v1539, %v1547
        %v1565 = vcombine.high %v1539, %v1547
        %v1567 = vunpack.c.l.s4 1934713408
        %v1568 = vunpack.c.0.s8 %v1567
        %v1569 = vlaneseq
        %v1570 = vshrl.u32 %v1569, 7
        %v1571 = vsub.s32 %v1568, %v1570
        %v1572 = vrot.slane %v1564, %v1571
        %v1574 = vunpack.c.l.s4 1934713408
        %v1575 = vunpack.c.0.s8 %v1574
        %v1576 = vlaneseq
        %v1577 = vshrl.u32 %v1576, 7
        %v1578 = vsub.s32 %v1575, %v1577
        %v1579 = vrot.slane %v1565, %v1578
        %v1580 = vcombine.low %v1556, %v1572
        %v1581 = vcombine.high %v1556, %v1572
        %v1582 = vcombine.low %v1563, %v1579
        %v1583 = vcombine.high %v1563, %v1579
        %1585 = vrot.lane.b32.xlu0 %v1374, 120
        %v1586 = vpop.permute.xlu0 %1585
        %1588 = vrot.lane.b32.xlu0 %v1374, 112
        %v1589 = vpop.permute.xlu0 %1588
        %1591 = vrot.lane.b32.xlu0 %v1374, 104
        %v1592 = vpop.permute.xlu0 %1591
        %v1594 = vcombine.low %v1374, %v1589
        %v1595 = vcombine.high %v1374, %v1589
        %v1597 = vunpack.c.l.s4 1983009808
        %v1598 = vunpack.c.0.s8 %v1597
        %v1599 = vlaneseq
        %v1600 = vshrl.u32 %v1599, 7
        %v1601 = vsub.s32 %v1598, %v1600
        %v1602 = vrot.slane %v1594, %v1601
        %v1604 = vunpack.c.l.s4 1983009808
        %v1605 = vunpack.c.0.s8 %v1604
        %v1606 = vlaneseq
        %v1607 = vshrl.u32 %v1606, 7
        %v1608 = vsub.s32 %v1605, %v1607
        %v1609 = vrot.slane %v1595, %v1608
        %v1610 = vcombine.low %v1586, %v1592
        %v1611 = vcombine.high %v1586, %v1592
        %v1613 = vunpack.c.l.s4 1983009808
        %v1614 = vunpack.c.0.s8 %v1613
        %v1615 = vlaneseq
        %v1616 = vshrl.u32 %v1615, 7
        %v1617 = vsub.s32 %v1614, %v1616
        %v1618 = vrot.slane %v1610, %v1617
        %v1620 = vunpack.c.l.s4 1983009808
        %v1621 = vunpack.c.0.s8 %v1620
        %v1622 = vlaneseq
        %v1623 = vshrl.u32 %v1622, 7
        %v1624 = vsub.s32 %v1621, %v1623
        %v1625 = vrot.slane %v1611, %v1624
        %v1626 = vcombine.low %v1602, %v1618
        %v1627 = vcombine.high %v1602, %v1618
        %v1629 = vunpack.c.l.s4 1934713408
        %v1630 = vunpack.c.0.s8 %v1629
        %v1631 = vlaneseq
        %v1632 = vshrl.u32 %v1631, 7
        %v1633 = vsub.s32 %v1630, %v1632
        %v1634 = vrot.slane %v1626, %v1633
        %v1636 = vunpack.c.l.s4 1934713408
        %v1637 = vunpack.c.0.s8 %v1636
        %v1638 = vlaneseq
        %v1639 = vshrl.u32 %v1638, 7
        %v1640 = vsub.s32 %v1637, %v1639
        %v1641 = vrot.slane %v1627, %v1640
        %v1642 = vcombine.low %v1609, %v1625
        %v1643 = vcombine.high %v1609, %v1625
        %v1645 = vunpack.c.l.s4 1934713408
        %v1646 = vunpack.c.0.s8 %v1645
        %v1647 = vlaneseq
        %v1648 = vshrl.u32 %v1647, 7
        %v1649 = vsub.s32 %v1646, %v1648
        %v1650 = vrot.slane %v1642, %v1649
        %v1652 = vunpack.c.l.s4 1934713408
        %v1653 = vunpack.c.0.s8 %v1652
        %v1654 = vlaneseq
        %v1655 = vshrl.u32 %v1654, 7
        %v1656 = vsub.s32 %v1653, %v1655
        %v1657 = vrot.slane %v1643, %v1656
        %v1658 = vcombine.high %v1634, 0.0
        %v1659 = vcombine.high %v1641, 0.0
        %v1660 = vcombine.high %v1650, 0.0
        %v1661 = vcombine.high %v1657, 0.0
        %v1662 = vcombine.low %v1634, %v1641
        %v1664 = vunpack.c.l.s4 1983009808
        %v1665 = vunpack.c.0.s8 %v1664
        %v1666 = vlaneseq
        %v1667 = vshrl.u32 %v1666, 7
        %v1668 = vsub.s32 %v1665, %v1667
        %v1669 = vrot.slane %v1662, %v1668
        %v1670 = vcombine.low %v1658, %v1659
        %v1672 = vunpack.c.l.s4 1983009808
        %v1673 = vunpack.c.0.s8 %v1672
        %v1674 = vlaneseq
        %v1675 = vshrl.u32 %v1674, 7
        %v1676 = vsub.s32 %v1673, %v1675
        %v1677 = vrot.slane %v1670, %v1676
        %v1678 = vcombine.low %v1650, %v1657
        %v1680 = vunpack.c.l.s4 1983009808
        %v1681 = vunpack.c.0.s8 %v1680
        %v1682 = vlaneseq
        %v1683 = vshrl.u32 %v1682, 7
        %v1684 = vsub.s32 %v1681, %v1683
        %v1685 = vrot.slane %v1678, %v1684
        %v1686 = vcombine.low %v1660, %v1661
        %v1688 = vunpack.c.l.s4 1983009808
        %v1689 = vunpack.c.0.s8 %v1688
        %v1690 = vlaneseq
        %v1691 = vshrl.u32 %v1690, 7
        %v1692 = vsub.s32 %v1689, %v1691
        %v1693 = vrot.slane %v1686, %v1692
        %v1694 = vcombine.low %v1669, %v1677
        %v1695 = vcombine.high %v1669, %v1677
        %v1697 = vunpack.c.l.s4 1934713408
        %v1698 = vunpack.c.0.s8 %v1697
        %v1699 = vlaneseq
        %v1700 = vshrl.u32 %v1699, 7
        %v1701 = vsub.s32 %v1698, %v1700
        %v1702 = vrot.slane %v1694, %v1701
        %v1704 = vunpack.c.l.s4 1934713408
        %v1705 = vunpack.c.0.s8 %v1704
        %v1706 = vlaneseq
        %v1707 = vshrl.u32 %v1706, 7
        %v1708 = vsub.s32 %v1705, %v1707
        %v1709 = vrot.slane %v1695, %v1708
        %v1710 = vcombine.low %v1685, %v1693
        %v1711 = vcombine.high %v1685, %v1693
        %v1713 = vunpack.c.l.s4 1934713408
        %v1714 = vunpack.c.0.s8 %v1713
        %v1715 = vlaneseq
        %v1716 = vshrl.u32 %v1715, 7
        %v1717 = vsub.s32 %v1714, %v1716
        %v1718 = vrot.slane %v1710, %v1717
        %v1720 = vunpack.c.l.s4 1934713408
        %v1721 = vunpack.c.0.s8 %v1720
        %v1722 = vlaneseq
        %v1723 = vshrl.u32 %v1722, 7
        %v1724 = vsub.s32 %v1721, %v1723
        %v1725 = vrot.slane %v1711, %v1724
        %v1726 = vcombine.low %v1702, %v1718
        %v1727 = vcombine.high %v1702, %v1718
        %v1728 = vcombine.low %v1709, %v1725
        %v1729 = vcombine.high %v1709, %v1725
        %1731 = vrot.lane.b32.xlu0 %v1432, 120
        %v1732 = vpop.permute.xlu0 %1731
        %1734 = vrot.lane.b32.xlu0 %v1432, 112
        %v1735 = vpop.permute.xlu0 %1734
        %1737 = vrot.lane.b32.xlu0 %v1432, 104
        %v1738 = vpop.permute.xlu0 %1737
        %v1740 = vcombine.low %v1432, %v1735
        %v1741 = vcombine.high %v1432, %v1735
        %v1743 = vunpack.c.l.s4 1983009808
        %v1744 = vunpack.c.0.s8 %v1743
        %v1745 = vlaneseq
        %v1746 = vshrl.u32 %v1745, 7
        %v1747 = vsub.s32 %v1744, %v1746
        %v1748 = vrot.slane %v1740, %v1747
        %v1750 = vunpack.c.l.s4 1983009808
        %v1751 = vunpack.c.0.s8 %v1750
        %v1752 = vlaneseq
        %v1753 = vshrl.u32 %v1752, 7
        %v1754 = vsub.s32 %v1751, %v1753
        %v1755 = vrot.slane %v1741, %v1754
        %v1756 = vcombine.low %v1732, %v1738
        %v1757 = vcombine.high %v1732, %v1738
        %v1759 = vunpack.c.l.s4 1983009808
        %v1760 = vunpack.c.0.s8 %v1759
        %v1761 = vlaneseq
        %v1762 = vshrl.u32 %v1761, 7
        %v1763 = vsub.s32 %v1760, %v1762
        %v1764 = vrot.slane %v1756, %v1763
        %v1766 = vunpack.c.l.s4 1983009808
        %v1767 = vunpack.c.0.s8 %v1766
        %v1768 = vlaneseq
        %v1769 = vshrl.u32 %v1768, 7
        %v1770 = vsub.s32 %v1767, %v1769
        %v1771 = vrot.slane %v1757, %v1770
        %v1772 = vcombine.low %v1748, %v1764
        %v1773 = vcombine.high %v1748, %v1764
        %v1775 = vunpack.c.l.s4 1934713408
        %v1776 = vunpack.c.0.s8 %v1775
        %v1777 = vlaneseq
        %v1778 = vshrl.u32 %v1777, 7
        %v1779 = vsub.s32 %v1776, %v1778
        %v1780 = vrot.slane %v1772, %v1779
        %v1782 = vunpack.c.l.s4 1934713408
        %v1783 = vunpack.c.0.s8 %v1782
        %v1784 = vlaneseq
        %v1785 = vshrl.u32 %v1784, 7
        %v1786 = vsub.s32 %v1783, %v1785
        %v1787 = vrot.slane %v1773, %v1786
        %v1788 = vcombine.low %v1755, %v1771
        %v1789 = vcombine.high %v1755, %v1771
        %v1791 = vunpack.c.l.s4 1934713408
        %v1792 = vunpack.c.0.s8 %v1791
        %v1793 = vlaneseq
        %v1794 = vshrl.u32 %v1793, 7
        %v1795 = vsub.s32 %v1792, %v1794
        %v1796 = vrot.slane %v1788, %v1795
        %v1798 = vunpack.c.l.s4 1934713408
        %v1799 = vunpack.c.0.s8 %v1798
        %v1800 = vlaneseq
        %v1801 = vshrl.u32 %v1800, 7
        %v1802 = vsub.s32 %v1799, %v1801
        %v1803 = vrot.slane %v1789, %v1802
        %v1804 = vcombine.high %v1780, 0.0
        %v1805 = vcombine.high %v1787, 0.0
        %v1806 = vcombine.high %v1796, 0.0
        %v1807 = vcombine.high %v1803, 0.0
        %v1808 = vcombine.low %v1780, %v1787
        %v1810 = vunpack.c.l.s4 1983009808
        %v1811 = vunpack.c.0.s8 %v1810
        %v1812 = vlaneseq
        %v1813 = vshrl.u32 %v1812, 7
        %v1814 = vsub.s32 %v1811, %v1813
        %v1815 = vrot.slane %v1808, %v1814
        %v1816 = vcombine.low %v1804, %v1805
        %v1818 = vunpack.c.l.s4 1983009808
        %v1819 = vunpack.c.0.s8 %v1818
        %v1820 = vlaneseq
        %v1821 = vshrl.u32 %v1820, 7
        %v1822 = vsub.s32 %v1819, %v1821
        %v1823 = vrot.slane %v1816, %v1822
        %v1824 = vcombine.low %v1796, %v1803
        %v1826 = vunpack.c.l.s4 1983009808
        %v1827 = vunpack.c.0.s8 %v1826
        %v1828 = vlaneseq
        %v1829 = vshrl.u32 %v1828, 7
        %v1830 = vsub.s32 %v1827, %v1829
        %v1831 = vrot.slane %v1824, %v1830
        %v1832 = vcombine.low %v1806, %v1807
        %v1834 = vunpack.c.l.s4 1983009808
        %v1835 = vunpack.c.0.s8 %v1834
        %v1836 = vlaneseq
        %v1837 = vshrl.u32 %v1836, 7
        %v1838 = vsub.s32 %v1835, %v1837
        %v1839 = vrot.slane %v1832, %v1838
        %v1840 = vcombine.low %v1815, %v1823
        %v1841 = vcombine.high %v1815, %v1823
        %v1843 = vunpack.c.l.s4 1934713408
        %v1844 = vunpack.c.0.s8 %v1843
        %v1845 = vlaneseq
        %v1846 = vshrl.u32 %v1845, 7
        %v1847 = vsub.s32 %v1844, %v1846
        %v1848 = vrot.slane %v1840, %v1847
        %v1850 = vunpack.c.l.s4 1934713408
        %v1851 = vunpack.c.0.s8 %v1850
        %v1852 = vlaneseq
        %v1853 = vshrl.u32 %v1852, 7
        %v1854 = vsub.s32 %v1851, %v1853
        %v1855 = vrot.slane %v1841, %v1854
        %v1856 = vcombine.low %v1831, %v1839
        %v1857 = vcombine.high %v1831, %v1839
        %v1859 = vunpack.c.l.s4 1934713408
        %v1860 = vunpack.c.0.s8 %v1859
        %v1861 = vlaneseq
        %v1862 = vshrl.u32 %v1861, 7
        %v1863 = vsub.s32 %v1860, %v1862
        %v1864 = vrot.slane %v1856, %v1863
        %v1866 = vunpack.c.l.s4 1934713408
        %v1867 = vunpack.c.0.s8 %v1866
        %v1868 = vlaneseq
        %v1869 = vshrl.u32 %v1868, 7
        %v1870 = vsub.s32 %v1867, %v1869
        %v1871 = vrot.slane %v1857, %v1870
        %v1872 = vcombine.low %v1848, %v1864
        %v1873 = vcombine.high %v1848, %v1864
        %v1874 = vcombine.low %v1855, %v1871
        %v1875 = vcombine.high %v1855, %v1871
        %v1876 = vpack.c.bf16 %v1580, %v1580
        %v1877 = vpack.c.bf16 %v1581, %v1581
        %v1878 = vpack.c.bf16 %v1582, %v1582
        %v1879 = vpack.c.bf16 %v1583, %v1583
        %v1880 = vpack.c.bf16 %v1726, %v1726
        %v1881 = vpack.c.bf16 %v1727, %v1727
        %v1882 = vpack.c.bf16 %v1728, %v1728
        %v1883 = vpack.c.bf16 %v1729, %v1729
        %vm1884 = vcmask 64512
        %v1886 = vsel %vm1884, %v1876, 0
        %v1889 = vsel %vm1884, %v1880, 0
        %1891 = vmatprep.subr.bf16.mxu0 0
        %1892 = vmatpush1.bf16.xpose.msra.mxu0 %v1889
        %1893 = vmatprep.subr.bf16.mxu0 0
        %1894 = vmatpush1.bf16.xpose.msra.mxu0 0
        %1895 = vmatprep.subr.bf16.mxu0 0
        %1896 = vmatpush1.bf16.xpose.msra.mxu0 0
        %1897 = vmatprep.subr.bf16.mxu0 0
        %1898 = vmatpush1.bf16.xpose.msra.mxu0 0
        %1899 = vmatprep.subr.bf16.mxu0 0
        %1900 = vmatpush1.bf16.xpose.msra.mxu0 0
        %1901 = vmatprep.subr.bf16.mxu0 0
        %1902 = vmatpush1.bf16.xpose.msra.mxu0 0
        %1903 = vmatprep.subr.bf16.mxu0 0
        %1904 = vmatpush1.bf16.xpose.msra.mxu0 0
        %1905 = vmatprep.subr.bf16.mxu0 0
        %1906 = vmatpush1.bf16.xpose.msra.mxu0 0
        %1907 = vmatprep.subr.bf16.mxu0 0
        %1908 = vmatpush1.bf16.xpose.msra.mxu0 0
        %1909 = vmatprep.subr.bf16.mxu0 0
        %1910 = vmatpush1.bf16.xpose.msra.mxu0 0
        %1911 = vmatprep.subr.bf16.mxu0 0
        %1912 = vmatpush1.bf16.xpose.msra.mxu0 0
        %1913 = vmatprep.subr.bf16.mxu0 0
        %1914 = vmatpush1.bf16.xpose.msra.mxu0 0
        %1915 = vmatprep.subr.bf16.mxu0 0
        %1916 = vmatpush1.bf16.xpose.msra.mxu0 0
        %1917 = vmatprep.subr.bf16.mxu0 0
        %1918 = vmatpush1.bf16.xpose.msra.mxu0 0
        %1919 = vmatprep.subr.bf16.mxu0 0
        %1920 = vmatpush1.bf16.xpose.msra.mxu0 0
        %1921 = vmatprep.subr.bf16.mxu0 0
        %1922 = vmatpush1.bf16.xpose.msra.mxu0 0
        %1923 = vmatprep.mubr.bf16.mxu0 0
        %1924 = vmatmul.mubr.bf16.gmra.mrb[0].mxu0 %v1886
        %v1925 = vpop.f32.mrb[0].mxu0
        %v1926 = vadd.f32 %v1235, %v1925
        %v1927 = vpop.f32.mrb[0].mxu0
        %v1928 = vpop.f32.mrb[0].mxu0
        %v1929 = vpop.f32.mrb[0].mxu0
        %1930 = vdwg.mxu0
        %v1932 = vsel %vm1884, %v1877, 0
        %v1935 = vsel %vm1884, %v1881, 0
        %1937 = vmatprep.subr.bf16.mxu0 0
        %1938 = vmatpush1.bf16.xpose.msra.mxu0 %v1935
        %1939 = vmatprep.subr.bf16.mxu0 0
        %1940 = vmatpush1.bf16.xpose.msra.mxu0 0
        %1941 = vmatprep.subr.bf16.mxu0 0
        %1942 = vmatpush1.bf16.xpose.msra.mxu0 0
        %1943 = vmatprep.subr.bf16.mxu0 0
        %1944 = vmatpush1.bf16.xpose.msra.mxu0 0
        %1945 = vmatprep.subr.bf16.mxu0 0
        %1946 = vmatpush1.bf16.xpose.msra.mxu0 0
        %1947 = vmatprep.subr.bf16.mxu0 0
        %1948 = vmatpush1.bf16.xpose.msra.mxu0 0
        %1949 = vmatprep.subr.bf16.mxu0 0
        %1950 = vmatpush1.bf16.xpose.msra.mxu0 0
        %1951 = vmatprep.subr.bf16.mxu0 0
        %1952 = vmatpush1.bf16.xpose.msra.mxu0 0
        %1953 = vmatprep.subr.bf16.mxu0 0
        %1954 = vmatpush1.bf16.xpose.msra.mxu0 0
        %1955 = vmatprep.subr.bf16.mxu0 0
        %1956 = vmatpush1.bf16.xpose.msra.mxu0 0
        %1957 = vmatprep.subr.bf16.mxu0 0
        %1958 = vmatpush1.bf16.xpose.msra.mxu0 0
        %1959 = vmatprep.subr.bf16.mxu0 0
        %1960 = vmatpush1.bf16.xpose.msra.mxu0 0
        %1961 = vmatprep.subr.bf16.mxu0 0
        %1962 = vmatpush1.bf16.xpose.msra.mxu0 0
        %1963 = vmatprep.subr.bf16.mxu0 0
        %1964 = vmatpush1.bf16.xpose.msra.mxu0 0
        %1965 = vmatprep.subr.bf16.mxu0 0
        %1966 = vmatpush1.bf16.xpose.msra.mxu0 0
        %1967 = vmatprep.subr.bf16.mxu0 0
        %1968 = vmatpush1.bf16.xpose.msra.mxu0 0
        %1969 = vmatprep.mubr.bf16.mxu0 0
        %1970 = vmatmul.mubr.bf16.gmra.mrb[0].mxu0 %v1932
        %v1971 = vpop.f32.mrb[0].mxu0
        %v1972 = vadd.f32 %v1235, %v1971
        %v1973 = vpop.f32.mrb[0].mxu0
        %v1974 = vpop.f32.mrb[0].mxu0
        %v1975 = vpop.f32.mrb[0].mxu0
        %1976 = vdwg.mxu0
        %v1978 = vsel %vm1884, %v1878, 0
        %v1981 = vsel %vm1884, %v1882, 0
        %1983 = vmatprep.subr.bf16.mxu0 0
        %1984 = vmatpush1.bf16.xpose.msra.mxu0 %v1981
        %1985 = vmatprep.subr.bf16.mxu0 0
        %1986 = vmatpush1.bf16.xpose.msra.mxu0 0
        %1987 = vmatprep.subr.bf16.mxu0 0
        %1988 = vmatpush1.bf16.xpose.msra.mxu0 0
        %1989 = vmatprep.subr.bf16.mxu0 0
        %1990 = vmatpush1.bf16.xpose.msra.mxu0 0
        %1991 = vmatprep.subr.bf16.mxu0 0
        %1992 = vmatpush1.bf16.xpose.msra.mxu0 0
        %1993 = vmatprep.subr.bf16.mxu0 0
        %1994 = vmatpush1.bf16.xpose.msra.mxu0 0
        %1995 = vmatprep.subr.bf16.mxu0 0
        %1996 = vmatpush1.bf16.xpose.msra.mxu0 0
        %1997 = vmatprep.subr.bf16.mxu0 0
        %1998 = vmatpush1.bf16.xpose.msra.mxu0 0
        %1999 = vmatprep.subr.bf16.mxu0 0
        %2000 = vmatpush1.bf16.xpose.msra.mxu0 0
        %2001 = vmatprep.subr.bf16.mxu0 0
        %2002 = vmatpush1.bf16.xpose.msra.mxu0 0
        %2003 = vmatprep.subr.bf16.mxu0 0
        %2004 = vmatpush1.bf16.xpose.msra.mxu0 0
        %2005 = vmatprep.subr.bf16.mxu0 0
        %2006 = vmatpush1.bf16.xpose.msra.mxu0 0
        %2007 = vmatprep.subr.bf16.mxu0 0
        %2008 = vmatpush1.bf16.xpose.msra.mxu0 0
        %2009 = vmatprep.subr.bf16.mxu0 0
        %2010 = vmatpush1.bf16.xpose.msra.mxu0 0
        %2011 = vmatprep.subr.bf16.mxu0 0
        %2012 = vmatpush1.bf16.xpose.msra.mxu0 0
        %2013 = vmatprep.subr.bf16.mxu0 0
        %2014 = vmatpush1.bf16.xpose.msra.mxu0 0
        %2015 = vmatprep.mubr.bf16.mxu0 0
        %2016 = vmatmul.mubr.bf16.gmra.mrb[0].mxu0 %v1978
        %v2017 = vpop.f32.mrb[0].mxu0
        %v2018 = vadd.f32 %v1235, %v2017
        %v2019 = vpop.f32.mrb[0].mxu0
        %v2020 = vpop.f32.mrb[0].mxu0
        %v2021 = vpop.f32.mrb[0].mxu0
        %2022 = vdwg.mxu0
        %v2024 = vsel %vm1884, %v1879, 0
        %v2027 = vsel %vm1884, %v1883, 0
        %2029 = vmatprep.subr.bf16.mxu0 0
        %2030 = vmatpush1.bf16.xpose.msra.mxu0 %v2027
        %2031 = vmatprep.subr.bf16.mxu0 0
        %2032 = vmatpush1.bf16.xpose.msra.mxu0 0
        %2033 = vmatprep.subr.bf16.mxu0 0
        %2034 = vmatpush1.bf16.xpose.msra.mxu0 0
        %2035 = vmatprep.subr.bf16.mxu0 0
        %2036 = vmatpush1.bf16.xpose.msra.mxu0 0
        %2037 = vmatprep.subr.bf16.mxu0 0
        %2038 = vmatpush1.bf16.xpose.msra.mxu0 0
        %2039 = vmatprep.subr.bf16.mxu0 0
        %2040 = vmatpush1.bf16.xpose.msra.mxu0 0
        %2041 = vmatprep.subr.bf16.mxu0 0
        %2042 = vmatpush1.bf16.xpose.msra.mxu0 0
        %2043 = vmatprep.subr.bf16.mxu0 0
        %2044 = vmatpush1.bf16.xpose.msra.mxu0 0
        %2045 = vmatprep.subr.bf16.mxu0 0
        %2046 = vmatpush1.bf16.xpose.msra.mxu0 0
        %2047 = vmatprep.subr.bf16.mxu0 0
        %2048 = vmatpush1.bf16.xpose.msra.mxu0 0
        %2049 = vmatprep.subr.bf16.mxu0 0
        %2050 = vmatpush1.bf16.xpose.msra.mxu0 0
        %2051 = vmatprep.subr.bf16.mxu0 0
        %2052 = vmatpush1.bf16.xpose.msra.mxu0 0
        %2053 = vmatprep.subr.bf16.mxu0 0
        %2054 = vmatpush1.bf16.xpose.msra.mxu0 0
        %2055 = vmatprep.subr.bf16.mxu0 0
        %2056 = vmatpush1.bf16.xpose.msra.mxu0 0
        %2057 = vmatprep.subr.bf16.mxu0 0
        %2058 = vmatpush1.bf16.xpose.msra.mxu0 0
        %2059 = vmatprep.subr.bf16.mxu0 0
        %2060 = vmatpush1.bf16.xpose.msra.mxu0 0
        %2061 = vmatprep.mubr.bf16.mxu0 0
        %2062 = vmatmul.mubr.bf16.gmra.mrb[0].mxu0 %v2024
        %v2063 = vpop.f32.mrb[0].mxu0
        %v2064 = vadd.f32 %v1235, %v2063
        %v2065 = vpop.f32.mrb[0].mxu0
        %v2066 = vpop.f32.mrb[0].mxu0
        %v2067 = vpop.f32.mrb[0].mxu0
        %2068 = vdwg.mxu0
        %v2069 = vsel %vm1884, %v1926, -inf
        %2070 = vmax.xlane.f32.xlu0 %v2069
        %v2071 = vpop.xlane.xlu0 %2070
        %v2072 = vsel %vm1884, %v1972, -inf
        %2073 = vmax.xlane.f32.xlu0 %v2072
        %v2074 = vpop.xlane.xlu0 %2073
        %v2075 = vsel %vm1884, %v2018, -inf
        %2076 = vmax.xlane.f32.xlu0 %v2075
        %v2077 = vpop.xlane.xlu0 %2076
        %v2078 = vsel %vm1884, %v2064, -inf
        %2079 = vmax.xlane.f32.xlu0 %v2078
        %v2080 = vpop.xlane.xlu0 %2079
        %v2081 = vsub.f32 %v1926, %v2071
        %v2082 = vsub.f32 %v1972, %v2074
        %v2083 = vsub.f32 %v2018, %v2077
        %v2084 = vsub.f32 %v2064, %v2080
        %v2085 = vmul.f32 %v2081, 1.442695
        %v2086 = vpow.pop %v2085
        %v2087 = vmul.f32 %v2082, 1.442695
        %v2088 = vpow.pop %v2087
        %v2089 = vmul.f32 %v2083, 1.442695
        %v2090 = vpow.pop %v2089
        %v2091 = vmul.f32 %v2084, 1.442695
        %v2092 = vpow.pop %v2091
        %v2093 = vsel %vm1884, %v2086, 0.0
        %2094 = vadd.xlane.f32.xlu0 %v2093
        %v2095 = vpop.xlane.xlu0 %2094
        %v2096 = vsel %vm1884, %v2088, 0.0
        %2097 = vadd.xlane.f32.xlu0 %v2096
        %v2098 = vpop.xlane.xlu0 %2097
        %v2099 = vsel %vm1884, %v2090, 0.0
        %2100 = vadd.xlane.f32.xlu0 %v2099
        %v2101 = vpop.xlane.xlu0 %2100
        %v2102 = vsel %vm1884, %v2092, 0.0
        %2103 = vadd.xlane.f32.xlu0 %v2102
        %v2104 = vpop.xlane.xlu0 %2103
        %v2105 = vrcp.pop %v2095
        %v2106 = vrcp.pop %v2098
        %v2107 = vrcp.pop %v2101
        %v2108 = vrcp.pop %v2104
        %v2109 = vmul.f32 %v2086, %v2105
        %v2110 = vmul.f32 %v2088, %v2106
        %v2111 = vmul.f32 %v2090, %v2107
        %v2112 = vmul.f32 %v2092, %v2108
        %v2113 = vpack.c.bf16 %v2109, %v2109
        %v2114 = vpack.c.bf16 %v2110, %v2110
        %v2115 = vpack.c.bf16 %v2111, %v2111
        %v2116 = vpack.c.bf16 %v2112, %v2112
        %v2117 = vpack.c.bf16 %v1872, %v1872
        %v2118 = vpack.c.bf16 %v1873, %v1873
        %v2119 = vpack.c.bf16 %v1874, %v1874
        %v2120 = vpack.c.bf16 %v1875, %v1875
        %v2122 = vsel %vm1884, %v2113, 0
        %vm2124 = vcmask 1043456
        %v2126 = vsel %vm2124, %v2117, 0
        %2128 = vmatprep.subr.bf16.mxu0 0
        %2129 = vmatpush1.bf16.msra.mxu0 %v2126
        %2130 = vmatprep.subr.bf16.mxu0 0
        %2131 = vmatpush1.bf16.msra.mxu0 0
        %2132 = vmatprep.subr.bf16.mxu0 0
        %2133 = vmatpush1.bf16.msra.mxu0 0
        %2134 = vmatprep.subr.bf16.mxu0 0
        %2135 = vmatpush1.bf16.msra.mxu0 0
        %2136 = vmatprep.subr.bf16.mxu0 0
        %2137 = vmatpush1.bf16.msra.mxu0 0
        %2138 = vmatprep.subr.bf16.mxu0 0
        %2139 = vmatpush1.bf16.msra.mxu0 0
        %2140 = vmatprep.subr.bf16.mxu0 0
        %2141 = vmatpush1.bf16.msra.mxu0 0
        %2142 = vmatprep.subr.bf16.mxu0 0
        %2143 = vmatpush1.bf16.msra.mxu0 0
        %2144 = vmatprep.subr.bf16.mxu0 0
        %2145 = vmatpush1.bf16.msra.mxu0 0
        %2146 = vmatprep.subr.bf16.mxu0 0
        %2147 = vmatpush1.bf16.msra.mxu0 0
        %2148 = vmatprep.subr.bf16.mxu0 0
        %2149 = vmatpush1.bf16.msra.mxu0 0
        %2150 = vmatprep.subr.bf16.mxu0 0
        %2151 = vmatpush1.bf16.msra.mxu0 0
        %2152 = vmatprep.subr.bf16.mxu0 0
        %2153 = vmatpush1.bf16.msra.mxu0 0
        %2154 = vmatprep.subr.bf16.mxu0 0
        %2155 = vmatpush1.bf16.msra.mxu0 0
        %2156 = vmatprep.subr.bf16.mxu0 0
        %2157 = vmatpush1.bf16.msra.mxu0 0
        %2158 = vmatprep.subr.bf16.mxu0 0
        %2159 = vmatpush1.bf16.msra.mxu0 0
        %2160 = vmatprep.mubr.bf16.mxu0 0
        %2161 = vmatmul.mubr.bf16.gmra.mrb[0].mxu0 %v2122
        %v2162 = vpop.f32.mrb[0].mxu0
        %v2163 = vadd.f32 0.0, %v2162
        %v2164 = vpop.f32.mrb[0].mxu0
        %v2165 = vpop.f32.mrb[0].mxu0
        %v2166 = vpop.f32.mrb[0].mxu0
        %2167 = vdwg.mxu0
        %v2169 = vsel %vm1884, %v2114, 0
        %v2172 = vsel %vm2124, %v2118, 0
        %2174 = vmatprep.subr.bf16.mxu0 0
        %2175 = vmatpush1.bf16.msra.mxu0 %v2172
        %2176 = vmatprep.subr.bf16.mxu0 0
        %2177 = vmatpush1.bf16.msra.mxu0 0
        %2178 = vmatprep.subr.bf16.mxu0 0
        %2179 = vmatpush1.bf16.msra.mxu0 0
        %2180 = vmatprep.subr.bf16.mxu0 0
        %2181 = vmatpush1.bf16.msra.mxu0 0
        %2182 = vmatprep.subr.bf16.mxu0 0
        %2183 = vmatpush1.bf16.msra.mxu0 0
        %2184 = vmatprep.subr.bf16.mxu0 0
        %2185 = vmatpush1.bf16.msra.mxu0 0
        %2186 = vmatprep.subr.bf16.mxu0 0
        %2187 = vmatpush1.bf16.msra.mxu0 0
        %2188 = vmatprep.subr.bf16.mxu0 0
        %2189 = vmatpush1.bf16.msra.mxu0 0
        %2190 = vmatprep.subr.bf16.mxu0 0
        %2191 = vmatpush1.bf16.msra.mxu0 0
        %2192 = vmatprep.subr.bf16.mxu0 0
        %2193 = vmatpush1.bf16.msra.mxu0 0
        %2194 = vmatprep.subr.bf16.mxu0 0
        %2195 = vmatpush1.bf16.msra.mxu0 0
        %2196 = vmatprep.subr.bf16.mxu0 0
        %2197 = vmatpush1.bf16.msra.mxu0 0
        %2198 = vmatprep.subr.bf16.mxu0 0
        %2199 = vmatpush1.bf16.msra.mxu0 0
        %2200 = vmatprep.subr.bf16.mxu0 0
        %2201 = vmatpush1.bf16.msra.mxu0 0
        %2202 = vmatprep.subr.bf16.mxu0 0
        %2203 = vmatpush1.bf16.msra.mxu0 0
        %2204 = vmatprep.subr.bf16.mxu0 0
        %2205 = vmatpush1.bf16.msra.mxu0 0
        %2206 = vmatprep.mubr.bf16.mxu0 0
        %2207 = vmatmul.mubr.bf16.gmra.mrb[0].mxu0 %v2169
        %v2208 = vpop.f32.mrb[0].mxu0
        %v2209 = vadd.f32 0.0, %v2208
        %v2210 = vpop.f32.mrb[0].mxu0
        %v2211 = vpop.f32.mrb[0].mxu0
        %v2212 = vpop.f32.mrb[0].mxu0
        %2213 = vdwg.mxu0
        %v2215 = vsel %vm1884, %v2115, 0
        %v2218 = vsel %vm2124, %v2119, 0
        %2220 = vmatprep.subr.bf16.mxu0 0
        %2221 = vmatpush1.bf16.msra.mxu0 %v2218
        %2222 = vmatprep.subr.bf16.mxu0 0
        %2223 = vmatpush1.bf16.msra.mxu0 0
        %2224 = vmatprep.subr.bf16.mxu0 0
        %2225 = vmatpush1.bf16.msra.mxu0 0
        %2226 = vmatprep.subr.bf16.mxu0 0
        %2227 = vmatpush1.bf16.msra.mxu0 0
        %2228 = vmatprep.subr.bf16.mxu0 0
        %2229 = vmatpush1.bf16.msra.mxu0 0
        %2230 = vmatprep.subr.bf16.mxu0 0
        %2231 = vmatpush1.bf16.msra.mxu0 0
        %2232 = vmatprep.subr.bf16.mxu0 0
        %2233 = vmatpush1.bf16.msra.mxu0 0
        %2234 = vmatprep.subr.bf16.mxu0 0
        %2235 = vmatpush1.bf16.msra.mxu0 0
        %2236 = vmatprep.subr.bf16.mxu0 0
        %2237 = vmatpush1.bf16.msra.mxu0 0
        %2238 = vmatprep.subr.bf16.mxu0 0
        %2239 = vmatpush1.bf16.msra.mxu0 0
        %2240 = vmatprep.subr.bf16.mxu0 0
        %2241 = vmatpush1.bf16.msra.mxu0 0
        %2242 = vmatprep.subr.bf16.mxu0 0
        %2243 = vmatpush1.bf16.msra.mxu0 0
        %2244 = vmatprep.subr.bf16.mxu0 0
        %2245 = vmatpush1.bf16.msra.mxu0 0
        %2246 = vmatprep.subr.bf16.mxu0 0
        %2247 = vmatpush1.bf16.msra.mxu0 0
        %2248 = vmatprep.subr.bf16.mxu0 0
        %2249 = vmatpush1.bf16.msra.mxu0 0
        %2250 = vmatprep.subr.bf16.mxu0 0
        %2251 = vmatpush1.bf16.msra.mxu0 0
        %2252 = vmatprep.mubr.bf16.mxu0 0
        %2253 = vmatmul.mubr.bf16.gmra.mrb[0].mxu0 %v2215
        %v2254 = vpop.f32.mrb[0].mxu0
        %v2255 = vadd.f32 0.0, %v2254
        %v2256 = vpop.f32.mrb[0].mxu0
        %v2257 = vpop.f32.mrb[0].mxu0
        %v2258 = vpop.f32.mrb[0].mxu0
        %2259 = vdwg.mxu0
        %v2261 = vsel %vm1884, %v2116, 0
        %v2264 = vsel %vm2124, %v2120, 0
        %2266 = vmatprep.subr.bf16.mxu0 0
        %2267 = vmatpush1.bf16.msra.mxu0 %v2264
        %2268 = vmatprep.subr.bf16.mxu0 0
        %2269 = vmatpush1.bf16.msra.mxu0 0
        %2270 = vmatprep.subr.bf16.mxu0 0
        %2271 = vmatpush1.bf16.msra.mxu0 0
        %2272 = vmatprep.subr.bf16.mxu0 0
        %2273 = vmatpush1.bf16.msra.mxu0 0
        %2274 = vmatprep.subr.bf16.mxu0 0
        %2275 = vmatpush1.bf16.msra.mxu0 0
        %2276 = vmatprep.subr.bf16.mxu0 0
        %2277 = vmatpush1.bf16.msra.mxu0 0
        %2278 = vmatprep.subr.bf16.mxu0 0
        %2279 = vmatpush1.bf16.msra.mxu0 0
        %2280 = vmatprep.subr.bf16.mxu0 0
        %2281 = vmatpush1.bf16.msra.mxu0 0
        %2282 = vmatprep.subr.bf16.mxu0 0
        %2283 = vmatpush1.bf16.msra.mxu0 0
        %2284 = vmatprep.subr.bf16.mxu0 0
        %2285 = vmatpush1.bf16.msra.mxu0 0
        %2286 = vmatprep.subr.bf16.mxu0 0
        %2287 = vmatpush1.bf16.msra.mxu0 0
        %2288 = vmatprep.subr.bf16.mxu0 0
        %2289 = vmatpush1.bf16.msra.mxu0 0
        %2290 = vmatprep.subr.bf16.mxu0 0
        %2291 = vmatpush1.bf16.msra.mxu0 0
        %2292 = vmatprep.subr.bf16.mxu0 0
        %2293 = vmatpush1.bf16.msra.mxu0 0
        %2294 = vmatprep.subr.bf16.mxu0 0
        %2295 = vmatpush1.bf16.msra.mxu0 0
        %2296 = vmatprep.subr.bf16.mxu0 0
        %2297 = vmatpush1.bf16.msra.mxu0 0
        %2298 = vmatprep.mubr.bf16.mxu0 0
        %2299 = vmatmul.mubr.bf16.gmra.mrb[0].mxu0 %v2261
        %v2300 = vpop.f32.mrb[0].mxu0
        %v2301 = vadd.f32 0.0, %v2300
        %v2302 = vpop.f32.mrb[0].mxu0
        %v2303 = vpop.f32.mrb[0].mxu0
        %v2304 = vpop.f32.mrb[0].mxu0
        %2305 = vdwg.mxu0
        %v2306 = vcombine.low %v2163, %v2255
        %v2307 = vcombine.high %v2163, %v2255
        %v2309 = vunpack.c.l.s4 1983009808
        %v2310 = vunpack.c.0.s8 %v2309
        %v2311 = vlaneseq
        %v2312 = vshrl.u32 %v2311, 7
        %v2313 = vsub.s32 %v2310, %v2312
        %v2314 = vrot.slane %v2306, %v2313
        %v2316 = vunpack.c.l.s4 1983009808
        %v2317 = vunpack.c.0.s8 %v2316
        %v2318 = vlaneseq
        %v2319 = vshrl.u32 %v2318, 7
        %v2320 = vsub.s32 %v2317, %v2319
        %v2321 = vrot.slane %v2307, %v2320
        %v2322 = vcombine.low %v2209, %v2301
        %v2323 = vcombine.high %v2209, %v2301
        %v2325 = vunpack.c.l.s4 1983009808
        %v2326 = vunpack.c.0.s8 %v2325
        %v2327 = vlaneseq
        %v2328 = vshrl.u32 %v2327, 7
        %v2329 = vsub.s32 %v2326, %v2328
        %v2330 = vrot.slane %v2322, %v2329
        %v2332 = vunpack.c.l.s4 1983009808
        %v2333 = vunpack.c.0.s8 %v2332
        %v2334 = vlaneseq
        %v2335 = vshrl.u32 %v2334, 7
        %v2336 = vsub.s32 %v2333, %v2335
        %v2337 = vrot.slane %v2323, %v2336
        %v2338 = vcombine.low %v2314, %v2330
        %v2339 = vcombine.high %v2314, %v2330
        %v2341 = vunpack.c.l.s4 1934713408
        %v2342 = vunpack.c.0.s8 %v2341
        %v2343 = vlaneseq
        %v2344 = vshrl.u32 %v2343, 7
        %v2345 = vsub.s32 %v2342, %v2344
        %v2346 = vrot.slane %v2338, %v2345
        %v2348 = vunpack.c.l.s4 1934713408
        %v2349 = vunpack.c.0.s8 %v2348
        %v2350 = vlaneseq
        %v2351 = vshrl.u32 %v2350, 7
        %v2352 = vsub.s32 %v2349, %v2351
        %v2353 = vrot.slane %v2339, %v2352
        %v2354 = vcombine.low %v2321, %v2337
        %v2355 = vcombine.high %v2321, %v2337
        %v2357 = vunpack.c.l.s4 1934713408
        %v2358 = vunpack.c.0.s8 %v2357
        %v2359 = vlaneseq
        %v2360 = vshrl.u32 %v2359, 7
        %v2361 = vsub.s32 %v2358, %v2360
        %v2362 = vrot.slane %v2354, %v2361
        %v2364 = vunpack.c.l.s4 1934713408
        %v2365 = vunpack.c.0.s8 %v2364
        %v2366 = vlaneseq
        %v2367 = vshrl.u32 %v2366, 7
        %v2368 = vsub.s32 %v2365, %v2367
        %v2369 = vrot.slane %v2355, %v2368
        %v2370 = vcombine.high %v2346, 0.0
        %v2371 = vcombine.high %v2353, 0.0
        %v2372 = vcombine.high %v2362, 0.0
        %v2373 = vcombine.high %v2369, 0.0
        %v2374 = vcombine.low %v2346, %v2353
        %v2376 = vunpack.c.l.s4 1983009808
        %v2377 = vunpack.c.0.s8 %v2376
        %v2378 = vlaneseq
        %v2379 = vshrl.u32 %v2378, 7
        %v2380 = vsub.s32 %v2377, %v2379
        %v2381 = vrot.slane %v2374, %v2380
        %v2382 = vcombine.low %v2370, %v2371
        %v2384 = vunpack.c.l.s4 1983009808
        %v2385 = vunpack.c.0.s8 %v2384
        %v2386 = vlaneseq
        %v2387 = vshrl.u32 %v2386, 7
        %v2388 = vsub.s32 %v2385, %v2387
        %v2389 = vrot.slane %v2382, %v2388
        %v2390 = vcombine.low %v2362, %v2369
        %v2392 = vunpack.c.l.s4 1983009808
        %v2393 = vunpack.c.0.s8 %v2392
        %v2394 = vlaneseq
        %v2395 = vshrl.u32 %v2394, 7
        %v2396 = vsub.s32 %v2393, %v2395
        %v2397 = vrot.slane %v2390, %v2396
        %v2398 = vcombine.low %v2372, %v2373
        %v2400 = vunpack.c.l.s4 1983009808
        %v2401 = vunpack.c.0.s8 %v2400
        %v2402 = vlaneseq
        %v2403 = vshrl.u32 %v2402, 7
        %v2404 = vsub.s32 %v2401, %v2403
        %v2405 = vrot.slane %v2398, %v2404
        %v2406 = vcombine.low %v2381, %v2389
        %v2407 = vcombine.high %v2381, %v2389
        %v2409 = vunpack.c.l.s4 1934713408
        %v2410 = vunpack.c.0.s8 %v2409
        %v2411 = vlaneseq
        %v2412 = vshrl.u32 %v2411, 7
        %v2413 = vsub.s32 %v2410, %v2412
        %v2414 = vrot.slane %v2406, %v2413
        %v2416 = vunpack.c.l.s4 1934713408
        %v2417 = vunpack.c.0.s8 %v2416
        %v2418 = vlaneseq
        %v2419 = vshrl.u32 %v2418, 7
        %v2420 = vsub.s32 %v2417, %v2419
        %v2421 = vrot.slane %v2407, %v2420
        %v2422 = vcombine.low %v2397, %v2405
        %v2423 = vcombine.high %v2397, %v2405
        %v2425 = vunpack.c.l.s4 1934713408
        %v2426 = vunpack.c.0.s8 %v2425
        %v2427 = vlaneseq
        %v2428 = vshrl.u32 %v2427, 7
        %v2429 = vsub.s32 %v2426, %v2428
        %v2430 = vrot.slane %v2422, %v2429
        %v2432 = vunpack.c.l.s4 1934713408
        %v2433 = vunpack.c.0.s8 %v2432
        %v2434 = vlaneseq
        %v2435 = vshrl.u32 %v2434, 7
        %v2436 = vsub.s32 %v2433, %v2435
        %v2437 = vrot.slane %v2423, %v2436
        %v2438 = vcombine.low %v2414, %v2430
        %v2439 = vcombine.high %v2414, %v2430
        %v2440 = vcombine.low %v2421, %v2437
        %v2441 = vcombine.high %v2421, %v2437
        %2443 = vrot.lane.b32.xlu0 %v2439, 8
        %v2444 = vpop.permute.xlu0 %2443
        %2447 = vrot.lane.b32.xlu0 %v2440, 16
        %v2448 = vpop.permute.xlu0 %2447
        %2451 = vrot.lane.b32.xlu0 %v2441, 24
        %v2452 = vpop.permute.xlu0 %2451
        %v2454 = vsel %vm1884, %v2438, %v2444
        %vm2455 = vcmask 130048
        %v2456 = vsel %vm2455, %v2454, %v2448
        %vm2457 = vcmask 195584
        %v2458 = vsel %vm2457, %v2456, %v2452
        %v2459 = vpack.c.bf16 %v2458, %v2458
        %v2461 = vlaneseq
        %v2462 = vshrl.u32 %v2461, 7
        %v2463 = vsub.s32 0, %v2462
        %v2464 = vrot.slane %v1257, %v2463
        %v2470 = vunpack.c.l.b16 %v1253
        %v2471 = vunpack.c.l.b16 %v1254
        %v2472 = vunpack.c.l.b16 %v1255
        %v2473 = vunpack.c.l.b16 %v1256
        %v2474 = vpack.c.b16 %v2471, %v2470
        %v2475 = vpack.c.b16 %v2473, %v2472
        %v2479 = vsel %vm1277, %v2459, 0
        %2481 = vmatprep.subr.bf16.mxu0 0
        %2482 = vmatpush1.bf16.msra.mxu0 %v2474
        %2483 = vmatprep.subr.bf16.mxu0 0
        %2484 = vmatpush1.bf16.msra.mxu0 %v2475
        %2485 = vmatprep.subr.bf16.mxu0 0
        %2486 = vmatpush1.bf16.msra.mxu0 0
        %2487 = vmatprep.subr.bf16.mxu0 0
        %2488 = vmatpush1.bf16.msra.mxu0 0
        %2489 = vmatprep.subr.bf16.mxu0 0
        %2490 = vmatpush1.bf16.msra.mxu0 0
        %2491 = vmatprep.subr.bf16.mxu0 0
        %2492 = vmatpush1.bf16.msra.mxu0 0
        %2493 = vmatprep.subr.bf16.mxu0 0
        %2494 = vmatpush1.bf16.msra.mxu0 0
        %2495 = vmatprep.subr.bf16.mxu0 0
        %2496 = vmatpush1.bf16.msra.mxu0 0
        %2497 = vmatprep.subr.bf16.mxu0 0
        %2498 = vmatpush1.bf16.msra.mxu0 0
        %2499 = vmatprep.subr.bf16.mxu0 0
        %2500 = vmatpush1.bf16.msra.mxu0 0
        %2501 = vmatprep.subr.bf16.mxu0 0
        %2502 = vmatpush1.bf16.msra.mxu0 0
        %2503 = vmatprep.subr.bf16.mxu0 0
        %2504 = vmatpush1.bf16.msra.mxu0 0
        %2505 = vmatprep.subr.bf16.mxu0 0
        %2506 = vmatpush1.bf16.msra.mxu0 0
        %2507 = vmatprep.subr.bf16.mxu0 0
        %2508 = vmatpush1.bf16.msra.mxu0 0
        %2509 = vmatprep.subr.bf16.mxu0 0
        %2510 = vmatpush1.bf16.msra.mxu0 0
        %2511 = vmatprep.subr.bf16.mxu0 0
        %2512 = vmatpush1.bf16.msra.mxu0 0
        %2513 = vmatprep.mubr.bf16.mxu0 0
        %2514 = vmatmul.mubr.bf16.gmra.mrb[0].mxu0 %v2479
        %v2515 = vpop.f32.mrb[0].mxu0
        %v2516 = vadd.f32 %v2464, %v2515
        %v2517 = vpop.f32.mrb[0].mxu0
        %v2518 = vpop.f32.mrb[0].mxu0
        %v2519 = vpop.f32.mrb[0].mxu0
        %2520 = vdwg.mxu0
        %v2521 = vadd.f32 %v1229, %v2516
        %v2522 = vld [vmem:[#allocation17] sm:$0x1]
        %v2523 = vld [vmem:[#allocation19] sm:$0x1]
        %v2524 = vsel %vm1277, %v2521, 0.0
        %2525 = vadd.xlane.f32.xlu0 %v2524
        %v2526 = vpop.xlane.xlu0 %2525
        %v2527 = vrcp.pop 32.0
        %v2528 = vmul.f32 %v2526, %v2527
        %v2529 = vsub.f32 %v2521, %v2528
        %v2530 = vmul.f32 %v2529, %v2529
        %v2531 = vsel %vm1277, %v2530, 0.0
        %2532 = vadd.xlane.f32.xlu0 %v2531
        %v2533 = vpop.xlane.xlu0 %2532
        %v2534 = vmul.f32 %v2533, %v2527
        %v2535 = vadd.f32 %v2534, 1e-05
        %v2536 = vrsqrt.pop %v2535
        %v2537 = vmul.f32 %v2529, %v2536
        %v2539 = vlaneseq
        %v2540 = vshrl.u32 %v2539, 7
        %v2541 = vsub.s32 0, %v2540
        %v2542 = vrot.slane %v2522, %v2541
        %v2544 = vmul.f32 %v2537, %v2542
        %v2546 = vlaneseq
        %v2547 = vshrl.u32 %v2546, 7
        %v2548 = vsub.s32 0, %v2547
        %v2549 = vrot.slane %v2523, %v2548
        %v2551 = vadd.f32 %v2544, %v2549
        %v2552 = vld [vmem:[%s29] sm:$0xf]
        %v2553 = vld [vmem:[%s29 + $0x4] sm:$0xf]
        %v2554 = vld [vmem:[%s29 + $0x8] sm:$0xf]
        %v2555 = vld [vmem:[%s29 + $0xc] sm:$0xf]
        %v2556 = vld [vmem:[#allocation20] sm:$0x1]
        %v2557 = vld [vmem:[#allocation22] sm:$0xf]
        %v2558 = vld [vmem:[#allocation22 + $0x4] sm:$0xf]
        %v2559 = vld [vmem:[#allocation22 + $0x8] sm:$0xf]
        %v2560 = vld [vmem:[#allocation22 + $0xc] sm:$0xf]
        %v2561 = vld [vmem:[#allocation23] sm:$0x1]
        %v2562 = vld [vmem:[%s37] sm:$0xf]
        %v2563 = vld [vmem:[%s37 + $0x4] sm:$0xf]
        %v2564 = vld [vmem:[%s37 + $0x8] sm:$0xf]
        %v2565 = vld [vmem:[%s37 + $0xc] sm:$0xf]
        %v2566 = vld [vmem:[%s39] sm:$0x1]
        %v2567 = vld [vmem:[#allocation25] sm:$0xf]
        %v2568 = vld [vmem:[#allocation25 + $0x4] sm:$0xf]
        %v2569 = vld [vmem:[#allocation25 + $0x8] sm:$0xf]
        %v2570 = vld [vmem:[#allocation25 + $0xc] sm:$0xf]
        %v2571 = vld [vmem:[%s43] sm:$0x1]
        %v2572 = vpack.c.bf16 %v2551, %v2551
        %v2573 = vpack.c.bf16 %v1231, %v1230
        %v2575 = vlaneseq
        %v2576 = vshrl.u32 %v2575, 7
        %v2577 = vsub.s32 0, %v2576
        %v2578 = vrot.slane %v2556, %v2577
        %v2584 = vunpack.c.l.b16 %v2552
        %v2585 = vunpack.c.l.b16 %v2553
        %v2586 = vunpack.c.l.b16 %v2554
        %v2587 = vunpack.c.l.b16 %v2555
        %v2588 = vpack.c.b16 %v2585, %v2584
        %v2589 = vpack.c.b16 %v2587, %v2586
        %v2593 = vsel %vm1277, %v2572, 0
        %2595 = vmatprep.subr.bf16.mxu0 0
        %2596 = vmatpush1.bf16.msra.mxu0 %v2588
        %2597 = vmatprep.subr.bf16.mxu0 0
        %2598 = vmatpush1.bf16.msra.mxu0 %v2589
        %2599 = vmatprep.subr.bf16.mxu0 0
        %2600 = vmatpush1.bf16.msra.mxu0 0
        %2601 = vmatprep.subr.bf16.mxu0 0
        %2602 = vmatpush1.bf16.msra.mxu0 0
        %2603 = vmatprep.subr.bf16.mxu0 0
        %2604 = vmatpush1.bf16.msra.mxu0 0
        %2605 = vmatprep.subr.bf16.mxu0 0
        %2606 = vmatpush1.bf16.msra.mxu0 0
        %2607 = vmatprep.subr.bf16.mxu0 0
        %2608 = vmatpush1.bf16.msra.mxu0 0
        %2609 = vmatprep.subr.bf16.mxu0 0
        %2610 = vmatpush1.bf16.msra.mxu0 0
        %2611 = vmatprep.subr.bf16.mxu0 0
        %2612 = vmatpush1.bf16.msra.mxu0 0
        %2613 = vmatprep.subr.bf16.mxu0 0
        %2614 = vmatpush1.bf16.msra.mxu0 0
        %2615 = vmatprep.subr.bf16.mxu0 0
        %2616 = vmatpush1.bf16.msra.mxu0 0
        %2617 = vmatprep.subr.bf16.mxu0 0
        %2618 = vmatpush1.bf16.msra.mxu0 0
        %2619 = vmatprep.subr.bf16.mxu0 0
        %2620 = vmatpush1.bf16.msra.mxu0 0
        %2621 = vmatprep.subr.bf16.mxu0 0
        %2622 = vmatpush1.bf16.msra.mxu0 0
        %2623 = vmatprep.subr.bf16.mxu0 0
        %2624 = vmatpush1.bf16.msra.mxu0 0
        %2625 = vmatprep.subr.bf16.mxu0 0
        %2626 = vmatpush1.bf16.msra.mxu0 0
        %2627 = vmatprep.mubr.bf16.mxu0 0
        %2628 = vmatmul.mubr.bf16.gmra.mrb[0].mxu0 %v2593
        %v2629 = vpop.f32.mrb[0].mxu0
        %v2630 = vadd.f32 %v2578, %v2629
        %v2631 = vpop.f32.mrb[0].mxu0
        %v2632 = vpop.f32.mrb[0].mxu0
        %v2633 = vpop.f32.mrb[0].mxu0
        %2634 = vdwg.mxu0
        %v2636 = vlaneseq
        %v2637 = vshrl.u32 %v2636, 7
        %v2638 = vsub.s32 0, %v2637
        %v2639 = vrot.slane %v2561, %v2638
        %v2645 = vunpack.c.l.b16 %v2557
        %v2646 = vunpack.c.l.b16 %v2558
        %v2647 = vunpack.c.l.b16 %v2559
        %v2648 = vunpack.c.l.b16 %v2560
        %v2649 = vpack.c.b16 %v2646, %v2645
        %v2650 = vpack.c.b16 %v2648, %v2647
        %v2654 = vsel %vm1277, %v2573, 0
        %2656 = vmatprep.subr.bf16.mxu0 0
        %2657 = vmatpush1.bf16.msra.mxu0 %v2649
        %2658 = vmatprep.subr.bf16.mxu0 0
        %2659 = vmatpush1.bf16.msra.mxu0 %v2650
        %2660 = vmatprep.subr.bf16.mxu0 0
        %2661 = vmatpush1.bf16.msra.mxu0 0
        %2662 = vmatprep.subr.bf16.mxu0 0
        %2663 = vmatpush1.bf16.msra.mxu0 0
        %2664 = vmatprep.subr.bf16.mxu0 0
        %2665 = vmatpush1.bf16.msra.mxu0 0
        %2666 = vmatprep.subr.bf16.mxu0 0
        %2667 = vmatpush1.bf16.msra.mxu0 0
        %2668 = vmatprep.subr.bf16.mxu0 0
        %2669 = vmatpush1.bf16.msra.mxu0 0
        %2670 = vmatprep.subr.bf16.mxu0 0
        %2671 = vmatpush1.bf16.msra.mxu0 0
        %2672 = vmatprep.subr.bf16.mxu0 0
        %2673 = vmatpush1.bf16.msra.mxu0 0
        %2674 = vmatprep.subr.bf16.mxu0 0
        %2675 = vmatpush1.bf16.msra.mxu0 0
        %2676 = vmatprep.subr.bf16.mxu0 0
        %2677 = vmatpush1.bf16.msra.mxu0 0
        %2678 = vmatprep.subr.bf16.mxu0 0
        %2679 = vmatpush1.bf16.msra.mxu0 0
        %2680 = vmatprep.subr.bf16.mxu0 0
        %2681 = vmatpush1.bf16.msra.mxu0 0
        %2682 = vmatprep.subr.bf16.mxu0 0
        %2683 = vmatpush1.bf16.msra.mxu0 0
        %2684 = vmatprep.subr.bf16.mxu0 0
        %2685 = vmatpush1.bf16.msra.mxu0 0
        %2686 = vmatprep.subr.bf16.mxu0 0
        %2687 = vmatpush1.bf16.msra.mxu0 0
        %2688 = vmatprep.mubr.bf16.mxu0 0
        %2689 = vmatmul.mubr.bf16.gmra.mrb[0].mxu0 %v2654
        %v2690 = vpop.f32.mrb[0].mxu0
        %v2691 = vadd.f32 %v2639, %v2690
        %v2692 = vpop.f32.mrb[0].mxu0
        %v2693 = vpop.f32.mrb[0].mxu0
        %v2694 = vadd.f32 %v2639, %v2693
        %v2695 = vpop.f32.mrb[0].mxu0
        %2696 = vdwg.mxu0
        %v2698 = vlaneseq
        %v2699 = vshrl.u32 %v2698, 7
        %v2700 = vsub.s32 0, %v2699
        %v2701 = vrot.slane %v2566, %v2700
        %v2707 = vunpack.c.l.b16 %v2562
        %v2708 = vunpack.c.l.b16 %v2563
        %v2709 = vunpack.c.l.b16 %v2564
        %v2710 = vunpack.c.l.b16 %v2565
        %v2711 = vpack.c.b16 %v2708, %v2707
        %v2712 = vpack.c.b16 %v2710, %v2709
        %2715 = vmatprep.subr.bf16.mxu0 0
        %2716 = vmatpush1.bf16.msra.mxu0 %v2711
        %2717 = vmatprep.subr.bf16.mxu0 0
        %2718 = vmatpush1.bf16.msra.mxu0 %v2712
        %2719 = vmatprep.subr.bf16.mxu0 0
        %2720 = vmatpush1.bf16.msra.mxu0 0
        %2721 = vmatprep.subr.bf16.mxu0 0
        %2722 = vmatpush1.bf16.msra.mxu0 0
        %2723 = vmatprep.subr.bf16.mxu0 0
        %2724 = vmatpush1.bf16.msra.mxu0 0
        %2725 = vmatprep.subr.bf16.mxu0 0
        %2726 = vmatpush1.bf16.msra.mxu0 0
        %2727 = vmatprep.subr.bf16.mxu0 0
        %2728 = vmatpush1.bf16.msra.mxu0 0
        %2729 = vmatprep.subr.bf16.mxu0 0
        %2730 = vmatpush1.bf16.msra.mxu0 0
        %2731 = vmatprep.subr.bf16.mxu0 0
        %2732 = vmatpush1.bf16.msra.mxu0 0
        %2733 = vmatprep.subr.bf16.mxu0 0
        %2734 = vmatpush1.bf16.msra.mxu0 0
        %2735 = vmatprep.subr.bf16.mxu0 0
        %2736 = vmatpush1.bf16.msra.mxu0 0
        %2737 = vmatprep.subr.bf16.mxu0 0
        %2738 = vmatpush1.bf16.msra.mxu0 0
        %2739 = vmatprep.subr.bf16.mxu0 0
        %2740 = vmatpush1.bf16.msra.mxu0 0
        %2741 = vmatprep.subr.bf16.mxu0 0
        %2742 = vmatpush1.bf16.msra.mxu0 0
        %2743 = vmatprep.subr.bf16.mxu0 0
        %2744 = vmatpush1.bf16.msra.mxu0 0
        %2745 = vmatprep.subr.bf16.mxu0 0
        %2746 = vmatpush1.bf16.msra.mxu0 0
        %2747 = vmatprep.mubr.bf16.mxu0 0
        %2748 = vmatmul.mubr.bf16.gmra.mrb[0].mxu0 %v2654
        %v2749 = vpop.f32.mrb[0].mxu0
        %v2750 = vadd.f32 %v2701, %v2749
        %v2751 = vpop.f32.mrb[0].mxu0
        %v2752 = vpop.f32.mrb[0].mxu0
        %v2753 = vadd.f32 %v2701, %v2752
        %v2754 = vpop.f32.mrb[0].mxu0
        %2755 = vdwg.mxu0
        %v2756 = vmul.f32 %v2630, 0.35355338
        %2758 = vrot.lane.b32.xlu0 %v2756, 120
        %v2759 = vpop.permute.xlu0 %2758
        %2761 = vrot.lane.b32.xlu0 %v2756, 112
        %v2762 = vpop.permute.xlu0 %2761
        %2764 = vrot.lane.b32.xlu0 %v2756, 104
        %v2765 = vpop.permute.xlu0 %2764
        %v2767 = vcombine.low %v2756, %v2762
        %v2768 = vcombine.high %v2756, %v2762
        %v2770 = vunpack.c.l.s4 1983009808
        %v2771 = vunpack.c.0.s8 %v2770
        %v2772 = vlaneseq
        %v2773 = vshrl.u32 %v2772, 7
        %v2774 = vsub.s32 %v2771, %v2773
        %v2775 = vrot.slane %v2767, %v2774
        %v2777 = vunpack.c.l.s4 1983009808
        %v2778 = vunpack.c.0.s8 %v2777
        %v2779 = vlaneseq
        %v2780 = vshrl.u32 %v2779, 7
        %v2781 = vsub.s32 %v2778, %v2780
        %v2782 = vrot.slane %v2768, %v2781
        %v2783 = vcombine.low %v2759, %v2765
        %v2784 = vcombine.high %v2759, %v2765
        %v2786 = vunpack.c.l.s4 1983009808
        %v2787 = vunpack.c.0.s8 %v2786
        %v2788 = vlaneseq
        %v2789 = vshrl.u32 %v2788, 7
        %v2790 = vsub.s32 %v2787, %v2789
        %v2791 = vrot.slane %v2783, %v2790
        %v2793 = vunpack.c.l.s4 1983009808
        %v2794 = vunpack.c.0.s8 %v2793
        %v2795 = vlaneseq
        %v2796 = vshrl.u32 %v2795, 7
        %v2797 = vsub.s32 %v2794, %v2796
        %v2798 = vrot.slane %v2784, %v2797
        %v2799 = vcombine.low %v2775, %v2791
        %v2800 = vcombine.high %v2775, %v2791
        %v2802 = vunpack.c.l.s4 1934713408
        %v2803 = vunpack.c.0.s8 %v2802
        %v2804 = vlaneseq
        %v2805 = vshrl.u32 %v2804, 7
        %v2806 = vsub.s32 %v2803, %v2805
        %v2807 = vrot.slane %v2799, %v2806
        %v2809 = vunpack.c.l.s4 1934713408
        %v2810 = vunpack.c.0.s8 %v2809
        %v2811 = vlaneseq
        %v2812 = vshrl.u32 %v2811, 7
        %v2813 = vsub.s32 %v2810, %v2812
        %v2814 = vrot.slane %v2800, %v2813
        %v2815 = vcombine.low %v2782, %v2798
        %v2816 = vcombine.high %v2782, %v2798
        %v2818 = vunpack.c.l.s4 1934713408
        %v2819 = vunpack.c.0.s8 %v2818
        %v2820 = vlaneseq
        %v2821 = vshrl.u32 %v2820, 7
        %v2822 = vsub.s32 %v2819, %v2821
        %v2823 = vrot.slane %v2815, %v2822
        %v2825 = vunpack.c.l.s4 1934713408
        %v2826 = vunpack.c.0.s8 %v2825
        %v2827 = vlaneseq
        %v2828 = vshrl.u32 %v2827, 7
        %v2829 = vsub.s32 %v2826, %v2828
        %v2830 = vrot.slane %v2816, %v2829
        %v2831 = vcombine.high %v2807, 0.0
        %v2832 = vcombine.high %v2814, 0.0
        %v2833 = vcombine.high %v2823, 0.0
        %v2834 = vcombine.high %v2830, 0.0
        %v2835 = vcombine.low %v2807, %v2814
        %v2837 = vunpack.c.l.s4 1983009808
        %v2838 = vunpack.c.0.s8 %v2837
        %v2839 = vlaneseq
        %v2840 = vshrl.u32 %v2839, 7
        %v2841 = vsub.s32 %v2838, %v2840
        %v2842 = vrot.slane %v2835, %v2841
        %v2843 = vcombine.low %v2831, %v2832
        %v2845 = vunpack.c.l.s4 1983009808
        %v2846 = vunpack.c.0.s8 %v2845
        %v2847 = vlaneseq
        %v2848 = vshrl.u32 %v2847, 7
        %v2849 = vsub.s32 %v2846, %v2848
        %v2850 = vrot.slane %v2843, %v2849
        %v2851 = vcombine.low %v2823, %v2830
        %v2853 = vunpack.c.l.s4 1983009808
        %v2854 = vunpack.c.0.s8 %v2853
        %v2855 = vlaneseq
        %v2856 = vshrl.u32 %v2855, 7
        %v2857 = vsub.s32 %v2854, %v2856
        %v2858 = vrot.slane %v2851, %v2857
        %v2859 = vcombine.low %v2833, %v2834
        %v2861 = vunpack.c.l.s4 1983009808
        %v2862 = vunpack.c.0.s8 %v2861
        %v2863 = vlaneseq
        %v2864 = vshrl.u32 %v2863, 7
        %v2865 = vsub.s32 %v2862, %v2864
        %v2866 = vrot.slane %v2859, %v2865
        %v2867 = vcombine.low %v2842, %v2850
        %v2868 = vcombine.high %v2842, %v2850
        %v2870 = vunpack.c.l.s4 1934713408
        %v2871 = vunpack.c.0.s8 %v2870
        %v2872 = vlaneseq
        %v2873 = vshrl.u32 %v2872, 7
        %v2874 = vsub.s32 %v2871, %v2873
        %v2875 = vrot.slane %v2867, %v2874
        %v2877 = vunpack.c.l.s4 1934713408
        %v2878 = vunpack.c.0.s8 %v2877
        %v2879 = vlaneseq
        %v2880 = vshrl.u32 %v2879, 7
        %v2881 = vsub.s32 %v2878, %v2880
        %v2882 = vrot.slane %v2868, %v2881
        %v2883 = vcombine.low %v2858, %v2866
        %v2884 = vcombine.high %v2858, %v2866
        %v2886 = vunpack.c.l.s4 1934713408
        %v2887 = vunpack.c.0.s8 %v2886
        %v2888 = vlaneseq
        %v2889 = vshrl.u32 %v2888, 7
        %v2890 = vsub.s32 %v2887, %v2889
        %v2891 = vrot.slane %v2883, %v2890
        %v2893 = vunpack.c.l.s4 1934713408
        %v2894 = vunpack.c.0.s8 %v2893
        %v2895 = vlaneseq
        %v2896 = vshrl.u32 %v2895, 7
        %v2897 = vsub.s32 %v2894, %v2896
        %v2898 = vrot.slane %v2884, %v2897
        %v2899 = vcombine.low %v2875, %v2891
        %v2900 = vcombine.high %v2875, %v2891
        %v2901 = vcombine.low %v2882, %v2898
        %v2902 = vcombine.high %v2882, %v2898
        %2905 = vrot.lane.b32.xlu0 %v2691, 120
        %v2906 = vpop.permute.xlu0 %2905
        %2907 = vrot.lane.b32.xlu0 %v2694, 120
        %v2908 = vpop.permute.xlu0 %2907
        %2911 = vrot.lane.b32.xlu0 %v2691, 112
        %v2912 = vpop.permute.xlu0 %2911
        %2913 = vrot.lane.b32.xlu0 %v2694, 112
        %v2914 = vpop.permute.xlu0 %2913
        %2917 = vrot.lane.b32.xlu0 %v2691, 104
        %v2918 = vpop.permute.xlu0 %2917
        %2919 = vrot.lane.b32.xlu0 %v2694, 104
        %v2920 = vpop.permute.xlu0 %2919
        %v2923 = vcombine.low %v2691, %v2912
        %v2924 = vcombine.high %v2691, %v2912
        %v2926 = vunpack.c.l.s4 1983009808
        %v2927 = vunpack.c.0.s8 %v2926
        %v2928 = vlaneseq
        %v2929 = vshrl.u32 %v2928, 7
        %v2930 = vsub.s32 %v2927, %v2929
        %v2931 = vrot.slane %v2923, %v2930
        %v2933 = vunpack.c.l.s4 1983009808
        %v2934 = vunpack.c.0.s8 %v2933
        %v2935 = vlaneseq
        %v2936 = vshrl.u32 %v2935, 7
        %v2937 = vsub.s32 %v2934, %v2936
        %v2938 = vrot.slane %v2924, %v2937
        %v2939 = vcombine.low %v2906, %v2918
        %v2940 = vcombine.high %v2906, %v2918
        %v2942 = vunpack.c.l.s4 1983009808
        %v2943 = vunpack.c.0.s8 %v2942
        %v2944 = vlaneseq
        %v2945 = vshrl.u32 %v2944, 7
        %v2946 = vsub.s32 %v2943, %v2945
        %v2947 = vrot.slane %v2939, %v2946
        %v2949 = vunpack.c.l.s4 1983009808
        %v2950 = vunpack.c.0.s8 %v2949
        %v2951 = vlaneseq
        %v2952 = vshrl.u32 %v2951, 7
        %v2953 = vsub.s32 %v2950, %v2952
        %v2954 = vrot.slane %v2940, %v2953
        %v2955 = vcombine.low %v2931, %v2947
        %v2956 = vcombine.high %v2931, %v2947
        %v2958 = vunpack.c.l.s4 1934713408
        %v2959 = vunpack.c.0.s8 %v2958
        %v2960 = vlaneseq
        %v2961 = vshrl.u32 %v2960, 7
        %v2962 = vsub.s32 %v2959, %v2961
        %v2963 = vrot.slane %v2955, %v2962
        %v2965 = vunpack.c.l.s4 1934713408
        %v2966 = vunpack.c.0.s8 %v2965
        %v2967 = vlaneseq
        %v2968 = vshrl.u32 %v2967, 7
        %v2969 = vsub.s32 %v2966, %v2968
        %v2970 = vrot.slane %v2956, %v2969
        %v2971 = vcombine.low %v2938, %v2954
        %v2972 = vcombine.high %v2938, %v2954
        %v2974 = vunpack.c.l.s4 1934713408
        %v2975 = vunpack.c.0.s8 %v2974
        %v2976 = vlaneseq
        %v2977 = vshrl.u32 %v2976, 7
        %v2978 = vsub.s32 %v2975, %v2977
        %v2979 = vrot.slane %v2971, %v2978
        %v2981 = vunpack.c.l.s4 1934713408
        %v2982 = vunpack.c.0.s8 %v2981
        %v2983 = vlaneseq
        %v2984 = vshrl.u32 %v2983, 7
        %v2985 = vsub.s32 %v2982, %v2984
        %v2986 = vrot.slane %v2972, %v2985
        %v2987 = vcombine.high %v2963, 0.0
        %v2988 = vcombine.high %v2970, 0.0
        %v2989 = vcombine.high %v2979, 0.0
        %v2990 = vcombine.high %v2986, 0.0
        %v2991 = vcombine.low %v2694, %v2914
        %v2992 = vcombine.high %v2694, %v2914
        %v2994 = vunpack.c.l.s4 1983009808
        %v2995 = vunpack.c.0.s8 %v2994
        %v2996 = vlaneseq
        %v2997 = vshrl.u32 %v2996, 7
        %v2998 = vsub.s32 %v2995, %v2997
        %v2999 = vrot.slane %v2991, %v2998
        %v3001 = vunpack.c.l.s4 1983009808
        %v3002 = vunpack.c.0.s8 %v3001
        %v3003 = vlaneseq
        %v3004 = vshrl.u32 %v3003, 7
        %v3005 = vsub.s32 %v3002, %v3004
        %v3006 = vrot.slane %v2992, %v3005
        %v3007 = vcombine.low %v2908, %v2920
        %v3008 = vcombine.high %v2908, %v2920
        %v3010 = vunpack.c.l.s4 1983009808
        %v3011 = vunpack.c.0.s8 %v3010
        %v3012 = vlaneseq
        %v3013 = vshrl.u32 %v3012, 7
        %v3014 = vsub.s32 %v3011, %v3013
        %v3015 = vrot.slane %v3007, %v3014
        %v3017 = vunpack.c.l.s4 1983009808
        %v3018 = vunpack.c.0.s8 %v3017
        %v3019 = vlaneseq
        %v3020 = vshrl.u32 %v3019, 7
        %v3021 = vsub.s32 %v3018, %v3020
        %v3022 = vrot.slane %v3008, %v3021
        %v3023 = vcombine.low %v2999, %v3015
        %v3024 = vcombine.high %v2999, %v3015
        %v3026 = vunpack.c.l.s4 1934713408
        %v3027 = vunpack.c.0.s8 %v3026
        %v3028 = vlaneseq
        %v3029 = vshrl.u32 %v3028, 7
        %v3030 = vsub.s32 %v3027, %v3029
        %v3031 = vrot.slane %v3023, %v3030
        %v3033 = vunpack.c.l.s4 1934713408
        %v3034 = vunpack.c.0.s8 %v3033
        %v3035 = vlaneseq
        %v3036 = vshrl.u32 %v3035, 7
        %v3037 = vsub.s32 %v3034, %v3036
        %v3038 = vrot.slane %v3024, %v3037
        %v3039 = vcombine.low %v3006, %v3022
        %v3040 = vcombine.high %v3006, %v3022
        %v3042 = vunpack.c.l.s4 1934713408
        %v3043 = vunpack.c.0.s8 %v3042
        %v3044 = vlaneseq
        %v3045 = vshrl.u32 %v3044, 7
        %v3046 = vsub.s32 %v3043, %v3045
        %v3047 = vrot.slane %v3039, %v3046
        %v3049 = vunpack.c.l.s4 1934713408
        %v3050 = vunpack.c.0.s8 %v3049
        %v3051 = vlaneseq
        %v3052 = vshrl.u32 %v3051, 7
        %v3053 = vsub.s32 %v3050, %v3052
        %v3054 = vrot.slane %v3040, %v3053
        %v3055 = vcombine.high %v3031, 0.0
        %v3056 = vcombine.high %v3038, 0.0
        %v3057 = vcombine.high %v3047, 0.0
        %v3058 = vcombine.high %v3054, 0.0
        %v3059 = vcombine.low %v2963, %v2970
        %v3061 = vunpack.c.l.s4 1983009808
        %v3062 = vunpack.c.0.s8 %v3061
        %v3063 = vlaneseq
        %v3064 = vshrl.u32 %v3063, 7
        %v3065 = vsub.s32 %v3062, %v3064
        %v3066 = vrot.slane %v3059, %v3065
        %v3067 = vcombine.low %v2987, %v2988
        %v3069 = vunpack.c.l.s4 1983009808
        %v3070 = vunpack.c.0.s8 %v3069
        %v3071 = vlaneseq
        %v3072 = vshrl.u32 %v3071, 7
        %v3073 = vsub.s32 %v3070, %v3072
        %v3074 = vrot.slane %v3067, %v3073
        %v3075 = vcombine.low %v2979, %v2986
        %v3077 = vunpack.c.l.s4 1983009808
        %v3078 = vunpack.c.0.s8 %v3077
        %v3079 = vlaneseq
        %v3080 = vshrl.u32 %v3079, 7
        %v3081 = vsub.s32 %v3078, %v3080
        %v3082 = vrot.slane %v3075, %v3081
        %v3083 = vcombine.low %v2989, %v2990
        %v3085 = vunpack.c.l.s4 1983009808
        %v3086 = vunpack.c.0.s8 %v3085
        %v3087 = vlaneseq
        %v3088 = vshrl.u32 %v3087, 7
        %v3089 = vsub.s32 %v3086, %v3088
        %v3090 = vrot.slane %v3083, %v3089
        %v3091 = vcombine.low %v3066, %v3074
        %v3092 = vcombine.high %v3066, %v3074
        %v3094 = vunpack.c.l.s4 1934713408
        %v3095 = vunpack.c.0.s8 %v3094
        %v3096 = vlaneseq
        %v3097 = vshrl.u32 %v3096, 7
        %v3098 = vsub.s32 %v3095, %v3097
        %v3099 = vrot.slane %v3091, %v3098
        %v3101 = vunpack.c.l.s4 1934713408
        %v3102 = vunpack.c.0.s8 %v3101
        %v3103 = vlaneseq
        %v3104 = vshrl.u32 %v3103, 7
        %v3105 = vsub.s32 %v3102, %v3104
        %v3106 = vrot.slane %v3092, %v3105
        %v3107 = vcombine.low %v3082, %v3090
        %v3108 = vcombine.high %v3082, %v3090
        %v3110 = vunpack.c.l.s4 1934713408
        %v3111 = vunpack.c.0.s8 %v3110
        %v3112 = vlaneseq
        %v3113 = vshrl.u32 %v3112, 7
        %v3114 = vsub.s32 %v3111, %v3113
        %v3115 = vrot.slane %v3107, %v3114
        %v3117 = vunpack.c.l.s4 1934713408
        %v3118 = vunpack.c.0.s8 %v3117
        %v3119 = vlaneseq
        %v3120 = vshrl.u32 %v3119, 7
        %v3121 = vsub.s32 %v3118, %v3120
        %v3122 = vrot.slane %v3108, %v3121
        %v3123 = vcombine.low %v3099, %v3115
        %v3124 = vcombine.high %v3099, %v3115
        %v3125 = vcombine.low %v3106, %v3122
        %v3126 = vcombine.high %v3106, %v3122
        %v3127 = vcombine.low %v3031, %v3038
        %v3129 = vunpack.c.l.s4 1983009808
        %v3130 = vunpack.c.0.s8 %v3129
        %v3131 = vlaneseq
        %v3132 = vshrl.u32 %v3131, 7
        %v3133 = vsub.s32 %v3130, %v3132
        %v3134 = vrot.slane %v3127, %v3133
        %v3135 = vcombine.low %v3055, %v3056
        %v3137 = vunpack.c.l.s4 1983009808
        %v3138 = vunpack.c.0.s8 %v3137
        %v3139 = vlaneseq
        %v3140 = vshrl.u32 %v3139, 7
        %v3141 = vsub.s32 %v3138, %v3140
        %v3142 = vrot.slane %v3135, %v3141
        %v3143 = vcombine.low %v3047, %v3054
        %v3145 = vunpack.c.l.s4 1983009808
        %v3146 = vunpack.c.0.s8 %v3145
        %v3147 = vlaneseq
        %v3148 = vshrl.u32 %v3147, 7
        %v3149 = vsub.s32 %v3146, %v3148
        %v3150 = vrot.slane %v3143, %v3149
        %v3151 = vcombine.low %v3057, %v3058
        %v3153 = vunpack.c.l.s4 1983009808
        %v3154 = vunpack.c.0.s8 %v3153
        %v3155 = vlaneseq
        %v3156 = vshrl.u32 %v3155, 7
        %v3157 = vsub.s32 %v3154, %v3156
        %v3158 = vrot.slane %v3151, %v3157
        %v3159 = vcombine.low %v3134, %v3142
        %v3160 = vcombine.high %v3134, %v3142
        %v3162 = vunpack.c.l.s4 1934713408
        %v3163 = vunpack.c.0.s8 %v3162
        %v3164 = vlaneseq
        %v3165 = vshrl.u32 %v3164, 7
        %v3166 = vsub.s32 %v3163, %v3165
        %v3167 = vrot.slane %v3159, %v3166
        %v3169 = vunpack.c.l.s4 1934713408
        %v3170 = vunpack.c.0.s8 %v3169
        %v3171 = vlaneseq
        %v3172 = vshrl.u32 %v3171, 7
        %v3173 = vsub.s32 %v3170, %v3172
        %v3174 = vrot.slane %v3160, %v3173
        %v3175 = vcombine.low %v3150, %v3158
        %v3176 = vcombine.high %v3150, %v3158
        %v3178 = vunpack.c.l.s4 1934713408
        %v3179 = vunpack.c.0.s8 %v3178
        %v3180 = vlaneseq
        %v3181 = vshrl.u32 %v3180, 7
        %v3182 = vsub.s32 %v3179, %v3181
        %v3183 = vrot.slane %v3175, %v3182
        %v3185 = vunpack.c.l.s4 1934713408
        %v3186 = vunpack.c.0.s8 %v3185
        %v3187 = vlaneseq
        %v3188 = vshrl.u32 %v3187, 7
        %v3189 = vsub.s32 %v3186, %v3188
        %v3190 = vrot.slane %v3176, %v3189
        %v3191 = vcombine.low %v3167, %v3183
        %v3192 = vcombine.high %v3167, %v3183
        %v3193 = vcombine.low %v3174, %v3190
        %v3194 = vcombine.high %v3174, %v3190
        %3197 = vrot.lane.b32.xlu0 %v2750, 120
        %v3198 = vpop.permute.xlu0 %3197
        %3199 = vrot.lane.b32.xlu0 %v2753, 120
        %v3200 = vpop.permute.xlu0 %3199
        %3203 = vrot.lane.b32.xlu0 %v2750, 112
        %v3204 = vpop.permute.xlu0 %3203
        %3205 = vrot.lane.b32.xlu0 %v2753, 112
        %v3206 = vpop.permute.xlu0 %3205
        %3209 = vrot.lane.b32.xlu0 %v2750, 104
        %v3210 = vpop.permute.xlu0 %3209
        %3211 = vrot.lane.b32.xlu0 %v2753, 104
        %v3212 = vpop.permute.xlu0 %3211
        %v3215 = vcombine.low %v2750, %v3204
        %v3216 = vcombine.high %v2750, %v3204
        %v3218 = vunpack.c.l.s4 1983009808
        %v3219 = vunpack.c.0.s8 %v3218
        %v3220 = vlaneseq
        %v3221 = vshrl.u32 %v3220, 7
        %v3222 = vsub.s32 %v3219, %v3221
        %v3223 = vrot.slane %v3215, %v3222
        %v3225 = vunpack.c.l.s4 1983009808
        %v3226 = vunpack.c.0.s8 %v3225
        %v3227 = vlaneseq
        %v3228 = vshrl.u32 %v3227, 7
        %v3229 = vsub.s32 %v3226, %v3228
        %v3230 = vrot.slane %v3216, %v3229
        %v3231 = vcombine.low %v3198, %v3210
        %v3232 = vcombine.high %v3198, %v3210
        %v3234 = vunpack.c.l.s4 1983009808
        %v3235 = vunpack.c.0.s8 %v3234
        %v3236 = vlaneseq
        %v3237 = vshrl.u32 %v3236, 7
        %v3238 = vsub.s32 %v3235, %v3237
        %v3239 = vrot.slane %v3231, %v3238
        %v3241 = vunpack.c.l.s4 1983009808
        %v3242 = vunpack.c.0.s8 %v3241
        %v3243 = vlaneseq
        %v3244 = vshrl.u32 %v3243, 7
        %v3245 = vsub.s32 %v3242, %v3244
        %v3246 = vrot.slane %v3232, %v3245
        %v3247 = vcombine.low %v3223, %v3239
        %v3248 = vcombine.high %v3223, %v3239
        %v3250 = vunpack.c.l.s4 1934713408
        %v3251 = vunpack.c.0.s8 %v3250
        %v3252 = vlaneseq
        %v3253 = vshrl.u32 %v3252, 7
        %v3254 = vsub.s32 %v3251, %v3253
        %v3255 = vrot.slane %v3247, %v3254
        %v3257 = vunpack.c.l.s4 1934713408
        %v3258 = vunpack.c.0.s8 %v3257
        %v3259 = vlaneseq
        %v3260 = vshrl.u32 %v3259, 7
        %v3261 = vsub.s32 %v3258, %v3260
        %v3262 = vrot.slane %v3248, %v3261
        %v3263 = vcombine.low %v3230, %v3246
        %v3264 = vcombine.high %v3230, %v3246
        %v3266 = vunpack.c.l.s4 1934713408
        %v3267 = vunpack.c.0.s8 %v3266
        %v3268 = vlaneseq
        %v3269 = vshrl.u32 %v3268, 7
        %v3270 = vsub.s32 %v3267, %v3269
        %v3271 = vrot.slane %v3263, %v3270
        %v3273 = vunpack.c.l.s4 1934713408
        %v3274 = vunpack.c.0.s8 %v3273
        %v3275 = vlaneseq
        %v3276 = vshrl.u32 %v3275, 7
        %v3277 = vsub.s32 %v3274, %v3276
        %v3278 = vrot.slane %v3264, %v3277
        %v3279 = vcombine.high %v3255, 0.0
        %v3280 = vcombine.high %v3262, 0.0
        %v3281 = vcombine.high %v3271, 0.0
        %v3282 = vcombine.high %v3278, 0.0
        %v3283 = vcombine.low %v2753, %v3206
        %v3284 = vcombine.high %v2753, %v3206
        %v3286 = vunpack.c.l.s4 1983009808
        %v3287 = vunpack.c.0.s8 %v3286
        %v3288 = vlaneseq
        %v3289 = vshrl.u32 %v3288, 7
        %v3290 = vsub.s32 %v3287, %v3289
        %v3291 = vrot.slane %v3283, %v3290
        %v3293 = vunpack.c.l.s4 1983009808
        %v3294 = vunpack.c.0.s8 %v3293
        %v3295 = vlaneseq
        %v3296 = vshrl.u32 %v3295, 7
        %v3297 = vsub.s32 %v3294, %v3296
        %v3298 = vrot.slane %v3284, %v3297
        %v3299 = vcombine.low %v3200, %v3212
        %v3300 = vcombine.high %v3200, %v3212
        %v3302 = vunpack.c.l.s4 1983009808
        %v3303 = vunpack.c.0.s8 %v3302
        %v3304 = vlaneseq
        %v3305 = vshrl.u32 %v3304, 7
        %v3306 = vsub.s32 %v3303, %v3305
        %v3307 = vrot.slane %v3299, %v3306
        %v3309 = vunpack.c.l.s4 1983009808
        %v3310 = vunpack.c.0.s8 %v3309
        %v3311 = vlaneseq
        %v3312 = vshrl.u32 %v3311, 7
        %v3313 = vsub.s32 %v3310, %v3312
        %v3314 = vrot.slane %v3300, %v3313
        %v3315 = vcombine.low %v3291, %v3307
        %v3316 = vcombine.high %v3291, %v3307
        %v3318 = vunpack.c.l.s4 1934713408
        %v3319 = vunpack.c.0.s8 %v3318
        %v3320 = vlaneseq
        %v3321 = vshrl.u32 %v3320, 7
        %v3322 = vsub.s32 %v3319, %v3321
        %v3323 = vrot.slane %v3315, %v3322
        %v3325 = vunpack.c.l.s4 1934713408
        %v3326 = vunpack.c.0.s8 %v3325
        %v3327 = vlaneseq
        %v3328 = vshrl.u32 %v3327, 7
        %v3329 = vsub.s32 %v3326, %v3328
        %v3330 = vrot.slane %v3316, %v3329
        %v3331 = vcombine.low %v3298, %v3314
        %v3332 = vcombine.high %v3298, %v3314
        %v3334 = vunpack.c.l.s4 1934713408
        %v3335 = vunpack.c.0.s8 %v3334
        %v3336 = vlaneseq
        %v3337 = vshrl.u32 %v3336, 7
        %v3338 = vsub.s32 %v3335, %v3337
        %v3339 = vrot.slane %v3331, %v3338
        %v3341 = vunpack.c.l.s4 1934713408
        %v3342 = vunpack.c.0.s8 %v3341
        %v3343 = vlaneseq
        %v3344 = vshrl.u32 %v3343, 7
        %v3345 = vsub.s32 %v3342, %v3344
        %v3346 = vrot.slane %v3332, %v3345
        %v3347 = vcombine.high %v3323, 0.0
        %v3348 = vcombine.high %v3330, 0.0
        %v3349 = vcombine.high %v3339, 0.0
        %v3350 = vcombine.high %v3346, 0.0
        %v3351 = vcombine.low %v3255, %v3262
        %v3353 = vunpack.c.l.s4 1983009808
        %v3354 = vunpack.c.0.s8 %v3353
        %v3355 = vlaneseq
        %v3356 = vshrl.u32 %v3355, 7
        %v3357 = vsub.s32 %v3354, %v3356
        %v3358 = vrot.slane %v3351, %v3357
        %v3359 = vcombine.low %v3279, %v3280
        %v3361 = vunpack.c.l.s4 1983009808
        %v3362 = vunpack.c.0.s8 %v3361
        %v3363 = vlaneseq
        %v3364 = vshrl.u32 %v3363, 7
        %v3365 = vsub.s32 %v3362, %v3364
        %v3366 = vrot.slane %v3359, %v3365
        %v3367 = vcombine.low %v3271, %v3278
        %v3369 = vunpack.c.l.s4 1983009808
        %v3370 = vunpack.c.0.s8 %v3369
        %v3371 = vlaneseq
        %v3372 = vshrl.u32 %v3371, 7
        %v3373 = vsub.s32 %v3370, %v3372
        %v3374 = vrot.slane %v3367, %v3373
        %v3375 = vcombine.low %v3281, %v3282
        %v3377 = vunpack.c.l.s4 1983009808
        %v3378 = vunpack.c.0.s8 %v3377
        %v3379 = vlaneseq
        %v3380 = vshrl.u32 %v3379, 7
        %v3381 = vsub.s32 %v3378, %v3380
        %v3382 = vrot.slane %v3375, %v3381
        %v3383 = vcombine.low %v3358, %v3366
        %v3384 = vcombine.high %v3358, %v3366
        %v3386 = vunpack.c.l.s4 1934713408
        %v3387 = vunpack.c.0.s8 %v3386
        %v3388 = vlaneseq
        %v3389 = vshrl.u32 %v3388, 7
        %v3390 = vsub.s32 %v3387, %v3389
        %v3391 = vrot.slane %v3383, %v3390
        %v3393 = vunpack.c.l.s4 1934713408
        %v3394 = vunpack.c.0.s8 %v3393
        %v3395 = vlaneseq
        %v3396 = vshrl.u32 %v3395, 7
        %v3397 = vsub.s32 %v3394, %v3396
        %v3398 = vrot.slane %v3384, %v3397
        %v3399 = vcombine.low %v3374, %v3382
        %v3400 = vcombine.high %v3374, %v3382
        %v3402 = vunpack.c.l.s4 1934713408
        %v3403 = vunpack.c.0.s8 %v3402
        %v3404 = vlaneseq
        %v3405 = vshrl.u32 %v3404, 7
        %v3406 = vsub.s32 %v3403, %v3405
        %v3407 = vrot.slane %v3399, %v3406
        %v3409 = vunpack.c.l.s4 1934713408
        %v3410 = vunpack.c.0.s8 %v3409
        %v3411 = vlaneseq
        %v3412 = vshrl.u32 %v3411, 7
        %v3413 = vsub.s32 %v3410, %v3412
        %v3414 = vrot.slane %v3400, %v3413
        %v3415 = vcombine.low %v3391, %v3407
        %v3416 = vcombine.high %v3391, %v3407
        %v3417 = vcombine.low %v3398, %v3414
        %v3418 = vcombine.high %v3398, %v3414
        %v3419 = vcombine.low %v3323, %v3330
        %v3421 = vunpack.c.l.s4 1983009808
        %v3422 = vunpack.c.0.s8 %v3421
        %v3423 = vlaneseq
        %v3424 = vshrl.u32 %v3423, 7
        %v3425 = vsub.s32 %v3422, %v3424
        %v3426 = vrot.slane %v3419, %v3425
        %v3427 = vcombine.low %v3347, %v3348
        %v3429 = vunpack.c.l.s4 1983009808
        %v3430 = vunpack.c.0.s8 %v3429
        %v3431 = vlaneseq
        %v3432 = vshrl.u32 %v3431, 7
        %v3433 = vsub.s32 %v3430, %v3432
        %v3434 = vrot.slane %v3427, %v3433
        %v3435 = vcombine.low %v3339, %v3346
        %v3437 = vunpack.c.l.s4 1983009808
        %v3438 = vunpack.c.0.s8 %v3437
        %v3439 = vlaneseq
        %v3440 = vshrl.u32 %v3439, 7
        %v3441 = vsub.s32 %v3438, %v3440
        %v3442 = vrot.slane %v3435, %v3441
        %v3443 = vcombine.low %v3349, %v3350
        %v3445 = vunpack.c.l.s4 1983009808
        %v3446 = vunpack.c.0.s8 %v3445
        %v3447 = vlaneseq
        %v3448 = vshrl.u32 %v3447, 7
        %v3449 = vsub.s32 %v3446, %v3448
        %v3450 = vrot.slane %v3443, %v3449
        %v3451 = vcombine.low %v3426, %v3434
        %v3452 = vcombine.high %v3426, %v3434
        %v3454 = vunpack.c.l.s4 1934713408
        %v3455 = vunpack.c.0.s8 %v3454
        %v3456 = vlaneseq
        %v3457 = vshrl.u32 %v3456, 7
        %v3458 = vsub.s32 %v3455, %v3457
        %v3459 = vrot.slane %v3451, %v3458
        %v3461 = vunpack.c.l.s4 1934713408
        %v3462 = vunpack.c.0.s8 %v3461
        %v3463 = vlaneseq
        %v3464 = vshrl.u32 %v3463, 7
        %v3465 = vsub.s32 %v3462, %v3464
        %v3466 = vrot.slane %v3452, %v3465
        %v3467 = vcombine.low %v3442, %v3450
        %v3468 = vcombine.high %v3442, %v3450
        %v3470 = vunpack.c.l.s4 1934713408
        %v3471 = vunpack.c.0.s8 %v3470
        %v3472 = vlaneseq
        %v3473 = vshrl.u32 %v3472, 7
        %v3474 = vsub.s32 %v3471, %v3473
        %v3475 = vrot.slane %v3467, %v3474
        %v3477 = vunpack.c.l.s4 1934713408
        %v3478 = vunpack.c.0.s8 %v3477
        %v3479 = vlaneseq
        %v3480 = vshrl.u32 %v3479, 7
        %v3481 = vsub.s32 %v3478, %v3480
        %v3482 = vrot.slane %v3468, %v3481
        %v3483 = vcombine.low %v3459, %v3475
        %v3484 = vcombine.high %v3459, %v3475
        %v3485 = vcombine.low %v3466, %v3482
        %v3486 = vcombine.high %v3466, %v3482
        %v3487 = vpack.c.bf16 %v2899, %v2899
        %v3488 = vpack.c.bf16 %v2900, %v2900
        %v3489 = vpack.c.bf16 %v2901, %v2901
        %v3490 = vpack.c.bf16 %v2902, %v2902
        %v3491 = vpack.c.bf16 %v3191, %v3123
        %v3492 = vpack.c.bf16 %v3192, %v3124
        %v3493 = vpack.c.bf16 %v3193, %v3125
        %v3494 = vpack.c.bf16 %v3194, %v3126
        %v3496 = vlaneseq
        %v3497 = vshrl.u32 %v3496, 7
        %v3498 = vsub.s32 0, %v3497
        %v3499 = vrot.slane %v1237, %v3498
        %v3502 = vsel %vm1884, %v3487, 0
        %v3505 = vsel %vm1884, %v3491, 0
        %3507 = vmatprep.subr.bf16.mxu0 0
        %3508 = vmatpush1.bf16.xpose.msra.mxu0 %v3505
        %3509 = vmatprep.subr.bf16.mxu0 0
        %3510 = vmatpush1.bf16.xpose.msra.mxu0 0
        %3511 = vmatprep.subr.bf16.mxu0 0
        %3512 = vmatpush1.bf16.xpose.msra.mxu0 0
        %3513 = vmatprep.subr.bf16.mxu0 0
        %3514 = vmatpush1.bf16.xpose.msra.mxu0 0
        %3515 = vmatprep.subr.bf16.mxu0 0
        %3516 = vmatpush1.bf16.xpose.msra.mxu0 0
        %3517 = vmatprep.subr.bf16.mxu0 0
        %3518 = vmatpush1.bf16.xpose.msra.mxu0 0
        %3519 = vmatprep.subr.bf16.mxu0 0
        %3520 = vmatpush1.bf16.xpose.msra.mxu0 0
        %3521 = vmatprep.subr.bf16.mxu0 0
        %3522 = vmatpush1.bf16.xpose.msra.mxu0 0
        %3523 = vmatprep.subr.bf16.mxu0 0
        %3524 = vmatpush1.bf16.xpose.msra.mxu0 0
        %3525 = vmatprep.subr.bf16.mxu0 0
        %3526 = vmatpush1.bf16.xpose.msra.mxu0 0
        %3527 = vmatprep.subr.bf16.mxu0 0
        %3528 = vmatpush1.bf16.xpose.msra.mxu0 0
        %3529 = vmatprep.subr.bf16.mxu0 0
        %3530 = vmatpush1.bf16.xpose.msra.mxu0 0
        %3531 = vmatprep.subr.bf16.mxu0 0
        %3532 = vmatpush1.bf16.xpose.msra.mxu0 0
        %3533 = vmatprep.subr.bf16.mxu0 0
        %3534 = vmatpush1.bf16.xpose.msra.mxu0 0
        %3535 = vmatprep.subr.bf16.mxu0 0
        %3536 = vmatpush1.bf16.xpose.msra.mxu0 0
        %3537 = vmatprep.subr.bf16.mxu0 0
        %3538 = vmatpush1.bf16.xpose.msra.mxu0 0
        %3539 = vmatprep.mubr.bf16.mxu0 0
        %3540 = vmatmul.mubr.bf16.gmra.mrb[0].mxu0 %v3502
        %v3541 = vpop.f32.mrb[0].mxu0
        %v3542 = vadd.f32 %v3499, %v3541
        %v3543 = vpop.f32.mrb[0].mxu0
        %v3544 = vpop.f32.mrb[0].mxu0
        %v3545 = vpop.f32.mrb[0].mxu0
        %3546 = vdwg.mxu0
        %v3548 = vsel %vm1884, %v3488, 0
        %v3551 = vsel %vm1884, %v3492, 0
        %3553 = vmatprep.subr.bf16.mxu0 0
        %3554 = vmatpush1.bf16.xpose.msra.mxu0 %v3551
        %3555 = vmatprep.subr.bf16.mxu0 0
        %3556 = vmatpush1.bf16.xpose.msra.mxu0 0
        %3557 = vmatprep.subr.bf16.mxu0 0
        %3558 = vmatpush1.bf16.xpose.msra.mxu0 0
        %3559 = vmatprep.subr.bf16.mxu0 0
        %3560 = vmatpush1.bf16.xpose.msra.mxu0 0
        %3561 = vmatprep.subr.bf16.mxu0 0
        %3562 = vmatpush1.bf16.xpose.msra.mxu0 0
        %3563 = vmatprep.subr.bf16.mxu0 0
        %3564 = vmatpush1.bf16.xpose.msra.mxu0 0
        %3565 = vmatprep.subr.bf16.mxu0 0
        %3566 = vmatpush1.bf16.xpose.msra.mxu0 0
        %3567 = vmatprep.subr.bf16.mxu0 0
        %3568 = vmatpush1.bf16.xpose.msra.mxu0 0
        %3569 = vmatprep.subr.bf16.mxu0 0
        %3570 = vmatpush1.bf16.xpose.msra.mxu0 0
        %3571 = vmatprep.subr.bf16.mxu0 0
        %3572 = vmatpush1.bf16.xpose.msra.mxu0 0
        %3573 = vmatprep.subr.bf16.mxu0 0
        %3574 = vmatpush1.bf16.xpose.msra.mxu0 0
        %3575 = vmatprep.subr.bf16.mxu0 0
        %3576 = vmatpush1.bf16.xpose.msra.mxu0 0
        %3577 = vmatprep.subr.bf16.mxu0 0
        %3578 = vmatpush1.bf16.xpose.msra.mxu0 0
        %3579 = vmatprep.subr.bf16.mxu0 0
        %3580 = vmatpush1.bf16.xpose.msra.mxu0 0
        %3581 = vmatprep.subr.bf16.mxu0 0
        %3582 = vmatpush1.bf16.xpose.msra.mxu0 0
        %3583 = vmatprep.subr.bf16.mxu0 0
        %3584 = vmatpush1.bf16.xpose.msra.mxu0 0
        %3585 = vmatprep.mubr.bf16.mxu0 0
        %3586 = vmatmul.mubr.bf16.gmra.mrb[0].mxu0 %v3548
        %v3587 = vpop.f32.mrb[0].mxu0
        %v3588 = vadd.f32 %v3499, %v3587
        %v3589 = vpop.f32.mrb[0].mxu0
        %v3590 = vpop.f32.mrb[0].mxu0
        %v3591 = vpop.f32.mrb[0].mxu0
        %3592 = vdwg.mxu0
        %v3594 = vsel %vm1884, %v3489, 0
        %v3597 = vsel %vm1884, %v3493, 0
        %3599 = vmatprep.subr.bf16.mxu0 0
        %3600 = vmatpush1.bf16.xpose.msra.mxu0 %v3597
        %3601 = vmatprep.subr.bf16.mxu0 0
        %3602 = vmatpush1.bf16.xpose.msra.mxu0 0
        %3603 = vmatprep.subr.bf16.mxu0 0
        %3604 = vmatpush1.bf16.xpose.msra.mxu0 0
        %3605 = vmatprep.subr.bf16.mxu0 0
        %3606 = vmatpush1.bf16.xpose.msra.mxu0 0
        %3607 = vmatprep.subr.bf16.mxu0 0
        %3608 = vmatpush1.bf16.xpose.msra.mxu0 0
        %3609 = vmatprep.subr.bf16.mxu0 0
        %3610 = vmatpush1.bf16.xpose.msra.mxu0 0
        %3611 = vmatprep.subr.bf16.mxu0 0
        %3612 = vmatpush1.bf16.xpose.msra.mxu0 0
        %3613 = vmatprep.subr.bf16.mxu0 0
        %3614 = vmatpush1.bf16.xpose.msra.mxu0 0
        %3615 = vmatprep.subr.bf16.mxu0 0
        %3616 = vmatpush1.bf16.xpose.msra.mxu0 0
        %3617 = vmatprep.subr.bf16.mxu0 0
        %3618 = vmatpush1.bf16.xpose.msra.mxu0 0
        %3619 = vmatprep.subr.bf16.mxu0 0
        %3620 = vmatpush1.bf16.xpose.msra.mxu0 0
        %3621 = vmatprep.subr.bf16.mxu0 0
        %3622 = vmatpush1.bf16.xpose.msra.mxu0 0
        %3623 = vmatprep.subr.bf16.mxu0 0
        %3624 = vmatpush1.bf16.xpose.msra.mxu0 0
        %3625 = vmatprep.subr.bf16.mxu0 0
        %3626 = vmatpush1.bf16.xpose.msra.mxu0 0
        %3627 = vmatprep.subr.bf16.mxu0 0
        %3628 = vmatpush1.bf16.xpose.msra.mxu0 0
        %3629 = vmatprep.subr.bf16.mxu0 0
        %3630 = vmatpush1.bf16.xpose.msra.mxu0 0
        %3631 = vmatprep.mubr.bf16.mxu0 0
        %3632 = vmatmul.mubr.bf16.gmra.mrb[0].mxu0 %v3594
        %v3633 = vpop.f32.mrb[0].mxu0
        %v3634 = vadd.f32 %v3499, %v3633
        %v3635 = vpop.f32.mrb[0].mxu0
        %v3636 = vpop.f32.mrb[0].mxu0
        %v3637 = vpop.f32.mrb[0].mxu0
        %3638 = vdwg.mxu0
        %v3640 = vsel %vm1884, %v3490, 0
        %v3643 = vsel %vm1884, %v3494, 0
        %3645 = vmatprep.subr.bf16.mxu0 0
        %3646 = vmatpush1.bf16.xpose.msra.mxu0 %v3643
        %3647 = vmatprep.subr.bf16.mxu0 0
        %3648 = vmatpush1.bf16.xpose.msra.mxu0 0
        %3649 = vmatprep.subr.bf16.mxu0 0
        %3650 = vmatpush1.bf16.xpose.msra.mxu0 0
        %3651 = vmatprep.subr.bf16.mxu0 0
        %3652 = vmatpush1.bf16.xpose.msra.mxu0 0
        %3653 = vmatprep.subr.bf16.mxu0 0
        %3654 = vmatpush1.bf16.xpose.msra.mxu0 0
        %3655 = vmatprep.subr.bf16.mxu0 0
        %3656 = vmatpush1.bf16.xpose.msra.mxu0 0
        %3657 = vmatprep.subr.bf16.mxu0 0
        %3658 = vmatpush1.bf16.xpose.msra.mxu0 0
        %3659 = vmatprep.subr.bf16.mxu0 0
        %3660 = vmatpush1.bf16.xpose.msra.mxu0 0
        %3661 = vmatprep.subr.bf16.mxu0 0
        %3662 = vmatpush1.bf16.xpose.msra.mxu0 0
        %3663 = vmatprep.subr.bf16.mxu0 0
        %3664 = vmatpush1.bf16.xpose.msra.mxu0 0
        %3665 = vmatprep.subr.bf16.mxu0 0
        %3666 = vmatpush1.bf16.xpose.msra.mxu0 0
        %3667 = vmatprep.subr.bf16.mxu0 0
        %3668 = vmatpush1.bf16.xpose.msra.mxu0 0
        %3669 = vmatprep.subr.bf16.mxu0 0
        %3670 = vmatpush1.bf16.xpose.msra.mxu0 0
        %3671 = vmatprep.subr.bf16.mxu0 0
        %3672 = vmatpush1.bf16.xpose.msra.mxu0 0
        %3673 = vmatprep.subr.bf16.mxu0 0
        %3674 = vmatpush1.bf16.xpose.msra.mxu0 0
        %3675 = vmatprep.subr.bf16.mxu0 0
        %3676 = vmatpush1.bf16.xpose.msra.mxu0 0
        %3677 = vmatprep.mubr.bf16.mxu0 0
        %3678 = vmatmul.mubr.bf16.gmra.mrb[0].mxu0 %v3640
        %v3679 = vpop.f32.mrb[0].mxu0
        %v3680 = vadd.f32 %v3499, %v3679
        %v3681 = vpop.f32.mrb[0].mxu0
        %v3682 = vpop.f32.mrb[0].mxu0
        %v3683 = vpop.f32.mrb[0].mxu0
        %3684 = vdwg.mxu0
        %v3685 = vsel %vm2455, %v3542, -inf
        %3686 = vmax.xlane.f32.xlu0 %v3685
        %v3687 = vpop.xlane.xlu0 %3686
        %v3688 = vsel %vm2455, %v3588, -inf
        %3689 = vmax.xlane.f32.xlu0 %v3688
        %v3690 = vpop.xlane.xlu0 %3689
        %v3691 = vsel %vm2455, %v3634, -inf
        %3692 = vmax.xlane.f32.xlu0 %v3691
        %v3693 = vpop.xlane.xlu0 %3692
        %v3694 = vsel %vm2455, %v3680, -inf
        %3695 = vmax.xlane.f32.xlu0 %v3694
        %v3696 = vpop.xlane.xlu0 %3695
        %v3697 = vsub.f32 %v3542, %v3687
        %v3698 = vsub.f32 %v3588, %v3690
        %v3699 = vsub.f32 %v3634, %v3693
        %v3700 = vsub.f32 %v3680, %v3696
        %v3701 = vmul.f32 %v3697, 1.442695
        %v3702 = vpow.pop %v3701
        %v3703 = vmul.f32 %v3698, 1.442695
        %v3704 = vpow.pop %v3703
        %v3705 = vmul.f32 %v3699, 1.442695
        %v3706 = vpow.pop %v3705
        %v3707 = vmul.f32 %v3700, 1.442695
        %v3708 = vpow.pop %v3707
        %v3709 = vsel %vm2455, %v3702, 0.0
        %3710 = vadd.xlane.f32.xlu0 %v3709
        %v3711 = vpop.xlane.xlu0 %3710
        %v3712 = vsel %vm2455, %v3704, 0.0
        %3713 = vadd.xlane.f32.xlu0 %v3712
        %v3714 = vpop.xlane.xlu0 %3713
        %v3715 = vsel %vm2455, %v3706, 0.0
        %3716 = vadd.xlane.f32.xlu0 %v3715
        %v3717 = vpop.xlane.xlu0 %3716
        %v3718 = vsel %vm2455, %v3708, 0.0
        %3719 = vadd.xlane.f32.xlu0 %v3718
        %v3720 = vpop.xlane.xlu0 %3719
        %v3721 = vrcp.pop %v3711
        %v3722 = vrcp.pop %v3714
        %v3723 = vrcp.pop %v3717
        %v3724 = vrcp.pop %v3720
        %v3725 = vmul.f32 %v3702, %v3721
        %v3726 = vmul.f32 %v3704, %v3722
        %v3727 = vmul.f32 %v3706, %v3723
        %v3728 = vmul.f32 %v3708, %v3724
        %v3729 = vpack.c.bf16 %v3725, %v3725
        %v3730 = vpack.c.bf16 %v3726, %v3726
        %v3731 = vpack.c.bf16 %v3727, %v3727
        %v3732 = vpack.c.bf16 %v3728, %v3728
        %v3733 = vpack.c.bf16 %v3483, %v3415
        %v3734 = vpack.c.bf16 %v3484, %v3416
        %v3735 = vpack.c.bf16 %v3485, %v3417
        %v3736 = vpack.c.bf16 %v3486, %v3418
        %v3738 = vsel %vm2455, %v3729, 0
        %3740 = vmatprep.subr.bf16.mxu0 0
        %3741 = vmatpush1.bf16.msra.mxu0 %v3733
        %3742 = vmatprep.subr.bf16.mxu0 0
        %3743 = vmatpush1.bf16.msra.mxu0 0
        %3744 = vmatprep.subr.bf16.mxu0 0
        %3745 = vmatpush1.bf16.msra.mxu0 0
        %3746 = vmatprep.subr.bf16.mxu0 0
        %3747 = vmatpush1.bf16.msra.mxu0 0
        %3748 = vmatprep.subr.bf16.mxu0 0
        %3749 = vmatpush1.bf16.msra.mxu0 0
        %3750 = vmatprep.subr.bf16.mxu0 0
        %3751 = vmatpush1.bf16.msra.mxu0 0
        %3752 = vmatprep.subr.bf16.mxu0 0
        %3753 = vmatpush1.bf16.msra.mxu0 0
        %3754 = vmatprep.subr.bf16.mxu0 0
        %3755 = vmatpush1.bf16.msra.mxu0 0
        %3756 = vmatprep.subr.bf16.mxu0 0
        %3757 = vmatpush1.bf16.msra.mxu0 0
        %3758 = vmatprep.subr.bf16.mxu0 0
        %3759 = vmatpush1.bf16.msra.mxu0 0
        %3760 = vmatprep.subr.bf16.mxu0 0
        %3761 = vmatpush1.bf16.msra.mxu0 0
        %3762 = vmatprep.subr.bf16.mxu0 0
        %3763 = vmatpush1.bf16.msra.mxu0 0
        %3764 = vmatprep.subr.bf16.mxu0 0
        %3765 = vmatpush1.bf16.msra.mxu0 0
        %3766 = vmatprep.subr.bf16.mxu0 0
        %3767 = vmatpush1.bf16.msra.mxu0 0
        %3768 = vmatprep.subr.bf16.mxu0 0
        %3769 = vmatpush1.bf16.msra.mxu0 0
        %3770 = vmatprep.subr.bf16.mxu0 0
        %3771 = vmatpush1.bf16.msra.mxu0 0
        %3772 = vmatprep.mubr.bf16.mxu0 0
        %3773 = vmatmul.mubr.bf16.gmra.mrb[0].mxu0 %v3738
        %v3774 = vpop.f32.mrb[0].mxu0
        %v3775 = vadd.f32 0.0, %v3774
        %v3776 = vpop.f32.mrb[0].mxu0
        %v3777 = vpop.f32.mrb[0].mxu0
        %v3778 = vpop.f32.mrb[0].mxu0
        %3779 = vdwg.mxu0
        %v3781 = vsel %vm2455, %v3730, 0
        %3783 = vmatprep.subr.bf16.mxu0 0
        %3784 = vmatpush1.bf16.msra.mxu0 %v3734
        %3785 = vmatprep.subr.bf16.mxu0 0
        %3786 = vmatpush1.bf16.msra.mxu0 0
        %3787 = vmatprep.subr.bf16.mxu0 0
        %3788 = vmatpush1.bf16.msra.mxu0 0
        %3789 = vmatprep.subr.bf16.mxu0 0
        %3790 = vmatpush1.bf16.msra.mxu0 0
        %3791 = vmatprep.subr.bf16.mxu0 0
        %3792 = vmatpush1.bf16.msra.mxu0 0
        %3793 = vmatprep.subr.bf16.mxu0 0
        %3794 = vmatpush1.bf16.msra.mxu0 0
        %3795 = vmatprep.subr.bf16.mxu0 0
        %3796 = vmatpush1.bf16.msra.mxu0 0
        %3797 = vmatprep.subr.bf16.mxu0 0
        %3798 = vmatpush1.bf16.msra.mxu0 0
        %3799 = vmatprep.subr.bf16.mxu0 0
        %3800 = vmatpush1.bf16.msra.mxu0 0
        %3801 = vmatprep.subr.bf16.mxu0 0
        %3802 = vmatpush1.bf16.msra.mxu0 0
        %3803 = vmatprep.subr.bf16.mxu0 0
        %3804 = vmatpush1.bf16.msra.mxu0 0
        %3805 = vmatprep.subr.bf16.mxu0 0
        %3806 = vmatpush1.bf16.msra.mxu0 0
        %3807 = vmatprep.subr.bf16.mxu0 0
        %3808 = vmatpush1.bf16.msra.mxu0 0
        %3809 = vmatprep.subr.bf16.mxu0 0
        %3810 = vmatpush1.bf16.msra.mxu0 0
        %3811 = vmatprep.subr.bf16.mxu0 0
        %3812 = vmatpush1.bf16.msra.mxu0 0
        %3813 = vmatprep.subr.bf16.mxu0 0
        %3814 = vmatpush1.bf16.msra.mxu0 0
        %3815 = vmatprep.mubr.bf16.mxu0 0
        %3816 = vmatmul.mubr.bf16.gmra.mrb[0].mxu0 %v3781
        %v3817 = vpop.f32.mrb[0].mxu0
        %v3818 = vadd.f32 0.0, %v3817
        %v3819 = vpop.f32.mrb[0].mxu0
        %v3820 = vpop.f32.mrb[0].mxu0
        %v3821 = vpop.f32.mrb[0].mxu0
        %3822 = vdwg.mxu0
        %v3824 = vsel %vm2455, %v3731, 0
        %3826 = vmatprep.subr.bf16.mxu0 0
        %3827 = vmatpush1.bf16.msra.mxu0 %v3735
        %3828 = vmatprep.subr.bf16.mxu0 0
        %3829 = vmatpush1.bf16.msra.mxu0 0
        %3830 = vmatprep.subr.bf16.mxu0 0
        %3831 = vmatpush1.bf16.msra.mxu0 0
        %3832 = vmatprep.subr.bf16.mxu0 0
        %3833 = vmatpush1.bf16.msra.mxu0 0
        %3834 = vmatprep.subr.bf16.mxu0 0
        %3835 = vmatpush1.bf16.msra.mxu0 0
        %3836 = vmatprep.subr.bf16.mxu0 0
        %3837 = vmatpush1.bf16.msra.mxu0 0
        %3838 = vmatprep.subr.bf16.mxu0 0
        %3839 = vmatpush1.bf16.msra.mxu0 0
        %3840 = vmatprep.subr.bf16.mxu0 0
        %3841 = vmatpush1.bf16.msra.mxu0 0
        %3842 = vmatprep.subr.bf16.mxu0 0
        %3843 = vmatpush1.bf16.msra.mxu0 0
        %3844 = vmatprep.subr.bf16.mxu0 0
        %3845 = vmatpush1.bf16.msra.mxu0 0
        %3846 = vmatprep.subr.bf16.mxu0 0
        %3847 = vmatpush1.bf16.msra.mxu0 0
        %3848 = vmatprep.subr.bf16.mxu0 0
        %3849 = vmatpush1.bf16.msra.mxu0 0
        %3850 = vmatprep.subr.bf16.mxu0 0
        %3851 = vmatpush1.bf16.msra.mxu0 0
        %3852 = vmatprep.subr.bf16.mxu0 0
        %3853 = vmatpush1.bf16.msra.mxu0 0
        %3854 = vmatprep.subr.bf16.mxu0 0
        %3855 = vmatpush1.bf16.msra.mxu0 0
        %3856 = vmatprep.subr.bf16.mxu0 0
        %3857 = vmatpush1.bf16.msra.mxu0 0
        %3858 = vmatprep.mubr.bf16.mxu0 0
        %3859 = vmatmul.mubr.bf16.gmra.mrb[0].mxu0 %v3824
        %v3860 = vpop.f32.mrb[0].mxu0
        %v3861 = vadd.f32 0.0, %v3860
        %v3862 = vpop.f32.mrb[0].mxu0
        %v3863 = vpop.f32.mrb[0].mxu0
        %v3864 = vpop.f32.mrb[0].mxu0
        %3865 = vdwg.mxu0
        %v3867 = vsel %vm2455, %v3732, 0
        %3869 = vmatprep.subr.bf16.mxu0 0
        %3870 = vmatpush1.bf16.msra.mxu0 %v3736
        %3871 = vmatprep.subr.bf16.mxu0 0
        %3872 = vmatpush1.bf16.msra.mxu0 0
        %3873 = vmatprep.subr.bf16.mxu0 0
        %3874 = vmatpush1.bf16.msra.mxu0 0
        %3875 = vmatprep.subr.bf16.mxu0 0
        %3876 = vmatpush1.bf16.msra.mxu0 0
        %3877 = vmatprep.subr.bf16.mxu0 0
        %3878 = vmatpush1.bf16.msra.mxu0 0
        %3879 = vmatprep.subr.bf16.mxu0 0
        %3880 = vmatpush1.bf16.msra.mxu0 0
        %3881 = vmatprep.subr.bf16.mxu0 0
        %3882 = vmatpush1.bf16.msra.mxu0 0
        %3883 = vmatprep.subr.bf16.mxu0 0
        %3884 = vmatpush1.bf16.msra.mxu0 0
        %3885 = vmatprep.subr.bf16.mxu0 0
        %3886 = vmatpush1.bf16.msra.mxu0 0
        %3887 = vmatprep.subr.bf16.mxu0 0
        %3888 = vmatpush1.bf16.msra.mxu0 0
        %3889 = vmatprep.subr.bf16.mxu0 0
        %3890 = vmatpush1.bf16.msra.mxu0 0
        %3891 = vmatprep.subr.bf16.mxu0 0
        %3892 = vmatpush1.bf16.msra.mxu0 0
        %3893 = vmatprep.subr.bf16.mxu0 0
        %3894 = vmatpush1.bf16.msra.mxu0 0
        %3895 = vmatprep.subr.bf16.mxu0 0
        %3896 = vmatpush1.bf16.msra.mxu0 0
        %3897 = vmatprep.subr.bf16.mxu0 0
        %3898 = vmatpush1.bf16.msra.mxu0 0
        %3899 = vmatprep.subr.bf16.mxu0 0
        %3900 = vmatpush1.bf16.msra.mxu0 0
        %3901 = vmatprep.mubr.bf16.mxu0 0
        %3902 = vmatmul.mubr.bf16.gmra.mrb[0].mxu0 %v3867
        %v3903 = vpop.f32.mrb[0].mxu0
        %v3904 = vadd.f32 0.0, %v3903
        %v3905 = vpop.f32.mrb[0].mxu0
        %v3906 = vpop.f32.mrb[0].mxu0
        %v3907 = vpop.f32.mrb[0].mxu0
        %3908 = vdwg.mxu0
        %v3909 = vcombine.low %v3775, %v3861
        %v3910 = vcombine.high %v3775, %v3861
        %v3912 = vunpack.c.l.s4 1983009808
        %v3913 = vunpack.c.0.s8 %v3912
        %v3914 = vlaneseq
        %v3915 = vshrl.u32 %v3914, 7
        %v3916 = vsub.s32 %v3913, %v3915
        %v3917 = vrot.slane %v3909, %v3916
        %v3919 = vunpack.c.l.s4 1983009808
        %v3920 = vunpack.c.0.s8 %v3919
        %v3921 = vlaneseq
        %v3922 = vshrl.u32 %v3921, 7
        %v3923 = vsub.s32 %v3920, %v3922
        %v3924 = vrot.slane %v3910, %v3923
        %v3925 = vcombine.low %v3818, %v3904
        %v3926 = vcombine.high %v3818, %v3904
        %v3928 = vunpack.c.l.s4 1983009808
        %v3929 = vunpack.c.0.s8 %v3928
        %v3930 = vlaneseq
        %v3931 = vshrl.u32 %v3930, 7
        %v3932 = vsub.s32 %v3929, %v3931
        %v3933 = vrot.slane %v3925, %v3932
        %v3935 = vunpack.c.l.s4 1983009808
        %v3936 = vunpack.c.0.s8 %v3935
        %v3937 = vlaneseq
        %v3938 = vshrl.u32 %v3937, 7
        %v3939 = vsub.s32 %v3936, %v3938
        %v3940 = vrot.slane %v3926, %v3939
        %v3941 = vcombine.low %v3917, %v3933
        %v3942 = vcombine.high %v3917, %v3933
        %v3944 = vunpack.c.l.s4 1934713408
        %v3945 = vunpack.c.0.s8 %v3944
        %v3946 = vlaneseq
        %v3947 = vshrl.u32 %v3946, 7
        %v3948 = vsub.s32 %v3945, %v3947
        %v3949 = vrot.slane %v3941, %v3948
        %v3951 = vunpack.c.l.s4 1934713408
        %v3952 = vunpack.c.0.s8 %v3951
        %v3953 = vlaneseq
        %v3954 = vshrl.u32 %v3953, 7
        %v3955 = vsub.s32 %v3952, %v3954
        %v3956 = vrot.slane %v3942, %v3955
        %v3957 = vcombine.low %v3924, %v3940
        %v3958 = vcombine.high %v3924, %v3940
        %v3960 = vunpack.c.l.s4 1934713408
        %v3961 = vunpack.c.0.s8 %v3960
        %v3962 = vlaneseq
        %v3963 = vshrl.u32 %v3962, 7
        %v3964 = vsub.s32 %v3961, %v3963
        %v3965 = vrot.slane %v3957, %v3964
        %v3967 = vunpack.c.l.s4 1934713408
        %v3968 = vunpack.c.0.s8 %v3967
        %v3969 = vlaneseq
        %v3970 = vshrl.u32 %v3969, 7
        %v3971 = vsub.s32 %v3968, %v3970
        %v3972 = vrot.slane %v3958, %v3971
        %v3973 = vcombine.high %v3949, 0.0
        %v3974 = vcombine.high %v3956, 0.0
        %v3975 = vcombine.high %v3965, 0.0
        %v3976 = vcombine.high %v3972, 0.0
        %v3977 = vcombine.low %v3949, %v3956
        %v3979 = vunpack.c.l.s4 1983009808
        %v3980 = vunpack.c.0.s8 %v3979
        %v3981 = vlaneseq
        %v3982 = vshrl.u32 %v3981, 7
        %v3983 = vsub.s32 %v3980, %v3982
        %v3984 = vrot.slane %v3977, %v3983
        %v3985 = vcombine.low %v3973, %v3974
        %v3987 = vunpack.c.l.s4 1983009808
        %v3988 = vunpack.c.0.s8 %v3987
        %v3989 = vlaneseq
        %v3990 = vshrl.u32 %v3989, 7
        %v3991 = vsub.s32 %v3988, %v3990
        %v3992 = vrot.slane %v3985, %v3991
        %v3993 = vcombine.low %v3965, %v3972
        %v3995 = vunpack.c.l.s4 1983009808
        %v3996 = vunpack.c.0.s8 %v3995
        %v3997 = vlaneseq
        %v3998 = vshrl.u32 %v3997, 7
        %v3999 = vsub.s32 %v3996, %v3998
        %v4000 = vrot.slane %v3993, %v3999
        %v4001 = vcombine.low %v3975, %v3976
        %v4003 = vunpack.c.l.s4 1983009808
        %v4004 = vunpack.c.0.s8 %v4003
        %v4005 = vlaneseq
        %v4006 = vshrl.u32 %v4005, 7
        %v4007 = vsub.s32 %v4004, %v4006
        %v4008 = vrot.slane %v4001, %v4007
        %v4009 = vcombine.low %v3984, %v3992
        %v4010 = vcombine.high %v3984, %v3992
        %v4012 = vunpack.c.l.s4 1934713408
        %v4013 = vunpack.c.0.s8 %v4012
        %v4014 = vlaneseq
        %v4015 = vshrl.u32 %v4014, 7
        %v4016 = vsub.s32 %v4013, %v4015
        %v4017 = vrot.slane %v4009, %v4016
        %v4019 = vunpack.c.l.s4 1934713408
        %v4020 = vunpack.c.0.s8 %v4019
        %v4021 = vlaneseq
        %v4022 = vshrl.u32 %v4021, 7
        %v4023 = vsub.s32 %v4020, %v4022
        %v4024 = vrot.slane %v4010, %v4023
        %v4025 = vcombine.low %v4000, %v4008
        %v4026 = vcombine.high %v4000, %v4008
        %v4028 = vunpack.c.l.s4 1934713408
        %v4029 = vunpack.c.0.s8 %v4028
        %v4030 = vlaneseq
        %v4031 = vshrl.u32 %v4030, 7
        %v4032 = vsub.s32 %v4029, %v4031
        %v4033 = vrot.slane %v4025, %v4032
        %v4035 = vunpack.c.l.s4 1934713408
        %v4036 = vunpack.c.0.s8 %v4035
        %v4037 = vlaneseq
        %v4038 = vshrl.u32 %v4037, 7
        %v4039 = vsub.s32 %v4036, %v4038
        %v4040 = vrot.slane %v4026, %v4039
        %v4041 = vcombine.low %v4017, %v4033
        %v4042 = vcombine.high %v4017, %v4033
        %v4043 = vcombine.low %v4024, %v4040
        %v4044 = vcombine.high %v4024, %v4040
        %4046 = vrot.lane.b32.xlu0 %v4042, 8
        %v4047 = vpop.permute.xlu0 %4046
        %4050 = vrot.lane.b32.xlu0 %v4043, 16
        %v4051 = vpop.permute.xlu0 %4050
        %4054 = vrot.lane.b32.xlu0 %v4044, 24
        %v4055 = vpop.permute.xlu0 %4054
        %v4057 = vsel %vm1884, %v4041, %v4047
        %v4058 = vsel %vm2455, %v4057, %v4051
        %v4059 = vsel %vm2457, %v4058, %v4055
        %v4060 = vpack.c.bf16 %v4059, %v4059
        %v4062 = vlaneseq
        %v4063 = vshrl.u32 %v4062, 7
        %v4064 = vsub.s32 0, %v4063
        %v4065 = vrot.slane %v2571, %v4064
        %v4071 = vunpack.c.l.b16 %v2567
        %v4072 = vunpack.c.l.b16 %v2568
        %v4073 = vunpack.c.l.b16 %v2569
        %v4074 = vunpack.c.l.b16 %v2570
        %v4075 = vpack.c.b16 %v4072, %v4071
        %v4076 = vpack.c.b16 %v4074, %v4073
        %v4080 = vsel %vm1277, %v4060, 0
        %4082 = vmatprep.subr.bf16.mxu0 0
        %4083 = vmatpush1.bf16.msra.mxu0 %v4075
        %4084 = vmatprep.subr.bf16.mxu0 0
        %4085 = vmatpush1.bf16.msra.mxu0 %v4076
        %4086 = vmatprep.subr.bf16.mxu0 0
        %4087 = vmatpush1.bf16.msra.mxu0 0
        %4088 = vmatprep.subr.bf16.mxu0 0
        %4089 = vmatpush1.bf16.msra.mxu0 0
        %4090 = vmatprep.subr.bf16.mxu0 0
        %4091 = vmatpush1.bf16.msra.mxu0 0
        %4092 = vmatprep.subr.bf16.mxu0 0
        %4093 = vmatpush1.bf16.msra.mxu0 0
        %4094 = vmatprep.subr.bf16.mxu0 0
        %4095 = vmatpush1.bf16.msra.mxu0 0
        %4096 = vmatprep.subr.bf16.mxu0 0
        %4097 = vmatpush1.bf16.msra.mxu0 0
        %4098 = vmatprep.subr.bf16.mxu0 0
        %4099 = vmatpush1.bf16.msra.mxu0 0
        %4100 = vmatprep.subr.bf16.mxu0 0
        %4101 = vmatpush1.bf16.msra.mxu0 0
        %4102 = vmatprep.subr.bf16.mxu0 0
        %4103 = vmatpush1.bf16.msra.mxu0 0
        %4104 = vmatprep.subr.bf16.mxu0 0
        %4105 = vmatpush1.bf16.msra.mxu0 0
        %4106 = vmatprep.subr.bf16.mxu0 0
        %4107 = vmatpush1.bf16.msra.mxu0 0
        %4108 = vmatprep.subr.bf16.mxu0 0
        %4109 = vmatpush1.bf16.msra.mxu0 0
        %4110 = vmatprep.subr.bf16.mxu0 0
        %4111 = vmatpush1.bf16.msra.mxu0 0
        %4112 = vmatprep.subr.bf16.mxu0 0
        %4113 = vmatpush1.bf16.msra.mxu0 0
        %4114 = vmatprep.mubr.bf16.mxu0 0
        %4115 = vmatmul.mubr.bf16.gmra.mrb[0].mxu0 %v4080
        %v4116 = vpop.f32.mrb[0].mxu0
        %v4117 = vadd.f32 %v4065, %v4116
        %v4118 = vpop.f32.mrb[0].mxu0
        %v4119 = vpop.f32.mrb[0].mxu0
        %v4120 = vpop.f32.mrb[0].mxu0
        %4121 = vdwg.mxu0
        %v4122 = vadd.f32 %v2551, %v4117
        %v4123 = vld [vmem:[%s45] sm:$0x1]
        %v4124 = vld [vmem:[%s47] sm:$0x1]
        %v4125 = vsel %vm1277, %v4122, 0.0
        %4126 = vadd.xlane.f32.xlu0 %v4125
        %v4127 = vpop.xlane.xlu0 %4126
        %v4128 = vmul.f32 %v4127, %v2527
        %v4129 = vsub.f32 %v4122, %v4128
        %v4130 = vmul.f32 %v4129, %v4129
        %v4131 = vsel %vm1277, %v4130, 0.0
        %4132 = vadd.xlane.f32.xlu0 %v4131
        %v4133 = vpop.xlane.xlu0 %4132
        %v4134 = vmul.f32 %v4133, %v2527
        %v4135 = vadd.f32 %v4134, 1e-05
        %v4136 = vrsqrt.pop %v4135
        %v4137 = vmul.f32 %v4129, %v4136
        %v4139 = vlaneseq
        %v4140 = vshrl.u32 %v4139, 7
        %v4141 = vsub.s32 0, %v4140
        %v4142 = vrot.slane %v4123, %v4141
        %v4144 = vmul.f32 %v4137, %v4142
        %v4146 = vlaneseq
        %v4147 = vshrl.u32 %v4146, 7
        %v4148 = vsub.s32 0, %v4147
        %v4149 = vrot.slane %v4124, %v4148
        %v4151 = vadd.f32 %v4144, %v4149
        %v4152 = vpack.c.bf16 %v4151, %v4151
        %v4153 = vld [vmem:[%s49] sm:$0xf]
        %v4154 = vld [vmem:[%s49 + $0x4] sm:$0xf]
        %v4155 = vld [vmem:[%s49 + $0x8] sm:$0xf]
        %v4156 = vld [vmem:[%s49 + $0xc] sm:$0xf]
        %v4157 = vld [vmem:[%s51] sm:$0x1]
        %v4159 = vlaneseq
        %v4160 = vshrl.u32 %v4159, 7
        %v4161 = vsub.s32 0, %v4160
        %v4162 = vrot.slane %v4157, %v4161
        %v4168 = vunpack.c.l.b16 %v4153
        %v4169 = vunpack.c.l.b16 %v4154
        %v4170 = vunpack.c.l.b16 %v4155
        %v4171 = vunpack.c.l.b16 %v4156
        %v4172 = vpack.c.b16 %v4169, %v4168
        %v4173 = vpack.c.b16 %v4171, %v4170
        %v4177 = vsel %vm1277, %v4152, 0
        %4179 = vmatprep.subr.bf16.mxu0 0
        %4180 = vmatpush1.bf16.msra.mxu0 %v4172
        %4181 = vmatprep.subr.bf16.mxu0 0
        %4182 = vmatpush1.bf16.msra.mxu0 %v4173
        %4183 = vmatprep.subr.bf16.mxu0 0
        %4184 = vmatpush1.bf16.msra.mxu0 0
        %4185 = vmatprep.subr.bf16.mxu0 0
        %4186 = vmatpush1.bf16.msra.mxu0 0
        %4187 = vmatprep.subr.bf16.mxu0 0
        %4188 = vmatpush1.bf16.msra.mxu0 0
        %4189 = vmatprep.subr.bf16.mxu0 0
        %4190 = vmatpush1.bf16.msra.mxu0 0
        %4191 = vmatprep.subr.bf16.mxu0 0
        %4192 = vmatpush1.bf16.msra.mxu0 0
        %4193 = vmatprep.subr.bf16.mxu0 0
        %4194 = vmatpush1.bf16.msra.mxu0 0
        %4195 = vmatprep.subr.bf16.mxu0 0
        %4196 = vmatpush1.bf16.msra.mxu0 0
        %4197 = vmatprep.subr.bf16.mxu0 0
        %4198 = vmatpush1.bf16.msra.mxu0 0
        %4199 = vmatprep.subr.bf16.mxu0 0
        %4200 = vmatpush1.bf16.msra.mxu0 0
        %4201 = vmatprep.subr.bf16.mxu0 0
        %4202 = vmatpush1.bf16.msra.mxu0 0
        %4203 = vmatprep.subr.bf16.mxu0 0
        %4204 = vmatpush1.bf16.msra.mxu0 0
        %4205 = vmatprep.subr.bf16.mxu0 0
        %4206 = vmatpush1.bf16.msra.mxu0 0
        %4207 = vmatprep.subr.bf16.mxu0 0
        %4208 = vmatpush1.bf16.msra.mxu0 0
        %4209 = vmatprep.subr.bf16.mxu0 0
        %4210 = vmatpush1.bf16.msra.mxu0 0
        %4211 = vmatprep.mubr.bf16.mxu0 0
        %4212 = vmatmul.mubr.bf16.gmra.mrb[0].mxu0 %v4177
        %v4213 = vpop.f32.mrb[0].mxu0
        %v4214 = vadd.f32 %v4162, %v4213
        %v4215 = vpop.f32.mrb[0].mxu0
        %v4216 = vpop.f32.mrb[0].mxu0
        %v4217 = vpop.f32.mrb[0].mxu0
        %4218 = vdwg.mxu0
        %v4219 = vmax.f32 %v4214, 0.0
        %v4220 = vpack.c.bf16 %v4219, %v4219
        %v4221 = vld [vmem:[%s53] sm:$0xf]
        %v4222 = vld [vmem:[%s53 + $0x4] sm:$0xf]
        %v4223 = vld [vmem:[%s53 + $0x8] sm:$0xf]
        %v4224 = vld [vmem:[%s53 + $0xc] sm:$0xf]
        %v4225 = vld [vmem:[%s53 + $0x10] sm:$0xf]
        %v4226 = vld [vmem:[%s53 + $0x14] sm:$0xf]
        %v4227 = vld [vmem:[%s53 + $0x18] sm:$0xf]
        %v4228 = vld [vmem:[%s53 + $0x1c] sm:$0xf]
        %v4229 = vld [vmem:[%s55] sm:$0x1]
        %v4231 = vlaneseq
        %v4232 = vshrl.u32 %v4231, 7
        %v4233 = vsub.s32 0, %v4232
        %v4234 = vrot.slane %v4229, %v4233
        %v4244 = vunpack.c.l.b16 %v4221
        %v4245 = vunpack.c.l.b16 %v4222
        %v4246 = vunpack.c.l.b16 %v4223
        %v4247 = vunpack.c.l.b16 %v4224
        %v4248 = vunpack.c.l.b16 %v4225
        %v4249 = vunpack.c.l.b16 %v4226
        %v4250 = vunpack.c.l.b16 %v4227
        %v4251 = vunpack.c.l.b16 %v4228
        %v4252 = vpack.c.b16 %v4245, %v4244
        %v4253 = vpack.c.b16 %v4247, %v4246
        %v4254 = vpack.c.b16 %v4249, %v4248
        %v4255 = vpack.c.b16 %v4251, %v4250
        %vm4260 = vcmask 523264
        %v4262 = vsel %vm4260, %v4220, 0
        %4264 = vmatprep.subr.bf16.mxu0 0
        %4265 = vmatpush1.bf16.msra.mxu0 %v4252
        %4266 = vmatprep.subr.bf16.mxu0 0
        %4267 = vmatpush1.bf16.msra.mxu0 %v4253
        %4268 = vmatprep.subr.bf16.mxu0 0
        %4269 = vmatpush1.bf16.msra.mxu0 %v4254
        %4270 = vmatprep.subr.bf16.mxu0 0
        %4271 = vmatpush1.bf16.msra.mxu0 %v4255
        %4272 = vmatprep.subr.bf16.mxu0 0
        %4273 = vmatpush1.bf16.msra.mxu0 0
        %4274 = vmatprep.subr.bf16.mxu0 0
        %4275 = vmatpush1.bf16.msra.mxu0 0
        %4276 = vmatprep.subr.bf16.mxu0 0
        %4277 = vmatpush1.bf16.msra.mxu0 0
        %4278 = vmatprep.subr.bf16.mxu0 0
        %4279 = vmatpush1.bf16.msra.mxu0 0
        %4280 = vmatprep.subr.bf16.mxu0 0
        %4281 = vmatpush1.bf16.msra.mxu0 0
        %4282 = vmatprep.subr.bf16.mxu0 0
        %4283 = vmatpush1.bf16.msra.mxu0 0
        %4284 = vmatprep.subr.bf16.mxu0 0
        %4285 = vmatpush1.bf16.msra.mxu0 0
        %4286 = vmatprep.subr.bf16.mxu0 0
        %4287 = vmatpush1.bf16.msra.mxu0 0
        %4288 = vmatprep.subr.bf16.mxu0 0
        %4289 = vmatpush1.bf16.msra.mxu0 0
        %4290 = vmatprep.subr.bf16.mxu0 0
        %4291 = vmatpush1.bf16.msra.mxu0 0
        %4292 = vmatprep.subr.bf16.mxu0 0
        %4293 = vmatpush1.bf16.msra.mxu0 0
        %4294 = vmatprep.subr.bf16.mxu0 0
        %4295 = vmatpush1.bf16.msra.mxu0 0
        %4296 = vmatprep.mubr.bf16.mxu0 0
        %4297 = vmatmul.mubr.bf16.gmra.mrb[0].mxu0 %v4262
        %v4298 = vpop.f32.mrb[0].mxu0
        %v4299 = vadd.f32 %v4234, %v4298
        %v4300 = vpop.f32.mrb[0].mxu0
        %v4301 = vpop.f32.mrb[0].mxu0
        %v4302 = vpop.f32.mrb[0].mxu0
        %4303 = vdwg.mxu0
        %v4304 = vadd.f32 %v4151, %v4299
        %v4305 = vld [vmem:[%s57] sm:$0x1]
        %v4306 = vld [vmem:[%s59] sm:$0x1]
        %v4307 = vsel %vm1277, %v4304, 0.0
        %4308 = vadd.xlane.f32.xlu0 %v4307
        %v4309 = vpop.xlane.xlu0 %4308
        %v4310 = vmul.f32 %v4309, %v2527
        %v4311 = vsub.f32 %v4304, %v4310
        %v4312 = vmul.f32 %v4311, %v4311
        %v4313 = vsel %vm1277, %v4312, 0.0
        %4314 = vadd.xlane.f32.xlu0 %v4313
        %v4315 = vpop.xlane.xlu0 %4314
        %v4316 = vmul.f32 %v4315, %v2527
        %v4317 = vadd.f32 %v4316, 1e-05
        %v4318 = vrsqrt.pop %v4317
        %v4319 = vmul.f32 %v4311, %v4318
        %v4321 = vlaneseq
        %v4322 = vshrl.u32 %v4321, 7
        %v4323 = vsub.s32 0, %v4322
        %v4324 = vrot.slane %v4305, %v4323
        %v4326 = vmul.f32 %v4319, %v4324
        %v4328 = vlaneseq
        %v4329 = vshrl.u32 %v4328, 7
        %v4330 = vsub.s32 0, %v4329
        %v4331 = vrot.slane %v4306, %v4330
        %v4333 = vadd.f32 %v4326, %v4331
        %4334 = vst.msk [vmem:[%s1211] sm:$0xff] %vm1277, %v4333
        %4335 = vst.msk [vmem:[%s1218] sm:$0xff] %vm2455, %v3725
        %4336 = vst.msk [vmem:[%s1218 + $0x8] sm:$0xff] %vm2455, %v3726
        %4337 = vst.msk [vmem:[%s1218 + $0x10] sm:$0xff] %vm2455, %v3727
        %4338 = vst.msk [vmem:[%s1218 + $0x18] sm:$0xff] %vm2455, %v3728
        %s4339 = sand.u32 %s751, 1
        %s4340 = scalar_lea.sflag [#allocation4], %s4339
        %s4341 = sand.u32 %s751, 1
        %s4342 = smul.addr %s4341, 8
        %s4343 = scalar_lea.vmem [#allocation26], %s4342
        %s4344 = sand.u32 %s777, 1
        %s4345 = scalar_lea.sflag [#allocation28], %s4344
        %s4346 = sand.u32 %s777, 1
        %s4347 = smul.addr %s4346, 32
        %s4348 = scalar_lea.vmem [#allocation27], %s4347
        // Predicated region
        $region201: #{tpu_custom_call.1} parent=139 // pred_check
          %p4349 = pneg %p761
        $region202: #{tpu_custom_call.1} parent=139 // pred_check_branch
          %4351 = sbr.rel (%p4349) target = $region204
        $region203: #{tpu_custom_call.1} parent=139 // pred_region
          %s4353 = ssub.s32 128, 128
          %4354 = vsyncadd %s4340, %s4353
          %s4355 = smul.addr %s93, 128
          %s4356 = scalar_lea.hbm %s61, %s4355
          %s4358 = sshll.u32 %s4343, 4
          %s4359 = int_to_ptr.vmem [resolvable:$true] %s4358
          %4361 = dma.vmem_to_hbm [thread:$0]  %s4359, 128, %s4356, %s4340
        $region204: #{tpu_custom_call.1} parent=139 // pred_fallthru
          _
        // Predicated region
        $region205: #{tpu_custom_call.1} parent=139 // pred_check
          %p4362 = pneg %p787
        $region206: #{tpu_custom_call.1} parent=139 // pred_check_branch
          %4364 = sbr.rel (%p4362) target = $region208
        $region207: #{tpu_custom_call.1} parent=139 // pred_region
          %s4366 = ssub.s32 512, 512
          %4367 = vsyncadd %s4345, %s4366
          %s4368 = smul.addr %s93, 4
          %s4369 = smul.addr %s4368, 128
          %s4370 = scalar_lea.hbm %s63, %s4369
          %s4371 = sshll.u32 %s4348, 4
          %s4372 = int_to_ptr.vmem [resolvable:$true] %s4371
          %4377 = dma.vmem_to_hbm [thread:$0]  %s4372, 512, %s4370, %s4345, 128, 128, 8
        $region208: #{tpu_custom_call.1} parent=139 // pred_fallthru
          _
      $region140: #{tpu_custom_call.1} parent=5 // pred_fallthru
        _
      %p4378 = scmp.le.s32.totalorder 2, %s88
      // Predicated region
      $region209: #{tpu_custom_call.1} parent=5 // pred_check
        %p4379 = pneg %p4378
      $region210: #{tpu_custom_call.1} parent=5 // pred_check_branch
        %4381 = sbr.rel (%p4379) target = $region212
      $region211: #{tpu_custom_call.1} parent=5 // pred_region
        %s4382 = ssub.s32 %s88, 2
        // Predicated region
        $region213: #{tpu_custom_call.1} parent=211 // pred_check
          %p4383 = pneg %p767
        $region214: #{tpu_custom_call.1} parent=211 // pred_check_branch
          %4385 = sbr.rel (%p4383) target = $region216
        $region215: #{tpu_custom_call.1} parent=211 // pred_region
          %s4386 = sand.u32 %s752, 1
          %s4387 = scalar_lea.sflag [#allocation4], %s4386
          %s4388 = sand.u32 %s752, 1
          %s4389 = smul.addr %s4388, 8
          %s4390 = scalar_lea.vmem [#allocation26], %s4389
          %4391 = dma.done %s4387, 128
        $region216: #{tpu_custom_call.1} parent=211 // pred_fallthru
          _
        // Predicated region
        $region217: #{tpu_custom_call.1} parent=211 // pred_check
          %p4392 = pneg %p793
        $region218: #{tpu_custom_call.1} parent=211 // pred_check_branch
          %4394 = sbr.rel (%p4392) target = $region220
        $region219: #{tpu_custom_call.1} parent=211 // pred_region
          %s4395 = sand.u32 %s778, 1
          %s4396 = scalar_lea.sflag [#allocation28], %s4395
          %s4397 = sand.u32 %s778, 1
          %s4398 = smul.addr %s4397, 32
          %s4399 = scalar_lea.vmem [#allocation27], %s4398
          %4400 = dma.done %s4396, 512
        $region220: #{tpu_custom_call.1} parent=211 // pred_fallthru
          _
      $region212: #{tpu_custom_call.1} parent=5 // pred_fallthru
        _
    $region6: #{tpu_custom_call.1} parent=1 // loop_footer
      %s92 = sadd.s32 1, %s88
    $region7: #{tpu_custom_call.1} parent=1 // loop_footer_branch
      %87 = sbr.rel target = $region3
    $region8: #{tpu_custom_call.1} parent=1 // loop_exit
      _
    %4401 = vsyncpa [#allocation3], 1
    %s4402 = scalar_lea.sflag [#allocation3], 1
    %4403 = vsyncpa %s4402, 1
    %4404 = vsyncpa [#allocation6], 1
    %s4405 = scalar_lea.sflag [#allocation6], 1
    %4406 = vsyncpa %s4405, 1
    %4407 = vsyncpa [#allocation9], 1
    %4408 = vsyncpa [#allocation12], 1
    %4409 = vsyncpa [#allocation15], 1
    %4410 = vsyncpa [#allocation18], 1
    %4411 = vsyncpa [#allocation21], 1
    %4412 = vsyncpa [#allocation24], 1
    %4413 = vsyncpa [#allocation4], 1
    %s4414 = scalar_lea.sflag [#allocation4], 1
    %4415 = vsyncpa %s4414, 1
    %4416 = vsyncpa [#allocation28], 1
    %s4417 = scalar_lea.sflag [#allocation28], 1
    %4418 = vsyncpa %s4417, 1

</llo_original>
